<compile_context>
chip_gen: v5e
topology: v5e:2x2
jax: 0.10.0
libtpu: 0.0.40
codegen_flags: <defaults>
</compile_context>

<pallas_src>
import functools

import jax
import jax.numpy as jnp
from jax.experimental import pallas as pl
from jax.experimental.pallas import tpu as pltpu


def _round_up(n, m):
    return ((n + m - 1) // m) * m


def _dp_kernel(lens_ref, bp_ref, xw_ref, w1_ref, w2_ref, wp_ref, vec_ref, o_ref,
               *, K, pad, t_tile, f_real):
    """One (batch, time-tile) grid step.

    lens_ref : (B,)    int32 sequence lengths        (SMEM, scalar-prefetched)
    bp_ref   : (Cout,) f32 proj bias                  (SMEM, scalar-prefetched)
    xw_ref   : (1, 1, t_tile + 4*pad, Cp)  haloed channels-last input window
    w1_ref   : (K, Cp, Fp)  per-tap conv_1 weights
    w2_ref   : (K, Fp, Fp)  per-tap conv_2 weights
    wp_ref   : (Cout, Fp)   transposed proj weight (f32)
    vec_ref  : (8, Fp)      rows = [b1, g1, be1, b2, g2, be2, cmask, 0]
    o_ref    : (1, Cout, t_tile)  lane-dense output tile
    """
    b = pl.program_id(0)
    t = pl.program_id(1)
    length = lens_ref[b]

    halo = 2 * pad
    rows0 = t_tile + 2 * halo        # conv_1 input rows (haloed window)
    rows1 = rows0 - (K - 1)          # conv_1 output rows == conv_2 input rows
    t0 = t * t_tile
    inv_f = 1.0 / float(f_real)

    b1 = vec_ref[0:1, :]
    g1 = vec_ref[1:2, :]
    be1 = vec_ref[2:3, :]
    b2 = vec_ref[3:4, :]
    g2 = vec_ref[4:5, :]
    be2 = vec_ref[5:6, :]
    cmask = vec_ref[6:7, :]          # (1, Fp): 1.0 on real channels, 0.0 on padding

    def seq_mask_col(n_rows, first_time, dtype):
        # (n_rows, 1): 1 where 0 <= time < length.  Reproduces both the x_mask
        # multiply and the conv zero padding outside [0, T).  Only this column
        # is cast, never the full activation tile.
        tt = jax.lax.broadcasted_iota(jnp.int32, (n_rows, 1), 0) + first_time
        m = jnp.logical_and(tt >= 0, tt < length).astype(jnp.float32)
        return m.astype(dtype)

    def conv_taps(h, w_ref, n_out):
        # sum_k h[k : k + n_out] @ w[k] : K accumulated MXU dots, f32 accumulate.
        acc = jnp.dot(h[0:n_out, :], w_ref[0], preferred_element_type=jnp.float32)
        for k in range(1, K):
            acc = acc + jnp.dot(h[k:k + n_out, :], w_ref[k],
                                preferred_element_type=jnp.float32)
        return acc

    def layer_norm(h, gamma, beta):
        # Channel LayerNorm over the f_real real channels (two-pass variance).
        # Padded lanes of h are exactly zero (zero weight columns / bias), so
        # sum(h) over Fp equals the real sum; the centered term is re-masked
        # with cmask so padded lanes never contribute to the variance.  Padded
        # gamma/beta are zero, so the LN output stays zero on padded lanes.
        mu = jnp.sum(h, axis=-1, keepdims=True) * inv_f
        d = (h - mu) * cmask
        var = jnp.sum(d * d, axis=-1, keepdims=True) * inv_f
        return d * jax.lax.rsqrt(var + 1e-5) * gamma + beta

    x = xw_ref[0, 0]                                           # (rows0, Cp), MXU dtype

    # conv_1(x * mask) -> relu -> norm_1        (window row r has time t0 - halo + r)
    xm = x * seq_mask_col(rows0, t0 - halo, x.dtype)
    h = conv_taps(xm, w1_ref, rows1) + b1
    h = layer_norm(jnp.maximum(h, 0.0), g1, be1)               # (rows1, Fp) f32

    # conv_2(h * mask) -> relu -> norm_2        (h row j has time t0 - pad + j)
    hm = (h * seq_mask_col(rows1, t0 - pad, jnp.float32)).astype(w2_ref.dtype)
    h = conv_taps(hm, w2_ref, t_tile) + b2
    h = layer_norm(jnp.maximum(h, 0.0), g2, be2)               # (t_tile, Fp) f32

    # proj (1x1 conv): contract the channel dims of wp^T (Cout, Fp) and h
    # (t_tile, Fp) in place -> (Cout, t_tile); no in-kernel transpose of h.
    # proj is pointwise in time and the mask is 0/1, so applying the final mask
    # once after the bias add equals proj(h * mask) * mask.
    out = jax.lax.dot_general(wp_ref[...], h,
                              dimension_numbers=(((1,), (1,)), ((), ())),
                              preferred_element_type=jnp.float32)
    Cout = o_ref.shape[1]
    if Cout == 1:
        out = out + bp_ref[0]
    else:
        rows = jax.lax.broadcasted_iota(jnp.int32, (Cout, 1), 0)
        out = out + sum(jnp.where(rows == c, bp_ref[c], 0.0) for c in range(Cout))

    tt = jax.lax.broadcasted_iota(jnp.int32, (1, t_tile), 1) + t0
    out = out * (tt < length).astype(jnp.float32)
    o_ref[0] = out.astype(o_ref.dtype)


def dimension_predictor_vits(x_ncw, mask_n1w, params, *, t_tile=512,
                             mxu_dtype=jnp.bfloat16):
    """x_ncw: [B, Cin, T] (PyTorch NCW), mask_n1w: [B, 1, T] prefix (length) mask.
    Returns [B, out_channel, T]."""
    (w1, b1, g1, be1, w2, b2, g2, be2, wp, bp) = params
    B, Cin, T = x_ncw.shape
    K, _, F = w1.shape
    Cout = wp.shape[1]
    assert K % 2 == 1, "padding=K//2 'same' conv requires odd kernel_size"
    assert t_tile % 128 == 0
    pad = K // 2
    halo = 2 * pad

    Cp = _round_up(Cin, 128)
    Fp = _round_up(F, 128)
    # Large lane-dense time tiles (review: 512-1024), but never bigger than the
    # padded sequence so short inputs don't pay for dead rows.
    t_tile = max(128, min(t_tile, _round_up(T, 128)))
    nT = -(-T // t_tile)
    Tp = nT * t_tile
    rows0 = t_tile + 2 * halo

    # x_mask must be a contiguous prefix mask: it is reduced to per-example
    # lengths (SMEM scalar prefetch) and rebuilt in-kernel from an iota, so the
    # mask itself is never DMA'd.
    lengths = jnp.sum(mask_n1w[:, 0, :], axis=-1).astype(jnp.int32)      # (B,)

    # channels-last, zero-padded to full lanes / full time tiles, MXU dtype.
    x = jnp.transpose(x_ncw, (0, 2, 1))                                  # (B, T, Cin)
    x = jnp.pad(x, ((0, 0), (halo, Tp - T + halo), (0, Cp - Cin))).astype(mxu_dtype)
    # Haloed overlapping windows via nT *static* contiguous slices (no XLA
    # gather): (B, nT, rows0, Cp); each grid step is self-contained.
    wins = jnp.stack(
        [jax.lax.slice_in_dim(x, t * t_tile, t * t_tile + rows0, axis=1)
         for t in range(nT)], axis=1)

    # Per-tap conv weights: zero-pad channels to full lanes (MUST stay zero),
    # cast once to the MXU dtype.
    w1p = jnp.pad(w1, ((0, 0), (0, Cp - Cin), (0, Fp - F))).astype(mxu_dtype)
    w2p = jnp.pad(w2, ((0, 0), (0, Fp - F), (0, Fp - F))).astype(mxu_dtype)
    wp_t = jnp.pad(wp, ((0, Fp - F), (0, 0))).T.astype(jnp.float32)      # (Cout, Fp)
    bp_s = bp.reshape(Cout).astype(jnp.float32)                          # SMEM prefetch

    # Pack the per-channel vectors + channel mask into one (8, Fp) f32 tile.
    # Rows: [b1, g1, be1, b2, g2, be2, cmask, 0]; padded lanes MUST stay zero.
    def _row(v):
        return jnp.pad(v.reshape(1, F).astype(jnp.float32), ((0, 0), (0, Fp - F)))
    cmask = _row(jnp.ones((1, F), jnp.float32))
    vecs = jnp.concatenate([_row(b1), _row(g1), _row(be1),
                            _row(b2), _row(g2), _row(be2),
                            cmask, jnp.zeros((1, Fp), jnp.float32)], axis=0)

    kernel = functools.partial(_dp_kernel, K=K, pad=pad, t_tile=t_tile, f_real=F)

    out = pl.pallas_call(
        kernel,
        out_shape=jax.ShapeDtypeStruct((B, Cout, Tp), x_ncw.dtype),
        grid_spec=pltpu.PrefetchScalarGridSpec(
            num_scalar_prefetch=2,
            grid=(B, nT),
            in_specs=[
                pl.BlockSpec((1, 1, rows0, Cp), lambda b, t, lens, bp: (b, t, 0, 0)),
                pl.BlockSpec((K, Cp, Fp), lambda b, t, lens, bp: (0, 0, 0)),   # w1
                pl.BlockSpec((K, Fp, Fp), lambda b, t, lens, bp: (0, 0, 0)),   # w2
                pl.BlockSpec((Cout, Fp), lambda b, t, lens, bp: (0, 0)),       # wp^T
                pl.BlockSpec((8, Fp), lambda b, t, lens, bp: (0, 0)),          # vecs
            ],
            out_specs=pl.BlockSpec((1, Cout, t_tile),
                                   lambda b, t, lens, bp: (b, 0, t)),
        ),
        compiler_params=pltpu.CompilerParams(
            dimension_semantics=("parallel", "parallel"),
            vmem_limit_bytes=32 * 1024 * 1024),
    )(lengths, bp_s, wins, w1p, w2p, wp_t, vecs)

    return out[:, :, :T]


def _reference(x_ncw, mask_n1w, params):
    """Pure-JAX reference mirroring the PyTorch forward (eval mode)."""
    (w1, b1, g1, be1, w2, b2, g2, be2, wp, bp) = params
    x = jnp.transpose(x_ncw, (0, 2, 1)).astype(jnp.float32)      # (B, T, Cin)
    m = jnp.transpose(mask_n1w, (0, 2, 1)).astype(jnp.float32)
    hp_prec = jax.lax.Precision.HIGHEST

    def conv1d(h, w, b):
        K = w.shape[0]
        pad = K // 2
        hpd = jnp.pad(h, ((0, 0), (pad, pad), (0, 0)))
        T = h.shape[1]
        acc = sum(jnp.einsum('btc,cf->btf', hpd[:, k:k + T], w[k], precision=hp_prec)
                  for k in range(K))
        return acc + b

    def ln(h, g, b, eps=1e-5):
        mu = jnp.mean(h, axis=-1, keepdims=True)
        var = jnp.mean((h - mu) ** 2, axis=-1, keepdims=True)
        return (h - mu) * jax.lax.rsqrt(var + eps) * g + b

    h = ln(jnp.maximum(conv1d(x * m, w1, b1), 0.0), g1, be1)
    h = ln(jnp.maximum(conv1d(h * m, w2, b2), 0.0), g2, be2)
    out = (jnp.einsum('btf,fo->bto', h * m, wp, precision=hp_prec) + bp) * m
    return jnp.transpose(out, (0, 2, 1))


def make_params(key, in_channels, filter_channels, kernel_size, out_channel):
    """Deterministic synthetic parameters (PyTorch Conv1d weight is (Cout,Cin,K);
    stored here kernel-tap major as (K, Cin, Cout) == torch_w.permute(2,1,0))."""
    ks = jax.random.split(key, 5)
    scale1 = 1.0 / (in_channels * kernel_size) ** 0.5
    scale2 = 1.0 / (filter_channels * kernel_size) ** 0.5
    scalep = 1.0 / filter_channels ** 0.5
    w1 = jax.random.uniform(ks[0], (kernel_size, in_channels, filter_channels),
                            jnp.float32, -scale1, scale1)
    b1 = jax.random.uniform(ks[1], (1, filter_channels), jnp.float32, -scale1, scale1)
    w2 = jax.random.uniform(ks[2], (kernel_size, filter_channels, filter_channels),
                            jnp.float32, -scale2, scale2)
    b2 = jax.random.uniform(ks[3], (1, filter_channels), jnp.float32, -scale2, scale2)
    wp = jax.random.uniform(ks[4], (filter_channels, out_channel),
                            jnp.float32, -scalep, scalep)
    bp = jnp.zeros((1, out_channel), jnp.float32)
    # LayerNorm gamma=1, beta=0 at init
    g1 = jnp.ones((1, filter_channels), jnp.float32)
    be1 = jnp.zeros((1, filter_channels), jnp.float32)
    g2 = jnp.ones((1, filter_channels), jnp.float32)
    be2 = jnp.zeros((1, filter_channels), jnp.float32)
    return (w1, b1, g1, be1, w2, b2, g2, be2, wp, bp)


if __name__ == "__main__":
    B, Cin, F, K, T, Cout = 2, 32, 32, 3, 256, 1

    key = jax.random.PRNGKey(0)
    kx, kp = jax.random.split(key)

    x = jax.random.normal(kx, (B, Cin, T), jnp.float32)           # PyTorch NCW
    lengths = jnp.array([T, 173])
    mask = (jnp.arange(T)[None, :] < lengths[:, None]).astype(jnp.float32)
    mask = mask[:, None, :]                                       # (B, 1, T)

    params = make_params(kp, Cin, F, K, Cout)
    ref = _reference(x, mask, params)

    # f32 MXU path: structural check (tolerance covers MXU pass-precision
    # differences between the Pallas matmuls and the HIGHEST-precision reference).
    f32_fn = jax.jit(functools.partial(dimension_predictor_vits,
                                       mxu_dtype=jnp.float32))
    out_f32 = jax.block_until_ready(f32_fn(x, mask, params))
    assert out_f32.shape == (B, Cout, T)
    err_f32 = float(jnp.max(jnp.abs(out_f32 - ref)))
    assert err_f32 < 5e-2, f"f32 kernel mismatch: max abs err {err_f32}"

    # default bf16 MXU path: loose check (bf16 operand rounding vs f32 reference).
    bf16_fn = jax.jit(dimension_predictor_vits)
    out_bf16 = jax.block_until_ready(bf16_fn(x, mask, params))
    assert out_bf16.shape == (B, Cout, T)
    err_bf16 = float(jnp.max(jnp.abs(out_bf16 - ref)))
    assert err_bf16 < 0.25, f"bf16 kernel diverged: max abs err {err_bf16}"

    print("KERNEL_OK")
</pallas_src>

<mosaic_0001>
module attributes {stable_mosaic.version = 11 : i64} {
  func.func @_dp_kernel(%arg0: i32, %arg1: i32, %arg2: memref<2xi32, #tpu.memory_space<smem>>, %arg3: memref<1xf32, #tpu.memory_space<smem>>, %arg4: memref<1x1x260x128xf32, #tpu.memory_space<vmem>>, %arg5: memref<3x128x128xf32, #tpu.memory_space<vmem>>, %arg6: memref<3x128x128xf32, #tpu.memory_space<vmem>>, %arg7: memref<1x128xf32, #tpu.memory_space<vmem>>, %arg8: memref<8x128xf32, #tpu.memory_space<vmem>>, %arg9: memref<1x1x256xf32, #tpu.memory_space<vmem>>) attributes {dimension_semantics = [#tpu.dimension_semantics<parallel>, #tpu.dimension_semantics<parallel>], iteration_bounds = array<i64: 2, 1>, scalar_prefetch = 2 : i64, scratch_operands = 0 : i64, tpu.core_type = #tpu.core_type<tc>, window_params = [{transform_indices = @transform_0, window_bounds = array<i64: 1, 1, 260, 128>}, {pipeline_mode = #tpu.pipeline_mode<synchronous>, transform_indices = @transform_1, window_bounds = array<i64: 3, 128, 128>}, {pipeline_mode = #tpu.pipeline_mode<synchronous>, transform_indices = @transform_2, window_bounds = array<i64: 3, 128, 128>}, {pipeline_mode = #tpu.pipeline_mode<synchronous>, transform_indices = @transform_3, window_bounds = array<i64: 1, 128>}, {pipeline_mode = #tpu.pipeline_mode<synchronous>, transform_indices = @transform_4, window_bounds = array<i64: 8, 128>}, {transform_indices = @transform_5, window_bounds = array<i64: 1, 1, 256>}]} {
    %0 = arith.index_cast %arg0 : i32 to index
    %1 = memref.load %arg2[%0] : memref<2xi32, #tpu.memory_space<smem>>
    %c256_i32 = arith.constant 256 : i32
    %2 = arith.muli %arg1, %c256_i32 : i32
    %c0 = arith.constant 0 : index
    %c0_0 = arith.constant 0 : index
    %3 = vector.load %arg8[%c0, %c0_0] : memref<8x128xf32, #tpu.memory_space<vmem>>, vector<1x128xf32>
    %c1 = arith.constant 1 : index
    %c0_1 = arith.constant 0 : index
    %4 = vector.load %arg8[%c1, %c0_1] : memref<8x128xf32, #tpu.memory_space<vmem>>, vector<1x128xf32>
    %c2 = arith.constant 2 : index
    %c0_2 = arith.constant 0 : index
    %5 = vector.load %arg8[%c2, %c0_2] : memref<8x128xf32, #tpu.memory_space<vmem>>, vector<1x128xf32>
    %c3 = arith.constant 3 : index
    %c0_3 = arith.constant 0 : index
    %6 = vector.load %arg8[%c3, %c0_3] : memref<8x128xf32, #tpu.memory_space<vmem>>, vector<1x128xf32>
    %c4 = arith.constant 4 : index
    %c0_4 = arith.constant 0 : index
    %7 = vector.load %arg8[%c4, %c0_4] : memref<8x128xf32, #tpu.memory_space<vmem>>, vector<1x128xf32>
    %c5 = arith.constant 5 : index
    %c0_5 = arith.constant 0 : index
    %8 = vector.load %arg8[%c5, %c0_5] : memref<8x128xf32, #tpu.memory_space<vmem>>, vector<1x128xf32>
    %c6 = arith.constant 6 : index
    %c0_6 = arith.constant 0 : index
    %9 = vector.load %arg8[%c6, %c0_6] : memref<8x128xf32, #tpu.memory_space<vmem>>, vector<1x128xf32>
    %c0_7 = arith.constant 0 : index
    %c0_8 = arith.constant 0 : index
    %c0_9 = arith.constant 0 : index
    %c0_10 = arith.constant 0 : index
    %10 = vector.load %arg4[%c0_7, %c0_8, %c0_9, %c0_10] : memref<1x1x260x128xf32, #tpu.memory_space<vmem>>, vector<1x1x260x128xf32>
    %11 = vector.shape_cast %10 : vector<1x1x260x128xf32> to vector<260x128xf32>
    %c2_i32 = arith.constant 2 : i32
    %12 = arith.subi %2, %c2_i32 : i32
    %13 = tpu.iota {dimensions = array<i32: 0>} : vector<260x1xi32>
    %14 = vector.broadcast %12 : i32 to vector<260x1xi32>
    %15 = arith.addi %13, %14 : vector<260x1xi32>
    %c0_i32 = arith.constant 0 : i32
    %16 = vector.broadcast %c0_i32 : i32 to vector<260x1xi32>
    %17 = arith.cmpi sge, %15, %16 : vector<260x1xi32>
    %18 = vector.broadcast %1 : i32 to vector<260x1xi32>
    %19 = arith.cmpi slt, %15, %18 : vector<260x1xi32>
    %20 = arith.andi %17, %19 : vector<260x1xi1>
    %21 = arith.extui %20 : vector<260x1xi1> to vector<260x1xi32>
    %22 = arith.sitofp %21 : vector<260x1xi32> to vector<260x1xf32>
    %23 = vector.broadcast %22 : vector<260x1xf32> to vector<260x128xf32>
    %24 = arith.mulf %11, %23 : vector<260x128xf32>
    %25 = vector.extract_strided_slice %24 {offsets = [0, 0], sizes = [258, 128], strides = [1, 1]} : vector<260x128xf32> to vector<258x128xf32>
    %c0_11 = arith.constant 0 : index
    %c0_12 = arith.constant 0 : index
    %c0_13 = arith.constant 0 : index
    %26 = vector.load %arg5[%c0_11, %c0_12, %c0_13] : memref<3x128x128xf32, #tpu.memory_space<vmem>>, vector<1x128x128xf32>
    %27 = vector.shape_cast %26 : vector<1x128x128xf32> to vector<128x128xf32>
    %cst = arith.constant dense<0.000000e+00> : vector<258x128xf32>
    %28 = tpu.matmul %25, %27, %cst {dimension_numbers = #tpu.dot_dimension_numbers<[1], [0], [0], [1], [0, 0, 1, 1], [], []>} : vector<258x128xf32>, vector<128x128xf32>, vector<258x128xf32> -> vector<258x128xf32>
    %29 = vector.extract_strided_slice %24 {offsets = [1, 0], sizes = [258, 128], strides = [1, 1]} : vector<260x128xf32> to vector<258x128xf32>
    %c1_14 = arith.constant 1 : index
    %c0_15 = arith.constant 0 : index
    %c0_16 = arith.constant 0 : index
    %30 = vector.load %arg5[%c1_14, %c0_15, %c0_16] : memref<3x128x128xf32, #tpu.memory_space<vmem>>, vector<1x128x128xf32>
    %31 = vector.shape_cast %30 : vector<1x128x128xf32> to vector<128x128xf32>
    %cst_17 = arith.constant dense<0.000000e+00> : vector<258x128xf32>
    %32 = tpu.matmul %29, %31, %cst_17 {dimension_numbers = #tpu.dot_dimension_numbers<[1], [0], [0], [1], [0, 0, 1, 1], [], []>} : vector<258x128xf32>, vector<128x128xf32>, vector<258x128xf32> -> vector<258x128xf32>
    %33 = arith.addf %28, %32 : vector<258x128xf32>
    %34 = vector.extract_strided_slice %24 {offsets = [2, 0], sizes = [258, 128], strides = [1, 1]} : vector<260x128xf32> to vector<258x128xf32>
    %c2_18 = arith.constant 2 : index
    %c0_19 = arith.constant 0 : index
    %c0_20 = arith.constant 0 : index
    %35 = vector.load %arg5[%c2_18, %c0_19, %c0_20] : memref<3x128x128xf32, #tpu.memory_space<vmem>>, vector<1x128x128xf32>
    %36 = vector.shape_cast %35 : vector<1x128x128xf32> to vector<128x128xf32>
    %cst_21 = arith.constant dense<0.000000e+00> : vector<258x128xf32>
    %37 = tpu.matmul %34, %36, %cst_21 {dimension_numbers = #tpu.dot_dimension_numbers<[1], [0], [0], [1], [0, 0, 1, 1], [], []>} : vector<258x128xf32>, vector<128x128xf32>, vector<258x128xf32> -> vector<258x128xf32>
    %38 = arith.addf %33, %37 : vector<258x128xf32>
    %39 = vector.broadcast %3 : vector<1x128xf32> to vector<258x128xf32>
    %40 = arith.addf %38, %39 : vector<258x128xf32>
    %cst_22 = arith.constant 0.000000e+00 : f32
    %41 = vector.broadcast %cst_22 : f32 to vector<258x128xf32>
    %42 = arith.maximumf %40, %41 : vector<258x128xf32>
    %cst_23 = arith.constant dense<0.000000e+00> : vector<258xf32>
    %43 = vector.multi_reduction <add>, %42, %cst_23 [1] : vector<258x128xf32> to vector<258xf32>
    %44 = vector.shape_cast %43 : vector<258xf32> to vector<258x1xf32>
    %cst_24 = arith.constant 3.125000e-02 : f32
    %45 = vector.broadcast %cst_24 : f32 to vector<258x1xf32>
    %46 = arith.mulf %44, %45 : vector<258x1xf32>
    %47 = vector.broadcast %46 : vector<258x1xf32> to vector<258x128xf32>
    %48 = arith.subf %42, %47 : vector<258x128xf32>
    %49 = vector.broadcast %9 : vector<1x128xf32> to vector<258x128xf32>
    %50 = arith.mulf %48, %49 : vector<258x128xf32>
    %51 = arith.mulf %50, %50 : vector<258x128xf32>
    %cst_25 = arith.constant dense<0.000000e+00> : vector<258xf32>
    %52 = vector.multi_reduction <add>, %51, %cst_25 [1] : vector<258x128xf32> to vector<258xf32>
    %53 = vector.shape_cast %52 : vector<258xf32> to vector<258x1xf32>
    %cst_26 = arith.constant 3.125000e-02 : f32
    %54 = vector.broadcast %cst_26 : f32 to vector<258x1xf32>
    %55 = arith.mulf %53, %54 : vector<258x1xf32>
    %cst_27 = arith.constant 9.99999974E-6 : f32
    %56 = vector.broadcast %cst_27 : f32 to vector<258x1xf32>
    %57 = arith.addf %55, %56 : vector<258x1xf32>
    %58 = math.rsqrt %57 : vector<258x1xf32>
    %59 = vector.broadcast %58 : vector<258x1xf32> to vector<258x128xf32>
    %60 = arith.mulf %50, %59 : vector<258x128xf32>
    %61 = vector.broadcast %4 : vector<1x128xf32> to vector<258x128xf32>
    %62 = arith.mulf %60, %61 : vector<258x128xf32>
    %63 = vector.broadcast %5 : vector<1x128xf32> to vector<258x128xf32>
    %64 = arith.addf %62, %63 : vector<258x128xf32>
    %c1_i32 = arith.constant 1 : i32
    %65 = arith.subi %2, %c1_i32 : i32
    %66 = tpu.iota {dimensions = array<i32: 0>} : vector<258x1xi32>
    %67 = vector.broadcast %65 : i32 to vector<258x1xi32>
    %68 = arith.addi %66, %67 : vector<258x1xi32>
    %c0_i32_28 = arith.constant 0 : i32
    %69 = vector.broadcast %c0_i32_28 : i32 to vector<258x1xi32>
    %70 = arith.cmpi sge, %68, %69 : vector<258x1xi32>
    %71 = vector.broadcast %1 : i32 to vector<258x1xi32>
    %72 = arith.cmpi slt, %68, %71 : vector<258x1xi32>
    %73 = arith.andi %70, %72 : vector<258x1xi1>
    %74 = arith.extui %73 : vector<258x1xi1> to vector<258x1xi32>
    %75 = arith.sitofp %74 : vector<258x1xi32> to vector<258x1xf32>
    %76 = vector.broadcast %75 : vector<258x1xf32> to vector<258x128xf32>
    %77 = arith.mulf %64, %76 : vector<258x128xf32>
    %78 = vector.extract_strided_slice %77 {offsets = [0, 0], sizes = [256, 128], strides = [1, 1]} : vector<258x128xf32> to vector<256x128xf32>
    %c0_29 = arith.constant 0 : index
    %c0_30 = arith.constant 0 : index
    %c0_31 = arith.constant 0 : index
    %79 = vector.load %arg6[%c0_29, %c0_30, %c0_31] : memref<3x128x128xf32, #tpu.memory_space<vmem>>, vector<1x128x128xf32>
    %80 = vector.shape_cast %79 : vector<1x128x128xf32> to vector<128x128xf32>
    %cst_32 = arith.constant dense<0.000000e+00> : vector<256x128xf32>
    %81 = tpu.matmul %78, %80, %cst_32 {dimension_numbers = #tpu.dot_dimension_numbers<[1], [0], [0], [1], [0, 0, 1, 1], [], []>} : vector<256x128xf32>, vector<128x128xf32>, vector<256x128xf32> -> vector<256x128xf32>
    %82 = vector.extract_strided_slice %77 {offsets = [1, 0], sizes = [256, 128], strides = [1, 1]} : vector<258x128xf32> to vector<256x128xf32>
    %c1_33 = arith.constant 1 : index
    %c0_34 = arith.constant 0 : index
    %c0_35 = arith.constant 0 : index
    %83 = vector.load %arg6[%c1_33, %c0_34, %c0_35] : memref<3x128x128xf32, #tpu.memory_space<vmem>>, vector<1x128x128xf32>
    %84 = vector.shape_cast %83 : vector<1x128x128xf32> to vector<128x128xf32>
    %cst_36 = arith.constant dense<0.000000e+00> : vector<256x128xf32>
    %85 = tpu.matmul %82, %84, %cst_36 {dimension_numbers = #tpu.dot_dimension_numbers<[1], [0], [0], [1], [0, 0, 1, 1], [], []>} : vector<256x128xf32>, vector<128x128xf32>, vector<256x128xf32> -> vector<256x128xf32>
    %86 = arith.addf %81, %85 : vector<256x128xf32>
    %87 = vector.extract_strided_slice %77 {offsets = [2, 0], sizes = [256, 128], strides = [1, 1]} : vector<258x128xf32> to vector<256x128xf32>
    %c2_37 = arith.constant 2 : index
    %c0_38 = arith.constant 0 : index
    %c0_39 = arith.constant 0 : index
    %88 = vector.load %arg6[%c2_37, %c0_38, %c0_39] : memref<3x128x128xf32, #tpu.memory_space<vmem>>, vector<1x128x128xf32>
    %89 = vector.shape_cast %88 : vector<1x128x128xf32> to vector<128x128xf32>
    %cst_40 = arith.constant dense<0.000000e+00> : vector<256x128xf32>
    %90 = tpu.matmul %87, %89, %cst_40 {dimension_numbers = #tpu.dot_dimension_numbers<[1], [0], [0], [1], [0, 0, 1, 1], [], []>} : vector<256x128xf32>, vector<128x128xf32>, vector<256x128xf32> -> vector<256x128xf32>
    %91 = arith.addf %86, %90 : vector<256x128xf32>
    %92 = vector.broadcast %6 : vector<1x128xf32> to vector<256x128xf32>
    %93 = arith.addf %91, %92 : vector<256x128xf32>
    %cst_41 = arith.constant 0.000000e+00 : f32
    %94 = vector.broadcast %cst_41 : f32 to vector<256x128xf32>
    %95 = arith.maximumf %93, %94 : vector<256x128xf32>
    %cst_42 = arith.constant dense<0.000000e+00> : vector<256xf32>
    %96 = vector.multi_reduction <add>, %95, %cst_42 [1] : vector<256x128xf32> to vector<256xf32>
    %97 = vector.shape_cast %96 : vector<256xf32> to vector<256x1xf32>
    %cst_43 = arith.constant 3.125000e-02 : f32
    %98 = vector.broadcast %cst_43 : f32 to vector<256x1xf32>
    %99 = arith.mulf %97, %98 : vector<256x1xf32>
    %100 = vector.broadcast %99 : vector<256x1xf32> to vector<256x128xf32>
    %101 = arith.subf %95, %100 : vector<256x128xf32>
    %102 = vector.broadcast %9 : vector<1x128xf32> to vector<256x128xf32>
    %103 = arith.mulf %101, %102 : vector<256x128xf32>
    %104 = arith.mulf %103, %103 : vector<256x128xf32>
    %cst_44 = arith.constant dense<0.000000e+00> : vector<256xf32>
    %105 = vector.multi_reduction <add>, %104, %cst_44 [1] : vector<256x128xf32> to vector<256xf32>
    %106 = vector.shape_cast %105 : vector<256xf32> to vector<256x1xf32>
    %cst_45 = arith.constant 3.125000e-02 : f32
    %107 = vector.broadcast %cst_45 : f32 to vector<256x1xf32>
    %108 = arith.mulf %106, %107 : vector<256x1xf32>
    %cst_46 = arith.constant 9.99999974E-6 : f32
    %109 = vector.broadcast %cst_46 : f32 to vector<256x1xf32>
    %110 = arith.addf %108, %109 : vector<256x1xf32>
    %111 = math.rsqrt %110 : vector<256x1xf32>
    %112 = vector.broadcast %111 : vector<256x1xf32> to vector<256x128xf32>
    %113 = arith.mulf %103, %112 : vector<256x128xf32>
    %114 = vector.broadcast %7 : vector<1x128xf32> to vector<256x128xf32>
    %115 = arith.mulf %113, %114 : vector<256x128xf32>
    %116 = vector.broadcast %8 : vector<1x128xf32> to vector<256x128xf32>
    %117 = arith.addf %115, %116 : vector<256x128xf32>
    %c0_47 = arith.constant 0 : index
    %c0_48 = arith.constant 0 : index
    %118 = vector.load %arg7[%c0_47, %c0_48] : memref<1x128xf32, #tpu.memory_space<vmem>>, vector<1x128xf32>
    %cst_49 = arith.constant dense<0.000000e+00> : vector<1x256xf32>
    %119 = tpu.matmul %118, %117, %cst_49 {dimension_numbers = #tpu.dot_dimension_numbers<[1], [1], [0], [0], [0, 0, 1, 0], [], []>} : vector<1x128xf32>, vector<256x128xf32>, vector<1x256xf32> -> vector<1x256xf32>
    %c0_50 = arith.constant 0 : index
    %120 = memref.load %arg3[%c0_50] : memref<1xf32, #tpu.memory_space<smem>>
    %121 = vector.broadcast %120 : f32 to vector<1x256xf32>
    %122 = arith.addf %119, %121 : vector<1x256xf32>
    %123 = tpu.iota {dimensions = array<i32: 1>} : vector<1x256xi32>
    %124 = vector.broadcast %2 : i32 to vector<1x256xi32>
    %125 = arith.addi %123, %124 : vector<1x256xi32>
    %126 = vector.broadcast %1 : i32 to vector<1x256xi32>
    %127 = arith.cmpi slt, %125, %126 : vector<1x256xi32>
    %128 = arith.extui %127 : vector<1x256xi1> to vector<1x256xi32>
    %129 = arith.sitofp %128 : vector<1x256xi32> to vector<1x256xf32>
    %130 = arith.mulf %122, %129 : vector<1x256xf32>
    %c0_51 = arith.constant 0 : index
    %c0_52 = arith.constant 0 : index
    %c0_53 = arith.constant 0 : index
    %131 = vector.load %arg9[%c0_51, %c0_52, %c0_53] : memref<1x1x256xf32, #tpu.memory_space<vmem>>, vector<1x1x256xf32>
    %132 = vector.shape_cast %131 : vector<1x1x256xf32> to vector<1x256xf32>
    %133 = vector.shape_cast %130 : vector<1x256xf32> to vector<1x1x256xf32>
    tpu.vector_store %arg9[%c0_51, %c0_52, %c0_53], %133 {strides = array<i32>} : memref<1x1x256xf32, #tpu.memory_space<vmem>>, vector<1x1x256xf32>,
    return
  }
  func.func @transform_0(%arg0: i32, %arg1: i32, %arg2: memref<2xi32, #tpu.memory_space<smem>>, %arg3: memref<1xf32, #tpu.memory_space<smem>>) -> (i32, i32, i32, i32) {
    %c0_i32 = arith.constant 0 : i32
    %c0_i32_0 = arith.constant 0 : i32
    %c0_i32_1 = arith.constant 0 : i32
    return %arg0, %arg1, %c0_i32, %c0_i32_0 : i32, i32, i32, i32
  }
  func.func @transform_1(%arg0: i32, %arg1: i32, %arg2: memref<2xi32, #tpu.memory_space<smem>>, %arg3: memref<1xf32, #tpu.memory_space<smem>>) -> (i32, i32, i32) {
    %c0_i32 = arith.constant 0 : i32
    %c0_i32_0 = arith.constant 0 : i32
    %c0_i32_1 = arith.constant 0 : i32
    %c0_i32_2 = arith.constant 0 : i32
    return %c0_i32, %c0_i32_0, %c0_i32_1 : i32, i32, i32
  }
  func.func @transform_2(%arg0: i32, %arg1: i32, %arg2: memref<2xi32, #tpu.memory_space<smem>>, %arg3: memref<1xf32, #tpu.memory_space<smem>>) -> (i32, i32, i32) {
    %c0_i32 = arith.constant 0 : i32
    %c0_i32_0 = arith.constant 0 : i32
    %c0_i32_1 = arith.constant 0 : i32
    %c0_i32_2 = arith.constant 0 : i32
    return %c0_i32, %c0_i32_0, %c0_i32_1 : i32, i32, i32
  }
  func.func @transform_3(%arg0: i32, %arg1: i32, %arg2: memref<2xi32, #tpu.memory_space<smem>>, %arg3: memref<1xf32, #tpu.memory_space<smem>>) -> (i32, i32) {
    %c0_i32 = arith.constant 0 : i32
    %c0_i32_0 = arith.constant 0 : i32
    %c0_i32_1 = arith.constant 0 : i32
    return %c0_i32, %c0_i32_0 : i32, i32
  }
  func.func @transform_4(%arg0: i32, %arg1: i32, %arg2: memref<2xi32, #tpu.memory_space<smem>>, %arg3: memref<1xf32, #tpu.memory_space<smem>>) -> (i32, i32) {
    %c0_i32 = arith.constant 0 : i32
    %c0_i32_0 = arith.constant 0 : i32
    %c0_i32_1 = arith.constant 0 : i32
    return %c0_i32, %c0_i32_0 : i32, i32
  }
  func.func @transform_5(%arg0: i32, %arg1: i32, %arg2: memref<2xi32, #tpu.memory_space<smem>>, %arg3: memref<1xf32, #tpu.memory_space<smem>>) -> (i32, i32, i32) {
    %c0_i32 = arith.constant 0 : i32
    %c0_i32_0 = arith.constant 0 : i32
    return %arg0, %c0_i32, %arg1 : i32, i32, i32
  }
}

</mosaic_0001>

<llo_original>
// kernel: dimension_predictor_vits.1
$region0: #{dimension_predictor_vits.1}
  #allocation0 [shape = 'u32[]', space=smem, size = 0x4, offset = 0x4, fixed_abs, tag = 'smem constant byte address 0x4 - core index']
  #allocation1 [shape = 'u32[72,128]{1,0:T(1,128)}', space=vmem, size = 0x9000, scoped, tag = 'internal scratch']
  #allocation2 [shape = 's32[1]{0}', space=sflag, size = 0x4, scoped, tag = 'scoped memory for dimension_predictor_vits.1']
  #allocation3 [shape = 'u8[512]{0}', space=smem, size = 0x200, scoped, tag = 'prefetched SMEM operand 0']
  #allocation4 [shape = 'f32[1]{0:T(128)S(6)}', space=smem, size = 0x200, scoped, tag = 'prefetched SMEM operand 1']
  %s0 = inlined_call_operand.vmem [shape: s32[2], index: 0, kind: input, shape index: {}]
  %s1 = inlined_call_operand.<no memory space> [shape: f32[1], index: 1, kind: input, shape index: {}]
  %s2 = inlined_call_operand.vmem [shape: f32[2,1,260,128], index: 2, kind: input, shape index: {}]
  %s3 = inlined_call_operand.vmem [shape: f32[3,128,128], index: 3, kind: input, shape index: {}]
  %s4 = inlined_call_operand.vmem [shape: f32[3,128,128], index: 4, kind: input, shape index: {}]
  %s5 = inlined_call_operand.vmem [shape: f32[1,128], index: 5, kind: input, shape index: {}]
  %s6 = inlined_call_operand.vmem [shape: f32[8,128], index: 6, kind: input, shape index: {}]
  %s7 = inlined_call_operand.hbm [shape: f32[2,1,256], index: 7, kind: output, shape index: {}]
  %s8 = sld [smem:[#allocation0]]
  $region53: #{dimension_predictor_vits.1} parent=0
    _
  %s10 = ssub.s32 1, %s8
  %s11 = scalar_select 0, %s10, %s8
  %s13 = sshll.u32 %s0, 4
  %s14 = int_to_ptr.vmem [resolvable:$true] %s13
  %16 = dma.vmem_to_smem %s14, 16, [#allocation3], [#allocation2]
  %17 = sst [smem:[#allocation4]] %s1
  %19 = dma.done [#allocation2], 16
  %20 = sfence
  $region1: #{dimension_predictor_vits.1} parent=0
    #allocation5 [shape = 'u8[2048]{0}', space=vmem, size = 0x800, scoped, tag = 'output window, operand 0']
    #allocation6 [shape = 's32[2]{0}', space=sflag, size = 0x8, scoped, tag = 'scoped memory for dimension_predictor_vits.1']
    %21 = vsyncpa [#allocation6], 0
    %s22 = scalar_lea.sflag [#allocation6], 1
    %23 = vsyncpa %s22, 0
    loop: start=0, step=1, limit=4
    $region2: #{dimension_predictor_vits.1} parent=1 // loop_pre_header
      _
    $region3: #{dimension_predictor_vits.1} parent=1 // loop_header
      %s25 = sphi 0, %s29
      %p26 = scmp.ge.s32.totalorder %s25, 4
      %s32 = sphi 0, %s44
      %s33 = sphi 0, %s40
      %s34 = sphi 0, %s32
      %s35 = sphi 0, %s33
      %s36 = sphi 0, %s34
      %s37 = sphi 0, %s35
      %s49 = sphi 0, %s51
      %s52 = sphi 0, %s49
      %s53 = sphi 0, %s52
      %s69 = sphi 0, %s53
      %s73 = sphi 0, %s73
      %s75 = sphi 0, %s73
      %s76 = sphi 0, %s75
      %s90 = sphi 0, %s76
      %s94 = sphi 0, %s94
      %s96 = sphi 0, %s94
      %s97 = sphi 0, %s96
      %s111 = sphi 0, %s97
      %s115 = sphi 0, %s115
      %s117 = sphi 0, %s115
      %s118 = sphi 0, %s117
      %s132 = sphi 0, %s118
      %s136 = sphi 0, %s136
      %s138 = sphi 0, %s136
      %s139 = sphi 0, %s138
      %s153 = sphi 0, %s139
      %s161 = sphi 0, %s163
      %s164 = sphi 0, %s161
      %s165 = sphi 0, %s164
      %s181 = sphi 0, %s165
    $region4: #{dimension_predictor_vits.1} parent=1 // loop_header_branch
      %28 = sbr.rel (%p26) target = $region8
    $region5: #{dimension_predictor_vits.1} parent=1 // loop_body
      %s30 = ssub.s32 %s25, 1
      %s31 = ssub.s32 %s25, 2
      %s38 = sadd.s32 1, %s33
      %p39 = scmp.ge.s32.totalorder %s38, 1
      %s40 = scalar_select %p39, 0, %s38
      %s41 = sadd.s32 1, %s32
      %s42 = scalar_select %p39, %s41, %s32
      %p43 = scmp.ge.s32.totalorder %s42, 2
      %s44 = scalar_select %p43, 0, %s42
      %s45 = ssub.s32 %s32, %s44
      %s46 = ssub.s32 %s33, %s40
      %s47 = sor.u32 %s45, %s46
      %p48 = scmp.eq.s32.totalorder %s47, 0
      %s50 = sadd.s32 %s49, 1
      %s51 = scalar_select %p48, %s49, %s50
      %p54 = pneg %p48
      %p55 = scmp.eq.s32.totalorder %s25, 1
      %p56 = por %p54, %p55
      %p57 = scmp.ne.s32.totalorder %s49, %s52
      %p58 = scmp.eq.s32.totalorder %s25, 0
      %p59 = por %p57, %p58
      %p60 = scmp.ne.s32.totalorder %s49, %s52
      %p61 = scmp.eq.s32.totalorder %s30, 1
      %p62 = por %p60, %p61
      %p63 = scmp.ne.s32.totalorder %s52, %s53
      %p64 = scmp.eq.s32.totalorder %s30, 0
      %p65 = por %p63, %p64
      %p66 = scmp.ne.s32.totalorder %s52, %s53
      %p67 = scmp.eq.s32.totalorder %s31, 1
      %p68 = por %p66, %p67
      %p70 = scmp.ne.s32.totalorder %s53, %s69
      %p71 = scmp.eq.s32.totalorder %s31, 0
      %p72 = por %p70, %p71
      %s74 = sadd.s32 %s73, 1
      %p77 = scmp.eq.s32.totalorder %s25, 1
      %p78 = scmp.ne.s32.totalorder %s73, %s75
      %p79 = scmp.eq.s32.totalorder %s25, 0
      %p80 = por %p78, %p79
      %p81 = scmp.ne.s32.totalorder %s73, %s75
      %p82 = scmp.eq.s32.totalorder %s30, 1
      %p83 = por %p81, %p82
      %p84 = scmp.ne.s32.totalorder %s75, %s76
      %p85 = scmp.eq.s32.totalorder %s30, 0
      %p86 = por %p84, %p85
      %p87 = scmp.ne.s32.totalorder %s75, %s76
      %p88 = scmp.eq.s32.totalorder %s31, 1
      %p89 = por %p87, %p88
      %p91 = scmp.ne.s32.totalorder %s76, %s90
      %p92 = scmp.eq.s32.totalorder %s31, 0
      %p93 = por %p91, %p92
      %s95 = sadd.s32 %s94, 1
      %p98 = scmp.eq.s32.totalorder %s25, 1
      %p99 = scmp.ne.s32.totalorder %s94, %s96
      %p100 = scmp.eq.s32.totalorder %s25, 0
      %p101 = por %p99, %p100
      %p102 = scmp.ne.s32.totalorder %s94, %s96
      %p103 = scmp.eq.s32.totalorder %s30, 1
      %p104 = por %p102, %p103
      %p105 = scmp.ne.s32.totalorder %s96, %s97
      %p106 = scmp.eq.s32.totalorder %s30, 0
      %p107 = por %p105, %p106
      %p108 = scmp.ne.s32.totalorder %s96, %s97
      %p109 = scmp.eq.s32.totalorder %s31, 1
      %p110 = por %p108, %p109
      %p112 = scmp.ne.s32.totalorder %s97, %s111
      %p113 = scmp.eq.s32.totalorder %s31, 0
      %p114 = por %p112, %p113
      %s116 = sadd.s32 %s115, 1
      %p119 = scmp.eq.s32.totalorder %s25, 1
      %p120 = scmp.ne.s32.totalorder %s115, %s117
      %p121 = scmp.eq.s32.totalorder %s25, 0
      %p122 = por %p120, %p121
      %p123 = scmp.ne.s32.totalorder %s115, %s117
      %p124 = scmp.eq.s32.totalorder %s30, 1
      %p125 = por %p123, %p124
      %p126 = scmp.ne.s32.totalorder %s117, %s118
      %p127 = scmp.eq.s32.totalorder %s30, 0
      %p128 = por %p126, %p127
      %p129 = scmp.ne.s32.totalorder %s117, %s118
      %p130 = scmp.eq.s32.totalorder %s31, 1
      %p131 = por %p129, %p130
      %p133 = scmp.ne.s32.totalorder %s118, %s132
      %p134 = scmp.eq.s32.totalorder %s31, 0
      %p135 = por %p133, %p134
      %s137 = sadd.s32 %s136, 1
      %p140 = scmp.eq.s32.totalorder %s25, 1
      %p141 = scmp.ne.s32.totalorder %s136, %s138
      %p142 = scmp.eq.s32.totalorder %s25, 0
      %p143 = por %p141, %p142
      %p144 = scmp.ne.s32.totalorder %s136, %s138
      %p145 = scmp.eq.s32.totalorder %s30, 1
      %p146 = por %p144, %p145
      %p147 = scmp.ne.s32.totalorder %s138, %s139
      %p148 = scmp.eq.s32.totalorder %s30, 0
      %p149 = por %p147, %p148
      %p150 = scmp.ne.s32.totalorder %s138, %s139
      %p151 = scmp.eq.s32.totalorder %s31, 1
      %p152 = por %p150, %p151
      %p154 = scmp.ne.s32.totalorder %s139, %s153
      %p155 = scmp.eq.s32.totalorder %s31, 0
      %p156 = por %p154, %p155
      %s157 = ssub.s32 %s32, %s44
      %s158 = ssub.s32 %s33, %s40
      %s159 = sor.u32 %s157, %s158
      %p160 = scmp.eq.s32.totalorder %s159, 0
      %s162 = sadd.s32 %s161, 1
      %s163 = scalar_select %p160, %s161, %s162
      %p166 = pneg %p160
      %p167 = scmp.eq.s32.totalorder %s25, 1
      %p168 = por %p166, %p167
      %p169 = scmp.ne.s32.totalorder %s161, %s164
      %p170 = scmp.eq.s32.totalorder %s25, 0
      %p171 = por %p169, %p170
      %p172 = scmp.ne.s32.totalorder %s161, %s164
      %p173 = scmp.eq.s32.totalorder %s30, 1
      %p174 = por %p172, %p173
      %p175 = scmp.ne.s32.totalorder %s164, %s165
      %p176 = scmp.eq.s32.totalorder %s30, 0
      %p177 = por %p175, %p176
      %p178 = scmp.ne.s32.totalorder %s164, %s165
      %p179 = scmp.eq.s32.totalorder %s31, 1
      %p180 = por %p178, %p179
      %p182 = scmp.ne.s32.totalorder %s165, %s181
      %p183 = scmp.eq.s32.totalorder %s31, 0
      %p184 = por %p182, %p183
      %p185 = scmp.le.s32.totalorder 1, %s25
      %p186 = scmp.lt.s32.totalorder %s25, 3
      %p187 = pnand %p185, %p186
      %p188 = pneg %p187
      // Predicated region
      $region9: #{dimension_predictor_vits.1} parent=5 // pred_check
        _
      $region10: #{dimension_predictor_vits.1} parent=5 // pred_check_branch
        %190 = sbr.rel (%p187) target = $region12
      $region11: #{dimension_predictor_vits.1} parent=5 // pred_region
        %s191 = ssub.s32 %s25, 1
        // Predicated region
        $region13: #{dimension_predictor_vits.1} parent=11 // pred_check
          %p192 = pneg %p86
        $region14: #{dimension_predictor_vits.1} parent=11 // pred_check_branch
          %194 = sbr.rel (%p192) target = $region16
        $region15: #{dimension_predictor_vits.1} parent=11 // pred_region
          _
        $region16: #{dimension_predictor_vits.1} parent=11 // pred_fallthru
          _
        // Predicated region
        $region17: #{dimension_predictor_vits.1} parent=11 // pred_check
          %p195 = pneg %p107
        $region18: #{dimension_predictor_vits.1} parent=11 // pred_check_branch
          %197 = sbr.rel (%p195) target = $region20
        $region19: #{dimension_predictor_vits.1} parent=11 // pred_region
          _
        $region20: #{dimension_predictor_vits.1} parent=11 // pred_fallthru
          _
        // Predicated region
        $region21: #{dimension_predictor_vits.1} parent=11 // pred_check
          %p198 = pneg %p128
        $region22: #{dimension_predictor_vits.1} parent=11 // pred_check_branch
          %200 = sbr.rel (%p198) target = $region24
        $region23: #{dimension_predictor_vits.1} parent=11 // pred_region
          _
        $region24: #{dimension_predictor_vits.1} parent=11 // pred_fallthru
          _
        // Predicated region
        $region25: #{dimension_predictor_vits.1} parent=11 // pred_check
          %p201 = pneg %p149
        $region26: #{dimension_predictor_vits.1} parent=11 // pred_check_branch
          %203 = sbr.rel (%p201) target = $region28
        $region27: #{dimension_predictor_vits.1} parent=11 // pred_region
          _
        $region28: #{dimension_predictor_vits.1} parent=11 // pred_fallthru
          _
      $region12: #{dimension_predictor_vits.1} parent=5 // pred_fallthru
        _
      %p204 = scmp.lt.s32.totalorder %s25, 2
      // Predicated region
      $region29: #{dimension_predictor_vits.1} parent=5 // pred_check
        %p205 = pneg %p204
      $region30: #{dimension_predictor_vits.1} parent=5 // pred_check_branch
        %207 = sbr.rel (%p205) target = $region32
      $region31: #{dimension_predictor_vits.1} parent=5 // pred_region
        // Predicated region
        $region33: #{dimension_predictor_vits.1} parent=31 // pred_check
          %p208 = pneg %p59
        $region34: #{dimension_predictor_vits.1} parent=31 // pred_check_branch
          %210 = sbr.rel (%p208) target = $region36
        $region35: #{dimension_predictor_vits.1} parent=31 // pred_region
          %p211 = scmp.lt.s32.totalorder %s32, 1
          %s212 = scalar_select %p211, %s32, 1
          %p213 = scmp.lt.s32.totalorder %s33, 0
          %s214 = scalar_select %p213, %s33, 0
          %s215 = smul.addr %s214, 33
          %s216 = smul.addr %s212, 33
          %s217 = sadd.s32 %s215, %s216
          %s218 = smul.addr %s217, 8
          %s219 = scalar_lea.vmem %s2, %s218
        $region36: #{dimension_predictor_vits.1} parent=31 // pred_fallthru
          _
      $region32: #{dimension_predictor_vits.1} parent=5 // pred_fallthru
        _
      %p220 = scmp.le.s32.totalorder 1, %s25
      %p221 = scmp.lt.s32.totalorder %s25, 3
      %p222 = pnand %p220, %p221
      %p223 = pneg %p222
      // Predicated region
      $region37: #{dimension_predictor_vits.1} parent=5 // pred_check
        _
      $region38: #{dimension_predictor_vits.1} parent=5 // pred_check_branch
        %225 = sbr.rel (%p222) target = $region40
      $region39: #{dimension_predictor_vits.1} parent=5 // pred_region
        %s226 = ssub.s32 %s25, 1
        %p227 = scmp.lt.s32.totalorder %s34, 1
        %s228 = scalar_select %p227, %s34, 1
        %p229 = scmp.lt.s32.totalorder %s35, 0
        %s230 = scalar_select %p229, %s35, 0
        %s231 = smul.addr %s230, 33
        %s232 = smul.addr %s228, 33
        %s233 = sadd.s32 %s231, %s232
        %s234 = smul.addr %s233, 8
        %s235 = scalar_lea.vmem %s2, %s234
        %p236 = pneg %p65
        %p237 = pneg %p62
        %p238 = pneg %p86
        %p239 = pneg %p83
        %p240 = pneg %p107
        %p241 = pneg %p104
        %p242 = pneg %p128
        %p243 = pneg %p125
        %p244 = pneg %p149
        %p245 = pneg %p146
        %p246 = pneg %p177
        %p247 = pneg %p174
        %s248 = sand.u32 %s164, 1
        %s249 = scalar_lea.sflag [#allocation6], %s248
        %s250 = sand.u32 %s164, 1
        %s251 = smul.addr %s250, 2
        %s252 = scalar_lea.vmem [#allocation5], %s251
        %p253 = scmp.lt.s32.totalorder %s34, 1
        %s254 = scalar_select %p253, %s34, 1
        %p255 = scmp.lt.s32.totalorder %s35, 0
        %s256 = scalar_select %p255, %s35, 0
        %s257 = smul.addr %s256, 33
        %s258 = smul.addr %s254, 33
        %s259 = sadd.s32 %s257, %s258
        %s260 = smul.addr %s259, 8
        %s261 = scalar_lea.vmem %s2, %s260
        %s262 = smul.u32 2, %s35
        %s263 = sld [smem:[#allocation3 + %s34]]
        %s264 = smul.u32 %s35, 256
        %v265 = vld [vmem:[%s6] sm:$0x1]
        %v266 = vld [vmem:[%s6 + $0x1] sm:$0x1]
        %v267 = vld [vmem:[%s6 + $0x2] sm:$0x1]
        %v268 = vld [vmem:[%s6 + $0x3] sm:$0x1]
        %v269 = vld [vmem:[%s6 + $0x4] sm:$0x1]
        %v270 = vld [vmem:[%s6 + $0x5] sm:$0x1]
        %v271 = vld [vmem:[%s6 + $0x6] sm:$0x1]
        %v272 = vld [vmem:[%s261] sm:$0xff]
        %v273 = vld [vmem:[%s261 + $0x8] sm:$0xff]
        %v274 = vld [vmem:[%s261 + $0x10] sm:$0xff]
        %v275 = vld [vmem:[%s261 + $0x18] sm:$0xff]
        %v276 = vld [vmem:[%s261 + $0x20] sm:$0xff]
        %v277 = vld [vmem:[%s261 + $0x28] sm:$0xff]
        %v278 = vld [vmem:[%s261 + $0x30] sm:$0xff]
        %v279 = vld [vmem:[%s261 + $0x38] sm:$0xff]
        %v280 = vld [vmem:[%s261 + $0x40] sm:$0xff]
        %v281 = vld [vmem:[%s261 + $0x48] sm:$0xff]
        %v282 = vld [vmem:[%s261 + $0x50] sm:$0xff]
        %v283 = vld [vmem:[%s261 + $0x58] sm:$0xff]
        %v284 = vld [vmem:[%s261 + $0x60] sm:$0xff]
        %v285 = vld [vmem:[%s261 + $0x68] sm:$0xff]
        %v286 = vld [vmem:[%s261 + $0x70] sm:$0xff]
        %v287 = vld [vmem:[%s261 + $0x78] sm:$0xff]
        %v288 = vld [vmem:[%s261 + $0x80] sm:$0xff]
        %v289 = vld [vmem:[%s261 + $0x88] sm:$0xff]
        %v290 = vld [vmem:[%s261 + $0x90] sm:$0xff]
        %v291 = vld [vmem:[%s261 + $0x98] sm:$0xff]
        %v292 = vld [vmem:[%s261 + $0xa0] sm:$0xff]
        %v293 = vld [vmem:[%s261 + $0xa8] sm:$0xff]
        %v294 = vld [vmem:[%s261 + $0xb0] sm:$0xff]
        %v295 = vld [vmem:[%s261 + $0xb8] sm:$0xff]
        %v296 = vld [vmem:[%s261 + $0xc0] sm:$0xff]
        %v297 = vld [vmem:[%s261 + $0xc8] sm:$0xff]
        %v298 = vld [vmem:[%s261 + $0xd0] sm:$0xff]
        %v299 = vld [vmem:[%s261 + $0xd8] sm:$0xff]
        %v300 = vld [vmem:[%s261 + $0xe0] sm:$0xff]
        %v301 = vld [vmem:[%s261 + $0xe8] sm:$0xff]
        %v302 = vld [vmem:[%s261 + $0xf0] sm:$0xff]
        %v303 = vld [vmem:[%s261 + $0xf8] sm:$0xff]
        %v304 = vld [vmem:[%s261 + $0x100] sm:$0xf]
        %s305 = ssub.s32 %s264, 2
        %v306 = vlaneseq
        %v307 = vshrl.u32 %v306, 7
        %v308 = vadd.s32 %v307, 8
        %v309 = vadd.s32 %v307, 16
        %v310 = vadd.s32 %v307, 24
        %v311 = vadd.s32 %v307, 32
        %v312 = vadd.s32 %v307, 40
        %v313 = vadd.s32 %v307, 48
        %v314 = vadd.s32 %v307, 56
        %v315 = vadd.s32 %v307, 64
        %v316 = vadd.s32 %v307, 72
        %v317 = vadd.s32 %v307, 80
        %v318 = vadd.s32 %v307, 88
        %v319 = vadd.s32 %v307, 96
        %v320 = vadd.s32 %v307, 104
        %v321 = vadd.s32 %v307, 112
        %v322 = vadd.s32 %v307, 120
        %v323 = vadd.s32 %v307, 128
        %v324 = vadd.s32 %v307, 136
        %v325 = vadd.s32 %v307, 144
        %v326 = vadd.s32 %v307, 152
        %v327 = vadd.s32 %v307, 160
        %v328 = vadd.s32 %v307, 168
        %v329 = vadd.s32 %v307, 176
        %v330 = vadd.s32 %v307, 184
        %v331 = vadd.s32 %v307, 192
        %v332 = vadd.s32 %v307, 200
        %v333 = vadd.s32 %v307, 208
        %v334 = vadd.s32 %v307, 216
        %v335 = vadd.s32 %v307, 224
        %v336 = vadd.s32 %v307, 232
        %v337 = vadd.s32 %v307, 240
        %v338 = vadd.s32 %v307, 248
        %v339 = vadd.s32 %v307, 256
        %v340 = vstv %s305
        %v341 = vadd.s32 %v307, %v340
        %v342 = vadd.s32 %v308, %v340
        %v343 = vadd.s32 %v309, %v340
        %v344 = vadd.s32 %v310, %v340
        %v345 = vadd.s32 %v311, %v340
        %v346 = vadd.s32 %v312, %v340
        %v347 = vadd.s32 %v313, %v340
        %v348 = vadd.s32 %v314, %v340
        %v349 = vadd.s32 %v315, %v340
        %v350 = vadd.s32 %v316, %v340
        %v351 = vadd.s32 %v317, %v340
        %v352 = vadd.s32 %v318, %v340
        %v353 = vadd.s32 %v319, %v340
        %v354 = vadd.s32 %v320, %v340
        %v355 = vadd.s32 %v321, %v340
        %v356 = vadd.s32 %v322, %v340
        %v357 = vadd.s32 %v323, %v340
        %v358 = vadd.s32 %v324, %v340
        %v359 = vadd.s32 %v325, %v340
        %v360 = vadd.s32 %v326, %v340
        %v361 = vadd.s32 %v327, %v340
        %v362 = vadd.s32 %v328, %v340
        %v363 = vadd.s32 %v329, %v340
        %v364 = vadd.s32 %v330, %v340
        %v365 = vadd.s32 %v331, %v340
        %v366 = vadd.s32 %v332, %v340
        %v367 = vadd.s32 %v333, %v340
        %v368 = vadd.s32 %v334, %v340
        %v369 = vadd.s32 %v335, %v340
        %v370 = vadd.s32 %v336, %v340
        %v371 = vadd.s32 %v337, %v340
        %v372 = vadd.s32 %v338, %v340
        %v373 = vadd.s32 %v339, %v340
        %vm374 = vcmp.ge.s32.totalorder %v341, 0
        %vm375 = vcmp.ge.s32.totalorder %v342, 0
        %vm376 = vcmp.ge.s32.totalorder %v343, 0
        %vm377 = vcmp.ge.s32.totalorder %v344, 0
        %vm378 = vcmp.ge.s32.totalorder %v345, 0
        %vm379 = vcmp.ge.s32.totalorder %v346, 0
        %vm380 = vcmp.ge.s32.totalorder %v347, 0
        %vm381 = vcmp.ge.s32.totalorder %v348, 0
        %vm382 = vcmp.ge.s32.totalorder %v349, 0
        %vm383 = vcmp.ge.s32.totalorder %v350, 0
        %vm384 = vcmp.ge.s32.totalorder %v351, 0
        %vm385 = vcmp.ge.s32.totalorder %v352, 0
        %vm386 = vcmp.ge.s32.totalorder %v353, 0
        %vm387 = vcmp.ge.s32.totalorder %v354, 0
        %vm388 = vcmp.ge.s32.totalorder %v355, 0
        %vm389 = vcmp.ge.s32.totalorder %v356, 0
        %vm390 = vcmp.ge.s32.totalorder %v357, 0
        %vm391 = vcmp.ge.s32.totalorder %v358, 0
        %vm392 = vcmp.ge.s32.totalorder %v359, 0
        %vm393 = vcmp.ge.s32.totalorder %v360, 0
        %vm394 = vcmp.ge.s32.totalorder %v361, 0
        %vm395 = vcmp.ge.s32.totalorder %v362, 0
        %vm396 = vcmp.ge.s32.totalorder %v363, 0
        %vm397 = vcmp.ge.s32.totalorder %v364, 0
        %vm398 = vcmp.ge.s32.totalorder %v365, 0
        %vm399 = vcmp.ge.s32.totalorder %v366, 0
        %vm400 = vcmp.ge.s32.totalorder %v367, 0
        %vm401 = vcmp.ge.s32.totalorder %v368, 0
        %vm402 = vcmp.ge.s32.totalorder %v369, 0
        %vm403 = vcmp.ge.s32.totalorder %v370, 0
        %vm404 = vcmp.ge.s32.totalorder %v371, 0
        %vm405 = vcmp.ge.s32.totalorder %v372, 0
        %vm406 = vcmp.ge.s32.totalorder %v373, 0
        %v407 = vstv %s263
        %vm408 = vcmp.lt.s32.totalorder %v341, %v407
        %vm409 = vcmp.lt.s32.totalorder %v342, %v407
        %vm410 = vcmp.lt.s32.totalorder %v343, %v407
        %vm411 = vcmp.lt.s32.totalorder %v344, %v407
        %vm412 = vcmp.lt.s32.totalorder %v345, %v407
        %vm413 = vcmp.lt.s32.totalorder %v346, %v407
        %vm414 = vcmp.lt.s32.totalorder %v347, %v407
        %vm415 = vcmp.lt.s32.totalorder %v348, %v407
        %vm416 = vcmp.lt.s32.totalorder %v349, %v407
        %vm417 = vcmp.lt.s32.totalorder %v350, %v407
        %vm418 = vcmp.lt.s32.totalorder %v351, %v407
        %vm419 = vcmp.lt.s32.totalorder %v352, %v407
        %vm420 = vcmp.lt.s32.totalorder %v353, %v407
        %vm421 = vcmp.lt.s32.totalorder %v354, %v407
        %vm422 = vcmp.lt.s32.totalorder %v355, %v407
        %vm423 = vcmp.lt.s32.totalorder %v356, %v407
        %vm424 = vcmp.lt.s32.totalorder %v357, %v407
        %vm425 = vcmp.lt.s32.totalorder %v358, %v407
        %vm426 = vcmp.lt.s32.totalorder %v359, %v407
        %vm427 = vcmp.lt.s32.totalorder %v360, %v407
        %vm428 = vcmp.lt.s32.totalorder %v361, %v407
        %vm429 = vcmp.lt.s32.totalorder %v362, %v407
        %vm430 = vcmp.lt.s32.totalorder %v363, %v407
        %vm431 = vcmp.lt.s32.totalorder %v364, %v407
        %vm432 = vcmp.lt.s32.totalorder %v365, %v407
        %vm433 = vcmp.lt.s32.totalorder %v366, %v407
        %vm434 = vcmp.lt.s32.totalorder %v367, %v407
        %vm435 = vcmp.lt.s32.totalorder %v368, %v407
        %vm436 = vcmp.lt.s32.totalorder %v369, %v407
        %vm437 = vcmp.lt.s32.totalorder %v370, %v407
        %vm438 = vcmp.lt.s32.totalorder %v371, %v407
        %vm439 = vcmp.lt.s32.totalorder %v372, %v407
        %vm440 = vcmp.lt.s32.totalorder %v373, %v407
        %vm441 = vmand %vm374, %vm408
        %vm442 = vmand %vm375, %vm409
        %vm443 = vmand %vm376, %vm410
        %vm444 = vmand %vm377, %vm411
        %vm445 = vmand %vm378, %vm412
        %vm446 = vmand %vm379, %vm413
        %vm447 = vmand %vm380, %vm414
        %vm448 = vmand %vm381, %vm415
        %vm449 = vmand %vm382, %vm416
        %vm450 = vmand %vm383, %vm417
        %vm451 = vmand %vm384, %vm418
        %vm452 = vmand %vm385, %vm419
        %vm453 = vmand %vm386, %vm420
        %vm454 = vmand %vm387, %vm421
        %vm455 = vmand %vm388, %vm422
        %vm456 = vmand %vm389, %vm423
        %vm457 = vmand %vm390, %vm424
        %vm458 = vmand %vm391, %vm425
        %vm459 = vmand %vm392, %vm426
        %vm460 = vmand %vm393, %vm427
        %vm461 = vmand %vm394, %vm428
        %vm462 = vmand %vm395, %vm429
        %vm463 = vmand %vm396, %vm430
        %vm464 = vmand %vm397, %vm431
        %vm465 = vmand %vm398, %vm432
        %vm466 = vmand %vm399, %vm433
        %vm467 = vmand %vm400, %vm434
        %vm468 = vmand %vm401, %vm435
        %vm469 = vmand %vm402, %vm436
        %vm470 = vmand %vm403, %vm437
        %vm471 = vmand %vm404, %vm438
        %vm472 = vmand %vm405, %vm439
        %vm473 = vmand %vm406, %vm440
        %v474 = vsel %vm441, 1, 0
        %v475 = vsel %vm442, 1, 0
        %v476 = vsel %vm443, 1, 0
        %v477 = vsel %vm444, 1, 0
        %v478 = vsel %vm445, 1, 0
        %v479 = vsel %vm446, 1, 0
        %v480 = vsel %vm447, 1, 0
        %v481 = vsel %vm448, 1, 0
        %v482 = vsel %vm449, 1, 0
        %v483 = vsel %vm450, 1, 0
        %v484 = vsel %vm451, 1, 0
        %v485 = vsel %vm452, 1, 0
        %v486 = vsel %vm453, 1, 0
        %v487 = vsel %vm454, 1, 0
        %v488 = vsel %vm455, 1, 0
        %v489 = vsel %vm456, 1, 0
        %v490 = vsel %vm457, 1, 0
        %v491 = vsel %vm458, 1, 0
        %v492 = vsel %vm459, 1, 0
        %v493 = vsel %vm460, 1, 0
        %v494 = vsel %vm461, 1, 0
        %v495 = vsel %vm462, 1, 0
        %v496 = vsel %vm463, 1, 0
        %v497 = vsel %vm464, 1, 0
        %v498 = vsel %vm465, 1, 0
        %v499 = vsel %vm466, 1, 0
        %v500 = vsel %vm467, 1, 0
        %v501 = vsel %vm468, 1, 0
        %v502 = vsel %vm469, 1, 0
        %v503 = vsel %vm470, 1, 0
        %v504 = vsel %vm471, 1, 0
        %v505 = vsel %vm472, 1, 0
        %v506 = vsel %vm473, 1, 0
        %v507 = vcvt.s32.f32 %v474
        %v508 = vcvt.s32.f32 %v475
        %v509 = vcvt.s32.f32 %v476
        %v510 = vcvt.s32.f32 %v477
        %v511 = vcvt.s32.f32 %v478
        %v512 = vcvt.s32.f32 %v479
        %v513 = vcvt.s32.f32 %v480
        %v514 = vcvt.s32.f32 %v481
        %v515 = vcvt.s32.f32 %v482
        %v516 = vcvt.s32.f32 %v483
        %v517 = vcvt.s32.f32 %v484
        %v518 = vcvt.s32.f32 %v485
        %v519 = vcvt.s32.f32 %v486
        %v520 = vcvt.s32.f32 %v487
        %v521 = vcvt.s32.f32 %v488
        %v522 = vcvt.s32.f32 %v489
        %v523 = vcvt.s32.f32 %v490
        %v524 = vcvt.s32.f32 %v491
        %v525 = vcvt.s32.f32 %v492
        %v526 = vcvt.s32.f32 %v493
        %v527 = vcvt.s32.f32 %v494
        %v528 = vcvt.s32.f32 %v495
        %v529 = vcvt.s32.f32 %v496
        %v530 = vcvt.s32.f32 %v497
        %v531 = vcvt.s32.f32 %v498
        %v532 = vcvt.s32.f32 %v499
        %v533 = vcvt.s32.f32 %v500
        %v534 = vcvt.s32.f32 %v501
        %v535 = vcvt.s32.f32 %v502
        %v536 = vcvt.s32.f32 %v503
        %v537 = vcvt.s32.f32 %v504
        %v538 = vcvt.s32.f32 %v505
        %v539 = vcvt.s32.f32 %v506
        %v540 = vmul.f32 %v272, %v507
        %v541 = vmul.f32 %v273, %v508
        %v542 = vmul.f32 %v274, %v509
        %v543 = vmul.f32 %v275, %v510
        %v544 = vmul.f32 %v276, %v511
        %v545 = vmul.f32 %v277, %v512
        %v546 = vmul.f32 %v278, %v513
        %v547 = vmul.f32 %v279, %v514
        %v548 = vmul.f32 %v280, %v515
        %v549 = vmul.f32 %v281, %v516
        %v550 = vmul.f32 %v282, %v517
        %v551 = vmul.f32 %v283, %v518
        %v552 = vmul.f32 %v284, %v519
        %v553 = vmul.f32 %v285, %v520
        %v554 = vmul.f32 %v286, %v521
        %v555 = vmul.f32 %v287, %v522
        %v556 = vmul.f32 %v288, %v523
        %v557 = vmul.f32 %v289, %v524
        %v558 = vmul.f32 %v290, %v525
        %v559 = vmul.f32 %v291, %v526
        %v560 = vmul.f32 %v292, %v527
        %v561 = vmul.f32 %v293, %v528
        %v562 = vmul.f32 %v294, %v529
        %v563 = vmul.f32 %v295, %v530
        %v564 = vmul.f32 %v296, %v531
        %v565 = vmul.f32 %v297, %v532
        %v566 = vmul.f32 %v298, %v533
        %v567 = vmul.f32 %v299, %v534
        %v568 = vmul.f32 %v300, %v535
        %v569 = vmul.f32 %v301, %v536
        %v570 = vmul.f32 %v302, %v537
        %v571 = vmul.f32 %v303, %v538
        %v572 = vmul.f32 %v304, %v539
        %v573 = vld [vmem:[%s3] sm:$0xff]
        %v574 = vld [vmem:[%s3 + $0x8] sm:$0xff]
        %v575 = vld [vmem:[%s3 + $0x10] sm:$0xff]
        %v576 = vld [vmem:[%s3 + $0x18] sm:$0xff]
        %v577 = vld [vmem:[%s3 + $0x20] sm:$0xff]
        %v578 = vld [vmem:[%s3 + $0x28] sm:$0xff]
        %v579 = vld [vmem:[%s3 + $0x30] sm:$0xff]
        %v580 = vld [vmem:[%s3 + $0x38] sm:$0xff]
        %v581 = vld [vmem:[%s3 + $0x40] sm:$0xff]
        %v582 = vld [vmem:[%s3 + $0x48] sm:$0xff]
        %v583 = vld [vmem:[%s3 + $0x50] sm:$0xff]
        %v584 = vld [vmem:[%s3 + $0x58] sm:$0xff]
        %v585 = vld [vmem:[%s3 + $0x60] sm:$0xff]
        %v586 = vld [vmem:[%s3 + $0x68] sm:$0xff]
        %v587 = vld [vmem:[%s3 + $0x70] sm:$0xff]
        %v588 = vld [vmem:[%s3 + $0x78] sm:$0xff]
        %s589 = scalar_lea.vmem %s3, 128
        %v590 = vld [vmem:[%s589] sm:$0xff]
        %v591 = vld [vmem:[%s589 + $0x8] sm:$0xff]
        %v592 = vld [vmem:[%s589 + $0x10] sm:$0xff]
        %v593 = vld [vmem:[%s589 + $0x18] sm:$0xff]
        %v594 = vld [vmem:[%s589 + $0x20] sm:$0xff]
        %v595 = vld [vmem:[%s589 + $0x28] sm:$0xff]
        %v596 = vld [vmem:[%s589 + $0x30] sm:$0xff]
        %v597 = vld [vmem:[%s589 + $0x38] sm:$0xff]
        %v598 = vld [vmem:[%s589 + $0x40] sm:$0xff]
        %v599 = vld [vmem:[%s589 + $0x48] sm:$0xff]
        %v600 = vld [vmem:[%s589 + $0x50] sm:$0xff]
        %v601 = vld [vmem:[%s589 + $0x58] sm:$0xff]
        %v602 = vld [vmem:[%s589 + $0x60] sm:$0xff]
        %v603 = vld [vmem:[%s589 + $0x68] sm:$0xff]
        %v604 = vld [vmem:[%s589 + $0x70] sm:$0xff]
        %v605 = vld [vmem:[%s589 + $0x78] sm:$0xff]
        %vm639 = vcmask 1046528
        %v640 = vrot.slane %v540, 1
        %v641 = vrot.slane %v541, 1
        %v642 = vsel %vm639, %v640, %v641
        %v643 = vrot.slane %v542, 1
        %v644 = vsel %vm639, %v641, %v643
        %v645 = vrot.slane %v543, 1
        %v646 = vsel %vm639, %v643, %v645
        %v647 = vrot.slane %v544, 1
        %v648 = vsel %vm639, %v645, %v647
        %v649 = vrot.slane %v545, 1
        %v650 = vsel %vm639, %v647, %v649
        %v651 = vrot.slane %v546, 1
        %v652 = vsel %vm639, %v649, %v651
        %v653 = vrot.slane %v547, 1
        %v654 = vsel %vm639, %v651, %v653
        %v655 = vrot.slane %v548, 1
        %v656 = vsel %vm639, %v653, %v655
        %v657 = vrot.slane %v549, 1
        %v658 = vsel %vm639, %v655, %v657
        %v659 = vrot.slane %v550, 1
        %v660 = vsel %vm639, %v657, %v659
        %v661 = vrot.slane %v551, 1
        %v662 = vsel %vm639, %v659, %v661
        %v663 = vrot.slane %v552, 1
        %v664 = vsel %vm639, %v661, %v663
        %v665 = vrot.slane %v553, 1
        %v666 = vsel %vm639, %v663, %v665
        %v667 = vrot.slane %v554, 1
        %v668 = vsel %vm639, %v665, %v667
        %v669 = vrot.slane %v555, 1
        %v670 = vsel %vm639, %v667, %v669
        %v671 = vrot.slane %v556, 1
        %v672 = vsel %vm639, %v669, %v671
        %v673 = vrot.slane %v557, 1
        %v674 = vsel %vm639, %v671, %v673
        %v675 = vrot.slane %v558, 1
        %v676 = vsel %vm639, %v673, %v675
        %v677 = vrot.slane %v559, 1
        %v678 = vsel %vm639, %v675, %v677
        %v679 = vrot.slane %v560, 1
        %v680 = vsel %vm639, %v677, %v679
        %v681 = vrot.slane %v561, 1
        %v682 = vsel %vm639, %v679, %v681
        %v683 = vrot.slane %v562, 1
        %v684 = vsel %vm639, %v681, %v683
        %v685 = vrot.slane %v563, 1
        %v686 = vsel %vm639, %v683, %v685
        %v687 = vrot.slane %v564, 1
        %v688 = vsel %vm639, %v685, %v687
        %v689 = vrot.slane %v565, 1
        %v690 = vsel %vm639, %v687, %v689
        %v691 = vrot.slane %v566, 1
        %v692 = vsel %vm639, %v689, %v691
        %v693 = vrot.slane %v567, 1
        %v694 = vsel %vm639, %v691, %v693
        %v695 = vrot.slane %v568, 1
        %v696 = vsel %vm639, %v693, %v695
        %v697 = vrot.slane %v569, 1
        %v698 = vsel %vm639, %v695, %v697
        %v699 = vrot.slane %v570, 1
        %v700 = vsel %vm639, %v697, %v699
        %v701 = vrot.slane %v571, 1
        %v702 = vsel %vm639, %v699, %v701
        %v703 = vrot.slane %v572, 1
        %v704 = vsel %vm639, %v701, %v703
        %738 = vmatpush.msra.mxu0 %v605
        %739 = vmatpush.msra.mxu0 %v604
        %740 = vmatpush.msra.mxu0 %v603
        %741 = vmatpush.msra.mxu0 %v602
        %742 = vmatpush.msra.mxu0 %v601
        %743 = vmatpush.msra.mxu0 %v600
        %744 = vmatpush.msra.mxu0 %v599
        %745 = vmatpush.msra.mxu0 %v598
        %746 = vmatpush.msra.mxu0 %v597
        %747 = vmatpush.msra.mxu0 %v596
        %748 = vmatpush.msra.mxu0 %v595
        %749 = vmatpush.msra.mxu0 %v594
        %750 = vmatpush.msra.mxu0 %v593
        %751 = vmatpush.msra.mxu0 %v592
        %752 = vmatpush.msra.mxu0 %v591
        %753 = vmatpush.msra.mxu0 %v590
        %754 = vmatmul.f32.gmra.mxu0 %v642
        %v755 = vpop.f32.mrf.mxu0
        %v756 = vadd.f32 0.0, %v755
        %757 = vmatmul.f32.gmra.mxu0 %v644
        %v758 = vpop.f32.mrf.mxu0
        %v759 = vadd.f32 0.0, %v758
        %760 = vmatmul.f32.gmra.mxu0 %v646
        %v761 = vpop.f32.mrf.mxu0
        %v762 = vadd.f32 0.0, %v761
        %763 = vmatmul.f32.gmra.mxu0 %v648
        %v764 = vpop.f32.mrf.mxu0
        %v765 = vadd.f32 0.0, %v764
        %766 = vmatmul.f32.gmra.mxu0 %v650
        %v767 = vpop.f32.mrf.mxu0
        %v768 = vadd.f32 0.0, %v767
        %769 = vmatmul.f32.gmra.mxu0 %v652
        %v770 = vpop.f32.mrf.mxu0
        %v771 = vadd.f32 0.0, %v770
        %772 = vmatmul.f32.gmra.mxu0 %v654
        %v773 = vpop.f32.mrf.mxu0
        %v774 = vadd.f32 0.0, %v773
        %775 = vmatmul.f32.gmra.mxu0 %v656
        %v776 = vpop.f32.mrf.mxu0
        %v777 = vadd.f32 0.0, %v776
        %778 = vmatmul.f32.gmra.mxu0 %v658
        %v779 = vpop.f32.mrf.mxu0
        %v780 = vadd.f32 0.0, %v779
        %781 = vmatmul.f32.gmra.mxu0 %v660
        %v782 = vpop.f32.mrf.mxu0
        %v783 = vadd.f32 0.0, %v782
        %784 = vmatmul.f32.gmra.mxu0 %v662
        %v785 = vpop.f32.mrf.mxu0
        %v786 = vadd.f32 0.0, %v785
        %787 = vmatmul.f32.gmra.mxu0 %v664
        %v788 = vpop.f32.mrf.mxu0
        %v789 = vadd.f32 0.0, %v788
        %790 = vmatmul.f32.gmra.mxu0 %v666
        %v791 = vpop.f32.mrf.mxu0
        %v792 = vadd.f32 0.0, %v791
        %793 = vmatmul.f32.gmra.mxu0 %v668
        %v794 = vpop.f32.mrf.mxu0
        %v795 = vadd.f32 0.0, %v794
        %796 = vmatmul.f32.gmra.mxu0 %v670
        %v797 = vpop.f32.mrf.mxu0
        %v798 = vadd.f32 0.0, %v797
        %799 = vmatmul.f32.gmra.mxu0 %v672
        %v800 = vpop.f32.mrf.mxu0
        %v801 = vadd.f32 0.0, %v800
        %802 = vmatmul.f32.gmra.mxu0 %v674
        %v803 = vpop.f32.mrf.mxu0
        %v804 = vadd.f32 0.0, %v803
        %805 = vmatmul.f32.gmra.mxu0 %v676
        %v806 = vpop.f32.mrf.mxu0
        %v807 = vadd.f32 0.0, %v806
        %808 = vmatmul.f32.gmra.mxu0 %v678
        %v809 = vpop.f32.mrf.mxu0
        %v810 = vadd.f32 0.0, %v809
        %811 = vmatmul.f32.gmra.mxu0 %v680
        %v812 = vpop.f32.mrf.mxu0
        %v813 = vadd.f32 0.0, %v812
        %814 = vmatmul.f32.gmra.mxu0 %v682
        %v815 = vpop.f32.mrf.mxu0
        %v816 = vadd.f32 0.0, %v815
        %817 = vmatmul.f32.gmra.mxu0 %v684
        %v818 = vpop.f32.mrf.mxu0
        %v819 = vadd.f32 0.0, %v818
        %820 = vmatmul.f32.gmra.mxu0 %v686
        %v821 = vpop.f32.mrf.mxu0
        %v822 = vadd.f32 0.0, %v821
        %823 = vmatmul.f32.gmra.mxu0 %v688
        %v824 = vpop.f32.mrf.mxu0
        %v825 = vadd.f32 0.0, %v824
        %826 = vmatmul.f32.gmra.mxu0 %v690
        %v827 = vpop.f32.mrf.mxu0
        %v828 = vadd.f32 0.0, %v827
        %829 = vmatmul.f32.gmra.mxu0 %v692
        %v830 = vpop.f32.mrf.mxu0
        %v831 = vadd.f32 0.0, %v830
        %832 = vmatmul.f32.gmra.mxu0 %v694
        %v833 = vpop.f32.mrf.mxu0
        %v834 = vadd.f32 0.0, %v833
        %835 = vmatmul.f32.gmra.mxu0 %v696
        %v836 = vpop.f32.mrf.mxu0
        %v837 = vadd.f32 0.0, %v836
        %838 = vmatmul.f32.gmra.mxu0 %v698
        %v839 = vpop.f32.mrf.mxu0
        %v840 = vadd.f32 0.0, %v839
        %841 = vmatmul.f32.gmra.mxu0 %v700
        %v842 = vpop.f32.mrf.mxu0
        %v843 = vadd.f32 0.0, %v842
        %844 = vmatmul.f32.gmra.mxu0 %v702
        %v845 = vpop.f32.mrf.mxu0
        %v846 = vadd.f32 0.0, %v845
        %847 = vmatmul.f32.gmra.mxu0 %v704
        %v848 = vpop.f32.mrf.mxu0
        %v849 = vadd.f32 0.0, %v848
        %850 = vmatmul.f32.gmra.mxu0 %v703
        %v851 = vpop.f32.mrf.mxu0
        %v852 = vadd.f32 0.0, %v851
        %853 = vdwg.mxu0
        %854 = vmatpush.msra.mxu0 %v588
        %855 = vmatpush.msra.mxu0 %v587
        %856 = vmatpush.msra.mxu0 %v586
        %857 = vmatpush.msra.mxu0 %v585
        %858 = vmatpush.msra.mxu0 %v584
        %859 = vmatpush.msra.mxu0 %v583
        %860 = vmatpush.msra.mxu0 %v582
        %861 = vmatpush.msra.mxu0 %v581
        %862 = vmatpush.msra.mxu0 %v580
        %863 = vmatpush.msra.mxu0 %v579
        %864 = vmatpush.msra.mxu0 %v578
        %865 = vmatpush.msra.mxu0 %v577
        %866 = vmatpush.msra.mxu0 %v576
        %867 = vmatpush.msra.mxu0 %v575
        %868 = vmatpush.msra.mxu0 %v574
        %869 = vmatpush.msra.mxu0 %v573
        %870 = vmatmul.f32.gmra.mxu0 %v540
        %v871 = vpop.f32.mrf.mxu0
        %v872 = vadd.f32 %v756, %v871
        %873 = vmatmul.f32.gmra.mxu0 %v541
        %v874 = vpop.f32.mrf.mxu0
        %v875 = vadd.f32 %v759, %v874
        %876 = vmatmul.f32.gmra.mxu0 %v542
        %v877 = vpop.f32.mrf.mxu0
        %v878 = vadd.f32 %v762, %v877
        %879 = vmatmul.f32.gmra.mxu0 %v543
        %v880 = vpop.f32.mrf.mxu0
        %v881 = vadd.f32 %v765, %v880
        %882 = vmatmul.f32.gmra.mxu0 %v544
        %v883 = vpop.f32.mrf.mxu0
        %v884 = vadd.f32 %v768, %v883
        %885 = vmatmul.f32.gmra.mxu0 %v545
        %v886 = vpop.f32.mrf.mxu0
        %v887 = vadd.f32 %v771, %v886
        %888 = vmatmul.f32.gmra.mxu0 %v546
        %v889 = vpop.f32.mrf.mxu0
        %v890 = vadd.f32 %v774, %v889
        %891 = vmatmul.f32.gmra.mxu0 %v547
        %v892 = vpop.f32.mrf.mxu0
        %v893 = vadd.f32 %v777, %v892
        %894 = vmatmul.f32.gmra.mxu0 %v548
        %v895 = vpop.f32.mrf.mxu0
        %v896 = vadd.f32 %v780, %v895
        %897 = vmatmul.f32.gmra.mxu0 %v549
        %v898 = vpop.f32.mrf.mxu0
        %v899 = vadd.f32 %v783, %v898
        %900 = vmatmul.f32.gmra.mxu0 %v550
        %v901 = vpop.f32.mrf.mxu0
        %v902 = vadd.f32 %v786, %v901
        %903 = vmatmul.f32.gmra.mxu0 %v551
        %v904 = vpop.f32.mrf.mxu0
        %v905 = vadd.f32 %v789, %v904
        %906 = vmatmul.f32.gmra.mxu0 %v552
        %v907 = vpop.f32.mrf.mxu0
        %v908 = vadd.f32 %v792, %v907
        %909 = vmatmul.f32.gmra.mxu0 %v553
        %v910 = vpop.f32.mrf.mxu0
        %v911 = vadd.f32 %v795, %v910
        %912 = vmatmul.f32.gmra.mxu0 %v554
        %v913 = vpop.f32.mrf.mxu0
        %v914 = vadd.f32 %v798, %v913
        %915 = vmatmul.f32.gmra.mxu0 %v555
        %v916 = vpop.f32.mrf.mxu0
        %v917 = vadd.f32 %v801, %v916
        %918 = vmatmul.f32.gmra.mxu0 %v556
        %v919 = vpop.f32.mrf.mxu0
        %v920 = vadd.f32 %v804, %v919
        %921 = vmatmul.f32.gmra.mxu0 %v557
        %v922 = vpop.f32.mrf.mxu0
        %v923 = vadd.f32 %v807, %v922
        %924 = vmatmul.f32.gmra.mxu0 %v558
        %v925 = vpop.f32.mrf.mxu0
        %v926 = vadd.f32 %v810, %v925
        %927 = vmatmul.f32.gmra.mxu0 %v559
        %v928 = vpop.f32.mrf.mxu0
        %v929 = vadd.f32 %v813, %v928
        %930 = vmatmul.f32.gmra.mxu0 %v560
        %v931 = vpop.f32.mrf.mxu0
        %v932 = vadd.f32 %v816, %v931
        %933 = vmatmul.f32.gmra.mxu0 %v561
        %v934 = vpop.f32.mrf.mxu0
        %v935 = vadd.f32 %v819, %v934
        %936 = vmatmul.f32.gmra.mxu0 %v562
        %v937 = vpop.f32.mrf.mxu0
        %v938 = vadd.f32 %v822, %v937
        %939 = vmatmul.f32.gmra.mxu0 %v563
        %v940 = vpop.f32.mrf.mxu0
        %v941 = vadd.f32 %v825, %v940
        %942 = vmatmul.f32.gmra.mxu0 %v564
        %v943 = vpop.f32.mrf.mxu0
        %v944 = vadd.f32 %v828, %v943
        %945 = vmatmul.f32.gmra.mxu0 %v565
        %v946 = vpop.f32.mrf.mxu0
        %v947 = vadd.f32 %v831, %v946
        %948 = vmatmul.f32.gmra.mxu0 %v566
        %v949 = vpop.f32.mrf.mxu0
        %v950 = vadd.f32 %v834, %v949
        %951 = vmatmul.f32.gmra.mxu0 %v567
        %v952 = vpop.f32.mrf.mxu0
        %v953 = vadd.f32 %v837, %v952
        %954 = vmatmul.f32.gmra.mxu0 %v568
        %v955 = vpop.f32.mrf.mxu0
        %v956 = vadd.f32 %v840, %v955
        %957 = vmatmul.f32.gmra.mxu0 %v569
        %v958 = vpop.f32.mrf.mxu0
        %v959 = vadd.f32 %v843, %v958
        %960 = vmatmul.f32.gmra.mxu0 %v570
        %v961 = vpop.f32.mrf.mxu0
        %v962 = vadd.f32 %v846, %v961
        %963 = vmatmul.f32.gmra.mxu0 %v571
        %v964 = vpop.f32.mrf.mxu0
        %v965 = vadd.f32 %v849, %v964
        %966 = vmatmul.f32.gmra.mxu0 %v572
        %v967 = vpop.f32.mrf.mxu0
        %v968 = vadd.f32 %v852, %v967
        %969 = vdwg.mxu0
        %s970 = scalar_lea.vmem %s3, 256
        %v971 = vld [vmem:[%s970] sm:$0xff]
        %v972 = vld [vmem:[%s970 + $0x8] sm:$0xff]
        %v973 = vld [vmem:[%s970 + $0x10] sm:$0xff]
        %v974 = vld [vmem:[%s970 + $0x18] sm:$0xff]
        %v975 = vld [vmem:[%s970 + $0x20] sm:$0xff]
        %v976 = vld [vmem:[%s970 + $0x28] sm:$0xff]
        %v977 = vld [vmem:[%s970 + $0x30] sm:$0xff]
        %v978 = vld [vmem:[%s970 + $0x38] sm:$0xff]
        %v979 = vld [vmem:[%s970 + $0x40] sm:$0xff]
        %v980 = vld [vmem:[%s970 + $0x48] sm:$0xff]
        %v981 = vld [vmem:[%s970 + $0x50] sm:$0xff]
        %v982 = vld [vmem:[%s970 + $0x58] sm:$0xff]
        %v983 = vld [vmem:[%s970 + $0x60] sm:$0xff]
        %v984 = vld [vmem:[%s970 + $0x68] sm:$0xff]
        %v985 = vld [vmem:[%s970 + $0x70] sm:$0xff]
        %v986 = vld [vmem:[%s970 + $0x78] sm:$0xff]
        %vm987 = vcmask 1045504
        %v988 = vrot.slane %v540, 2
        %v989 = vrot.slane %v541, 2
        %v990 = vsel %vm987, %v988, %v989
        %v991 = vrot.slane %v542, 2
        %v992 = vsel %vm987, %v989, %v991
        %v993 = vrot.slane %v543, 2
        %v994 = vsel %vm987, %v991, %v993
        %v995 = vrot.slane %v544, 2
        %v996 = vsel %vm987, %v993, %v995
        %v997 = vrot.slane %v545, 2
        %v998 = vsel %vm987, %v995, %v997
        %v999 = vrot.slane %v546, 2
        %v1000 = vsel %vm987, %v997, %v999
        %v1001 = vrot.slane %v547, 2
        %v1002 = vsel %vm987, %v999, %v1001
        %v1003 = vrot.slane %v548, 2
        %v1004 = vsel %vm987, %v1001, %v1003
        %v1005 = vrot.slane %v549, 2
        %v1006 = vsel %vm987, %v1003, %v1005
        %v1007 = vrot.slane %v550, 2
        %v1008 = vsel %vm987, %v1005, %v1007
        %v1009 = vrot.slane %v551, 2
        %v1010 = vsel %vm987, %v1007, %v1009
        %v1011 = vrot.slane %v552, 2
        %v1012 = vsel %vm987, %v1009, %v1011
        %v1013 = vrot.slane %v553, 2
        %v1014 = vsel %vm987, %v1011, %v1013
        %v1015 = vrot.slane %v554, 2
        %v1016 = vsel %vm987, %v1013, %v1015
        %v1017 = vrot.slane %v555, 2
        %v1018 = vsel %vm987, %v1015, %v1017
        %v1019 = vrot.slane %v556, 2
        %v1020 = vsel %vm987, %v1017, %v1019
        %v1021 = vrot.slane %v557, 2
        %v1022 = vsel %vm987, %v1019, %v1021
        %v1023 = vrot.slane %v558, 2
        %v1024 = vsel %vm987, %v1021, %v1023
        %v1025 = vrot.slane %v559, 2
        %v1026 = vsel %vm987, %v1023, %v1025
        %v1027 = vrot.slane %v560, 2
        %v1028 = vsel %vm987, %v1025, %v1027
        %v1029 = vrot.slane %v561, 2
        %v1030 = vsel %vm987, %v1027, %v1029
        %v1031 = vrot.slane %v562, 2
        %v1032 = vsel %vm987, %v1029, %v1031
        %v1033 = vrot.slane %v563, 2
        %v1034 = vsel %vm987, %v1031, %v1033
        %v1035 = vrot.slane %v564, 2
        %v1036 = vsel %vm987, %v1033, %v1035
        %v1037 = vrot.slane %v565, 2
        %v1038 = vsel %vm987, %v1035, %v1037
        %v1039 = vrot.slane %v566, 2
        %v1040 = vsel %vm987, %v1037, %v1039
        %v1041 = vrot.slane %v567, 2
        %v1042 = vsel %vm987, %v1039, %v1041
        %v1043 = vrot.slane %v568, 2
        %v1044 = vsel %vm987, %v1041, %v1043
        %v1045 = vrot.slane %v569, 2
        %v1046 = vsel %vm987, %v1043, %v1045
        %v1047 = vrot.slane %v570, 2
        %v1048 = vsel %vm987, %v1045, %v1047
        %v1049 = vrot.slane %v571, 2
        %v1050 = vsel %vm987, %v1047, %v1049
        %v1051 = vrot.slane %v572, 2
        %v1052 = vsel %vm987, %v1049, %v1051
        %1086 = vmatpush.msra.mxu0 %v986
        %1087 = vmatpush.msra.mxu0 %v985
        %1088 = vmatpush.msra.mxu0 %v984
        %1089 = vmatpush.msra.mxu0 %v983
        %1090 = vmatpush.msra.mxu0 %v982
        %1091 = vmatpush.msra.mxu0 %v981
        %1092 = vmatpush.msra.mxu0 %v980
        %1093 = vmatpush.msra.mxu0 %v979
        %1094 = vmatpush.msra.mxu0 %v978
        %1095 = vmatpush.msra.mxu0 %v977
        %1096 = vmatpush.msra.mxu0 %v976
        %1097 = vmatpush.msra.mxu0 %v975
        %1098 = vmatpush.msra.mxu0 %v974
        %1099 = vmatpush.msra.mxu0 %v973
        %1100 = vmatpush.msra.mxu0 %v972
        %1101 = vmatpush.msra.mxu0 %v971
        %1102 = vmatmul.f32.gmra.mxu0 %v990
        %v1103 = vpop.f32.mrf.mxu0
        %v1104 = vadd.f32 0.0, %v1103
        %1105 = vmatmul.f32.gmra.mxu0 %v992
        %v1106 = vpop.f32.mrf.mxu0
        %v1107 = vadd.f32 0.0, %v1106
        %1108 = vmatmul.f32.gmra.mxu0 %v994
        %v1109 = vpop.f32.mrf.mxu0
        %v1110 = vadd.f32 0.0, %v1109
        %1111 = vmatmul.f32.gmra.mxu0 %v996
        %v1112 = vpop.f32.mrf.mxu0
        %v1113 = vadd.f32 0.0, %v1112
        %1114 = vmatmul.f32.gmra.mxu0 %v998
        %v1115 = vpop.f32.mrf.mxu0
        %v1116 = vadd.f32 0.0, %v1115
        %1117 = vmatmul.f32.gmra.mxu0 %v1000
        %v1118 = vpop.f32.mrf.mxu0
        %v1119 = vadd.f32 0.0, %v1118
        %1120 = vmatmul.f32.gmra.mxu0 %v1002
        %v1121 = vpop.f32.mrf.mxu0
        %v1122 = vadd.f32 0.0, %v1121
        %1123 = vmatmul.f32.gmra.mxu0 %v1004
        %v1124 = vpop.f32.mrf.mxu0
        %v1125 = vadd.f32 0.0, %v1124
        %1126 = vmatmul.f32.gmra.mxu0 %v1006
        %v1127 = vpop.f32.mrf.mxu0
        %v1128 = vadd.f32 0.0, %v1127
        %1129 = vmatmul.f32.gmra.mxu0 %v1008
        %v1130 = vpop.f32.mrf.mxu0
        %v1131 = vadd.f32 0.0, %v1130
        %1132 = vmatmul.f32.gmra.mxu0 %v1010
        %v1133 = vpop.f32.mrf.mxu0
        %v1134 = vadd.f32 0.0, %v1133
        %1135 = vmatmul.f32.gmra.mxu0 %v1012
        %v1136 = vpop.f32.mrf.mxu0
        %v1137 = vadd.f32 0.0, %v1136
        %1138 = vmatmul.f32.gmra.mxu0 %v1014
        %v1139 = vpop.f32.mrf.mxu0
        %v1140 = vadd.f32 0.0, %v1139
        %1141 = vmatmul.f32.gmra.mxu0 %v1016
        %v1142 = vpop.f32.mrf.mxu0
        %v1143 = vadd.f32 0.0, %v1142
        %1144 = vmatmul.f32.gmra.mxu0 %v1018
        %v1145 = vpop.f32.mrf.mxu0
        %v1146 = vadd.f32 0.0, %v1145
        %1147 = vmatmul.f32.gmra.mxu0 %v1020
        %v1148 = vpop.f32.mrf.mxu0
        %v1149 = vadd.f32 0.0, %v1148
        %1150 = vmatmul.f32.gmra.mxu0 %v1022
        %v1151 = vpop.f32.mrf.mxu0
        %v1152 = vadd.f32 0.0, %v1151
        %1153 = vmatmul.f32.gmra.mxu0 %v1024
        %v1154 = vpop.f32.mrf.mxu0
        %v1155 = vadd.f32 0.0, %v1154
        %1156 = vmatmul.f32.gmra.mxu0 %v1026
        %v1157 = vpop.f32.mrf.mxu0
        %v1158 = vadd.f32 0.0, %v1157
        %1159 = vmatmul.f32.gmra.mxu0 %v1028
        %v1160 = vpop.f32.mrf.mxu0
        %v1161 = vadd.f32 0.0, %v1160
        %1162 = vmatmul.f32.gmra.mxu0 %v1030
        %v1163 = vpop.f32.mrf.mxu0
        %v1164 = vadd.f32 0.0, %v1163
        %1165 = vmatmul.f32.gmra.mxu0 %v1032
        %v1166 = vpop.f32.mrf.mxu0
        %v1167 = vadd.f32 0.0, %v1166
        %1168 = vmatmul.f32.gmra.mxu0 %v1034
        %v1169 = vpop.f32.mrf.mxu0
        %v1170 = vadd.f32 0.0, %v1169
        %1171 = vmatmul.f32.gmra.mxu0 %v1036
        %v1172 = vpop.f32.mrf.mxu0
        %v1173 = vadd.f32 0.0, %v1172
        %1174 = vmatmul.f32.gmra.mxu0 %v1038
        %v1175 = vpop.f32.mrf.mxu0
        %v1176 = vadd.f32 0.0, %v1175
        %1177 = vmatmul.f32.gmra.mxu0 %v1040
        %v1178 = vpop.f32.mrf.mxu0
        %v1179 = vadd.f32 0.0, %v1178
        %1180 = vmatmul.f32.gmra.mxu0 %v1042
        %v1181 = vpop.f32.mrf.mxu0
        %v1182 = vadd.f32 0.0, %v1181
        %1183 = vmatmul.f32.gmra.mxu0 %v1044
        %v1184 = vpop.f32.mrf.mxu0
        %v1185 = vadd.f32 0.0, %v1184
        %1186 = vmatmul.f32.gmra.mxu0 %v1046
        %v1187 = vpop.f32.mrf.mxu0
        %v1188 = vadd.f32 0.0, %v1187
        %1189 = vmatmul.f32.gmra.mxu0 %v1048
        %v1190 = vpop.f32.mrf.mxu0
        %v1191 = vadd.f32 0.0, %v1190
        %1192 = vmatmul.f32.gmra.mxu0 %v1050
        %v1193 = vpop.f32.mrf.mxu0
        %v1194 = vadd.f32 0.0, %v1193
        %1195 = vmatmul.f32.gmra.mxu0 %v1052
        %v1196 = vpop.f32.mrf.mxu0
        %v1197 = vadd.f32 0.0, %v1196
        %1198 = vmatmul.f32.gmra.mxu0 %v1051
        %v1199 = vpop.f32.mrf.mxu0
        %v1200 = vadd.f32 0.0, %v1199
        %1201 = vdwg.mxu0
        %v1202 = vadd.f32 %v872, %v1104
        %v1203 = vadd.f32 %v875, %v1107
        %v1204 = vadd.f32 %v878, %v1110
        %v1205 = vadd.f32 %v881, %v1113
        %v1206 = vadd.f32 %v884, %v1116
        %v1207 = vadd.f32 %v887, %v1119
        %v1208 = vadd.f32 %v890, %v1122
        %v1209 = vadd.f32 %v893, %v1125
        %v1210 = vadd.f32 %v896, %v1128
        %v1211 = vadd.f32 %v899, %v1131
        %v1212 = vadd.f32 %v902, %v1134
        %v1213 = vadd.f32 %v905, %v1137
        %v1214 = vadd.f32 %v908, %v1140
        %v1215 = vadd.f32 %v911, %v1143
        %v1216 = vadd.f32 %v914, %v1146
        %v1217 = vadd.f32 %v917, %v1149
        %v1218 = vadd.f32 %v920, %v1152
        %v1219 = vadd.f32 %v923, %v1155
        %v1220 = vadd.f32 %v926, %v1158
        %v1221 = vadd.f32 %v929, %v1161
        %v1222 = vadd.f32 %v932, %v1164
        %v1223 = vadd.f32 %v935, %v1167
        %v1224 = vadd.f32 %v938, %v1170
        %v1225 = vadd.f32 %v941, %v1173
        %v1226 = vadd.f32 %v944, %v1176
        %v1227 = vadd.f32 %v947, %v1179
        %v1228 = vadd.f32 %v950, %v1182
        %v1229 = vadd.f32 %v953, %v1185
        %v1230 = vadd.f32 %v956, %v1188
        %v1231 = vadd.f32 %v959, %v1191
        %v1232 = vadd.f32 %v962, %v1194
        %v1233 = vadd.f32 %v965, %v1197
        %v1234 = vadd.f32 %v968, %v1200
        %v1235 = vperm.slane %v265, 0
        %v1236 = vadd.f32 %v1202, %v1235
        %v1237 = vadd.f32 %v1203, %v1235
        %v1238 = vadd.f32 %v1204, %v1235
        %v1239 = vadd.f32 %v1205, %v1235
        %v1240 = vadd.f32 %v1206, %v1235
        %v1241 = vadd.f32 %v1207, %v1235
        %v1242 = vadd.f32 %v1208, %v1235
        %v1243 = vadd.f32 %v1209, %v1235
        %v1244 = vadd.f32 %v1210, %v1235
        %v1245 = vadd.f32 %v1211, %v1235
        %v1246 = vadd.f32 %v1212, %v1235
        %v1247 = vadd.f32 %v1213, %v1235
        %v1248 = vadd.f32 %v1214, %v1235
        %v1249 = vadd.f32 %v1215, %v1235
        %v1250 = vadd.f32 %v1216, %v1235
        %v1251 = vadd.f32 %v1217, %v1235
        %v1252 = vadd.f32 %v1218, %v1235
        %v1253 = vadd.f32 %v1219, %v1235
        %v1254 = vadd.f32 %v1220, %v1235
        %v1255 = vadd.f32 %v1221, %v1235
        %v1256 = vadd.f32 %v1222, %v1235
        %v1257 = vadd.f32 %v1223, %v1235
        %v1258 = vadd.f32 %v1224, %v1235
        %v1259 = vadd.f32 %v1225, %v1235
        %v1260 = vadd.f32 %v1226, %v1235
        %v1261 = vadd.f32 %v1227, %v1235
        %v1262 = vadd.f32 %v1228, %v1235
        %v1263 = vadd.f32 %v1229, %v1235
        %v1264 = vadd.f32 %v1230, %v1235
        %v1265 = vadd.f32 %v1231, %v1235
        %v1266 = vadd.f32 %v1232, %v1235
        %v1267 = vadd.f32 %v1233, %v1235
        %v1268 = vadd.f32 %v1234, %v1235
        %v1269 = vmax.f32 %v1236, 0.0
        %v1270 = vmax.f32 %v1237, 0.0
        %v1271 = vmax.f32 %v1238, 0.0
        %v1272 = vmax.f32 %v1239, 0.0
        %v1273 = vmax.f32 %v1240, 0.0
        %v1274 = vmax.f32 %v1241, 0.0
        %v1275 = vmax.f32 %v1242, 0.0
        %v1276 = vmax.f32 %v1243, 0.0
        %v1277 = vmax.f32 %v1244, 0.0
        %v1278 = vmax.f32 %v1245, 0.0
        %v1279 = vmax.f32 %v1246, 0.0
        %v1280 = vmax.f32 %v1247, 0.0
        %v1281 = vmax.f32 %v1248, 0.0
        %v1282 = vmax.f32 %v1249, 0.0
        %v1283 = vmax.f32 %v1250, 0.0
        %v1284 = vmax.f32 %v1251, 0.0
        %v1285 = vmax.f32 %v1252, 0.0
        %v1286 = vmax.f32 %v1253, 0.0
        %v1287 = vmax.f32 %v1254, 0.0
        %v1288 = vmax.f32 %v1255, 0.0
        %v1289 = vmax.f32 %v1256, 0.0
        %v1290 = vmax.f32 %v1257, 0.0
        %v1291 = vmax.f32 %v1258, 0.0
        %v1292 = vmax.f32 %v1259, 0.0
        %v1293 = vmax.f32 %v1260, 0.0
        %v1294 = vmax.f32 %v1261, 0.0
        %v1295 = vmax.f32 %v1262, 0.0
        %v1296 = vmax.f32 %v1263, 0.0
        %v1297 = vmax.f32 %v1264, 0.0
        %v1298 = vmax.f32 %v1265, 0.0
        %v1299 = vmax.f32 %v1266, 0.0
        %v1300 = vmax.f32 %v1267, 0.0
        %v1301 = vmax.f32 %v1268, 0.0
        %1302 = vadd.xlane.f32.xlu0 %v1269
        %v1303 = vpop.xlane.xlu0 %1302
        %1304 = vadd.xlane.f32.xlu0 %v1270
        %v1305 = vpop.xlane.xlu0 %1304
        %1306 = vadd.xlane.f32.xlu0 %v1271
        %v1307 = vpop.xlane.xlu0 %1306
        %1308 = vadd.xlane.f32.xlu0 %v1272
        %v1309 = vpop.xlane.xlu0 %1308
        %1310 = vadd.xlane.f32.xlu0 %v1273
        %v1311 = vpop.xlane.xlu0 %1310
        %1312 = vadd.xlane.f32.xlu0 %v1274
        %v1313 = vpop.xlane.xlu0 %1312
        %1314 = vadd.xlane.f32.xlu0 %v1275
        %v1315 = vpop.xlane.xlu0 %1314
        %1316 = vadd.xlane.f32.xlu0 %v1276
        %v1317 = vpop.xlane.xlu0 %1316
        %1318 = vadd.xlane.f32.xlu0 %v1277
        %v1319 = vpop.xlane.xlu0 %1318
        %1320 = vadd.xlane.f32.xlu0 %v1278
        %v1321 = vpop.xlane.xlu0 %1320
        %1322 = vadd.xlane.f32.xlu0 %v1279
        %v1323 = vpop.xlane.xlu0 %1322
        %1324 = vadd.xlane.f32.xlu0 %v1280
        %v1325 = vpop.xlane.xlu0 %1324
        %1326 = vadd.xlane.f32.xlu0 %v1281
        %v1327 = vpop.xlane.xlu0 %1326
        %1328 = vadd.xlane.f32.xlu0 %v1282
        %v1329 = vpop.xlane.xlu0 %1328
        %1330 = vadd.xlane.f32.xlu0 %v1283
        %v1331 = vpop.xlane.xlu0 %1330
        %1332 = vadd.xlane.f32.xlu0 %v1284
        %v1333 = vpop.xlane.xlu0 %1332
        %1334 = vadd.xlane.f32.xlu0 %v1285
        %v1335 = vpop.xlane.xlu0 %1334
        %1336 = vadd.xlane.f32.xlu0 %v1286
        %v1337 = vpop.xlane.xlu0 %1336
        %1338 = vadd.xlane.f32.xlu0 %v1287
        %v1339 = vpop.xlane.xlu0 %1338
        %1340 = vadd.xlane.f32.xlu0 %v1288
        %v1341 = vpop.xlane.xlu0 %1340
        %1342 = vadd.xlane.f32.xlu0 %v1289
        %v1343 = vpop.xlane.xlu0 %1342
        %1344 = vadd.xlane.f32.xlu0 %v1290
        %v1345 = vpop.xlane.xlu0 %1344
        %1346 = vadd.xlane.f32.xlu0 %v1291
        %v1347 = vpop.xlane.xlu0 %1346
        %1348 = vadd.xlane.f32.xlu0 %v1292
        %v1349 = vpop.xlane.xlu0 %1348
        %1350 = vadd.xlane.f32.xlu0 %v1293
        %v1351 = vpop.xlane.xlu0 %1350
        %1352 = vadd.xlane.f32.xlu0 %v1294
        %v1353 = vpop.xlane.xlu0 %1352
        %1354 = vadd.xlane.f32.xlu0 %v1295
        %v1355 = vpop.xlane.xlu0 %1354
        %1356 = vadd.xlane.f32.xlu0 %v1296
        %v1357 = vpop.xlane.xlu0 %1356
        %1358 = vadd.xlane.f32.xlu0 %v1297
        %v1359 = vpop.xlane.xlu0 %1358
        %1360 = vadd.xlane.f32.xlu0 %v1298
        %v1361 = vpop.xlane.xlu0 %1360
        %1362 = vadd.xlane.f32.xlu0 %v1299
        %v1363 = vpop.xlane.xlu0 %1362
        %1364 = vadd.xlane.f32.xlu0 %v1300
        %v1365 = vpop.xlane.xlu0 %1364
        %vm1366 = vcmask 1041408
        %v1367 = vsel %vm1366, %v1301, 0.0
        %1368 = vadd.xlane.f32.xlu0 %v1367
        %v1369 = vpop.xlane.xlu0 %1368
        %v1370 = vmul.f32 %v1303, 0.03125
        %v1371 = vmul.f32 %v1305, 0.03125
        %v1372 = vmul.f32 %v1307, 0.03125
        %v1373 = vmul.f32 %v1309, 0.03125
        %v1374 = vmul.f32 %v1311, 0.03125
        %v1375 = vmul.f32 %v1313, 0.03125
        %v1376 = vmul.f32 %v1315, 0.03125
        %v1377 = vmul.f32 %v1317, 0.03125
        %v1378 = vmul.f32 %v1319, 0.03125
        %v1379 = vmul.f32 %v1321, 0.03125
        %v1380 = vmul.f32 %v1323, 0.03125
        %v1381 = vmul.f32 %v1325, 0.03125
        %v1382 = vmul.f32 %v1327, 0.03125
        %v1383 = vmul.f32 %v1329, 0.03125
        %v1384 = vmul.f32 %v1331, 0.03125
        %v1385 = vmul.f32 %v1333, 0.03125
        %v1386 = vmul.f32 %v1335, 0.03125
        %v1387 = vmul.f32 %v1337, 0.03125
        %v1388 = vmul.f32 %v1339, 0.03125
        %v1389 = vmul.f32 %v1341, 0.03125
        %v1390 = vmul.f32 %v1343, 0.03125
        %v1391 = vmul.f32 %v1345, 0.03125
        %v1392 = vmul.f32 %v1347, 0.03125
        %v1393 = vmul.f32 %v1349, 0.03125
        %v1394 = vmul.f32 %v1351, 0.03125
        %v1395 = vmul.f32 %v1353, 0.03125
        %v1396 = vmul.f32 %v1355, 0.03125
        %v1397 = vmul.f32 %v1357, 0.03125
        %v1398 = vmul.f32 %v1359, 0.03125
        %v1399 = vmul.f32 %v1361, 0.03125
        %v1400 = vmul.f32 %v1363, 0.03125
        %v1401 = vmul.f32 %v1365, 0.03125
        %v1402 = vmul.f32 %v1369, 0.03125
        %v1403 = vsub.f32 %v1269, %v1370
        %v1404 = vsub.f32 %v1270, %v1371
        %v1405 = vsub.f32 %v1271, %v1372
        %v1406 = vsub.f32 %v1272, %v1373
        %v1407 = vsub.f32 %v1273, %v1374
        %v1408 = vsub.f32 %v1274, %v1375
        %v1409 = vsub.f32 %v1275, %v1376
        %v1410 = vsub.f32 %v1276, %v1377
        %v1411 = vsub.f32 %v1277, %v1378
        %v1412 = vsub.f32 %v1278, %v1379
        %v1413 = vsub.f32 %v1279, %v1380
        %v1414 = vsub.f32 %v1280, %v1381
        %v1415 = vsub.f32 %v1281, %v1382
        %v1416 = vsub.f32 %v1282, %v1383
        %v1417 = vsub.f32 %v1283, %v1384
        %v1418 = vsub.f32 %v1284, %v1385
        %v1419 = vsub.f32 %v1285, %v1386
        %v1420 = vsub.f32 %v1286, %v1387
        %v1421 = vsub.f32 %v1287, %v1388
        %v1422 = vsub.f32 %v1288, %v1389
        %v1423 = vsub.f32 %v1289, %v1390
        %v1424 = vsub.f32 %v1290, %v1391
        %v1425 = vsub.f32 %v1291, %v1392
        %v1426 = vsub.f32 %v1292, %v1393
        %v1427 = vsub.f32 %v1293, %v1394
        %v1428 = vsub.f32 %v1294, %v1395
        %v1429 = vsub.f32 %v1295, %v1396
        %v1430 = vsub.f32 %v1296, %v1397
        %v1431 = vsub.f32 %v1297, %v1398
        %v1432 = vsub.f32 %v1298, %v1399
        %v1433 = vsub.f32 %v1299, %v1400
        %v1434 = vsub.f32 %v1300, %v1401
        %v1435 = vsub.f32 %v1301, %v1402
        %v1436 = vperm.slane %v271, 0
        %v1437 = vmul.f32 %v1403, %v1436
        %v1438 = vmul.f32 %v1404, %v1436
        %v1439 = vmul.f32 %v1405, %v1436
        %v1440 = vmul.f32 %v1406, %v1436
        %v1441 = vmul.f32 %v1407, %v1436
        %v1442 = vmul.f32 %v1408, %v1436
        %v1443 = vmul.f32 %v1409, %v1436
        %v1444 = vmul.f32 %v1410, %v1436
        %v1445 = vmul.f32 %v1411, %v1436
        %v1446 = vmul.f32 %v1412, %v1436
        %v1447 = vmul.f32 %v1413, %v1436
        %v1448 = vmul.f32 %v1414, %v1436
        %v1449 = vmul.f32 %v1415, %v1436
        %v1450 = vmul.f32 %v1416, %v1436
        %v1451 = vmul.f32 %v1417, %v1436
        %v1452 = vmul.f32 %v1418, %v1436
        %v1453 = vmul.f32 %v1419, %v1436
        %v1454 = vmul.f32 %v1420, %v1436
        %v1455 = vmul.f32 %v1421, %v1436
        %v1456 = vmul.f32 %v1422, %v1436
        %v1457 = vmul.f32 %v1423, %v1436
        %v1458 = vmul.f32 %v1424, %v1436
        %v1459 = vmul.f32 %v1425, %v1436
        %v1460 = vmul.f32 %v1426, %v1436
        %v1461 = vmul.f32 %v1427, %v1436
        %v1462 = vmul.f32 %v1428, %v1436
        %v1463 = vmul.f32 %v1429, %v1436
        %v1464 = vmul.f32 %v1430, %v1436
        %v1465 = vmul.f32 %v1431, %v1436
        %v1466 = vmul.f32 %v1432, %v1436
        %v1467 = vmul.f32 %v1433, %v1436
        %v1468 = vmul.f32 %v1434, %v1436
        %v1469 = vmul.f32 %v1435, %v1436
        %v1470 = vmul.f32 %v1437, %v1437
        %v1471 = vmul.f32 %v1438, %v1438
        %v1472 = vmul.f32 %v1439, %v1439
        %v1473 = vmul.f32 %v1440, %v1440
        %v1474 = vmul.f32 %v1441, %v1441
        %v1475 = vmul.f32 %v1442, %v1442
        %v1476 = vmul.f32 %v1443, %v1443
        %v1477 = vmul.f32 %v1444, %v1444
        %v1478 = vmul.f32 %v1445, %v1445
        %v1479 = vmul.f32 %v1446, %v1446
        %v1480 = vmul.f32 %v1447, %v1447
        %v1481 = vmul.f32 %v1448, %v1448
        %v1482 = vmul.f32 %v1449, %v1449
        %v1483 = vmul.f32 %v1450, %v1450
        %v1484 = vmul.f32 %v1451, %v1451
        %v1485 = vmul.f32 %v1452, %v1452
        %v1486 = vmul.f32 %v1453, %v1453
        %v1487 = vmul.f32 %v1454, %v1454
        %v1488 = vmul.f32 %v1455, %v1455
        %v1489 = vmul.f32 %v1456, %v1456
        %v1490 = vmul.f32 %v1457, %v1457
        %v1491 = vmul.f32 %v1458, %v1458
        %v1492 = vmul.f32 %v1459, %v1459
        %v1493 = vmul.f32 %v1460, %v1460
        %v1494 = vmul.f32 %v1461, %v1461
        %v1495 = vmul.f32 %v1462, %v1462
        %v1496 = vmul.f32 %v1463, %v1463
        %v1497 = vmul.f32 %v1464, %v1464
        %v1498 = vmul.f32 %v1465, %v1465
        %v1499 = vmul.f32 %v1466, %v1466
        %v1500 = vmul.f32 %v1467, %v1467
        %v1501 = vmul.f32 %v1468, %v1468
        %v1502 = vmul.f32 %v1469, %v1469
        %1503 = vadd.xlane.f32.xlu0 %v1470
        %v1504 = vpop.xlane.xlu0 %1503
        %1505 = vadd.xlane.f32.xlu0 %v1471
        %v1506 = vpop.xlane.xlu0 %1505
        %1507 = vadd.xlane.f32.xlu0 %v1472
        %v1508 = vpop.xlane.xlu0 %1507
        %1509 = vadd.xlane.f32.xlu0 %v1473
        %v1510 = vpop.xlane.xlu0 %1509
        %1511 = vadd.xlane.f32.xlu0 %v1474
        %v1512 = vpop.xlane.xlu0 %1511
        %1513 = vadd.xlane.f32.xlu0 %v1475
        %v1514 = vpop.xlane.xlu0 %1513
        %1515 = vadd.xlane.f32.xlu0 %v1476
        %v1516 = vpop.xlane.xlu0 %1515
        %1517 = vadd.xlane.f32.xlu0 %v1477
        %v1518 = vpop.xlane.xlu0 %1517
        %1519 = vadd.xlane.f32.xlu0 %v1478
        %v1520 = vpop.xlane.xlu0 %1519
        %1521 = vadd.xlane.f32.xlu0 %v1479
        %v1522 = vpop.xlane.xlu0 %1521
        %1523 = vadd.xlane.f32.xlu0 %v1480
        %v1524 = vpop.xlane.xlu0 %1523
        %1525 = vadd.xlane.f32.xlu0 %v1481
        %v1526 = vpop.xlane.xlu0 %1525
        %1527 = vadd.xlane.f32.xlu0 %v1482
        %v1528 = vpop.xlane.xlu0 %1527
        %1529 = vadd.xlane.f32.xlu0 %v1483
        %v1530 = vpop.xlane.xlu0 %1529
        %1531 = vadd.xlane.f32.xlu0 %v1484
        %v1532 = vpop.xlane.xlu0 %1531
        %1533 = vadd.xlane.f32.xlu0 %v1485
        %v1534 = vpop.xlane.xlu0 %1533
        %1535 = vadd.xlane.f32.xlu0 %v1486
        %v1536 = vpop.xlane.xlu0 %1535
        %1537 = vadd.xlane.f32.xlu0 %v1487
        %v1538 = vpop.xlane.xlu0 %1537
        %1539 = vadd.xlane.f32.xlu0 %v1488
        %v1540 = vpop.xlane.xlu0 %1539
        %1541 = vadd.xlane.f32.xlu0 %v1489
        %v1542 = vpop.xlane.xlu0 %1541
        %1543 = vadd.xlane.f32.xlu0 %v1490
        %v1544 = vpop.xlane.xlu0 %1543
        %1545 = vadd.xlane.f32.xlu0 %v1491
        %v1546 = vpop.xlane.xlu0 %1545
        %1547 = vadd.xlane.f32.xlu0 %v1492
        %v1548 = vpop.xlane.xlu0 %1547
        %1549 = vadd.xlane.f32.xlu0 %v1493
        %v1550 = vpop.xlane.xlu0 %1549
        %1551 = vadd.xlane.f32.xlu0 %v1494
        %v1552 = vpop.xlane.xlu0 %1551
        %1553 = vadd.xlane.f32.xlu0 %v1495
        %v1554 = vpop.xlane.xlu0 %1553
        %1555 = vadd.xlane.f32.xlu0 %v1496
        %v1556 = vpop.xlane.xlu0 %1555
        %1557 = vadd.xlane.f32.xlu0 %v1497
        %v1558 = vpop.xlane.xlu0 %1557
        %1559 = vadd.xlane.f32.xlu0 %v1498
        %v1560 = vpop.xlane.xlu0 %1559
        %1561 = vadd.xlane.f32.xlu0 %v1499
        %v1562 = vpop.xlane.xlu0 %1561
        %1563 = vadd.xlane.f32.xlu0 %v1500
        %v1564 = vpop.xlane.xlu0 %1563
        %1565 = vadd.xlane.f32.xlu0 %v1501
        %v1566 = vpop.xlane.xlu0 %1565
        %v1567 = vsel %vm1366, %v1502, 0.0
        %1568 = vadd.xlane.f32.xlu0 %v1567
        %v1569 = vpop.xlane.xlu0 %1568
        %v1570 = vmul.f32 %v1504, 0.03125
        %v1571 = vmul.f32 %v1506, 0.03125
        %v1572 = vmul.f32 %v1508, 0.03125
        %v1573 = vmul.f32 %v1510, 0.03125
        %v1574 = vmul.f32 %v1512, 0.03125
        %v1575 = vmul.f32 %v1514, 0.03125
        %v1576 = vmul.f32 %v1516, 0.03125
        %v1577 = vmul.f32 %v1518, 0.03125
        %v1578 = vmul.f32 %v1520, 0.03125
        %v1579 = vmul.f32 %v1522, 0.03125
        %v1580 = vmul.f32 %v1524, 0.03125
        %v1581 = vmul.f32 %v1526, 0.03125
        %v1582 = vmul.f32 %v1528, 0.03125
        %v1583 = vmul.f32 %v1530, 0.03125
        %v1584 = vmul.f32 %v1532, 0.03125
        %v1585 = vmul.f32 %v1534, 0.03125
        %v1586 = vmul.f32 %v1536, 0.03125
        %v1587 = vmul.f32 %v1538, 0.03125
        %v1588 = vmul.f32 %v1540, 0.03125
        %v1589 = vmul.f32 %v1542, 0.03125
        %v1590 = vmul.f32 %v1544, 0.03125
        %v1591 = vmul.f32 %v1546, 0.03125
        %v1592 = vmul.f32 %v1548, 0.03125
        %v1593 = vmul.f32 %v1550, 0.03125
        %v1594 = vmul.f32 %v1552, 0.03125
        %v1595 = vmul.f32 %v1554, 0.03125
        %v1596 = vmul.f32 %v1556, 0.03125
        %v1597 = vmul.f32 %v1558, 0.03125
        %v1598 = vmul.f32 %v1560, 0.03125
        %v1599 = vmul.f32 %v1562, 0.03125
        %v1600 = vmul.f32 %v1564, 0.03125
        %v1601 = vmul.f32 %v1566, 0.03125
        %v1602 = vmul.f32 %v1569, 0.03125
        %v1603 = vadd.f32 %v1570, 1e-05
        %v1604 = vadd.f32 %v1571, 1e-05
        %v1605 = vadd.f32 %v1572, 1e-05
        %v1606 = vadd.f32 %v1573, 1e-05
        %v1607 = vadd.f32 %v1574, 1e-05
        %v1608 = vadd.f32 %v1575, 1e-05
        %v1609 = vadd.f32 %v1576, 1e-05
        %v1610 = vadd.f32 %v1577, 1e-05
        %v1611 = vadd.f32 %v1578, 1e-05
        %v1612 = vadd.f32 %v1579, 1e-05
        %v1613 = vadd.f32 %v1580, 1e-05
        %v1614 = vadd.f32 %v1581, 1e-05
        %v1615 = vadd.f32 %v1582, 1e-05
        %v1616 = vadd.f32 %v1583, 1e-05
        %v1617 = vadd.f32 %v1584, 1e-05
        %v1618 = vadd.f32 %v1585, 1e-05
        %v1619 = vadd.f32 %v1586, 1e-05
        %v1620 = vadd.f32 %v1587, 1e-05
        %v1621 = vadd.f32 %v1588, 1e-05
        %v1622 = vadd.f32 %v1589, 1e-05
        %v1623 = vadd.f32 %v1590, 1e-05
        %v1624 = vadd.f32 %v1591, 1e-05
        %v1625 = vadd.f32 %v1592, 1e-05
        %v1626 = vadd.f32 %v1593, 1e-05
        %v1627 = vadd.f32 %v1594, 1e-05
        %v1628 = vadd.f32 %v1595, 1e-05
        %v1629 = vadd.f32 %v1596, 1e-05
        %v1630 = vadd.f32 %v1597, 1e-05
        %v1631 = vadd.f32 %v1598, 1e-05
        %v1632 = vadd.f32 %v1599, 1e-05
        %v1633 = vadd.f32 %v1600, 1e-05
        %v1634 = vadd.f32 %v1601, 1e-05
        %v1635 = vadd.f32 %v1602, 1e-05
        %v1636 = vrsqrt.pop %v1603
        %v1637 = vmul.f32 %v1636, %v1603
        %v1638 = vmul.f32 %v1637, %v1636
        %v1639 = vmul.f32 0.5, %v1638
        %v1640 = vsub.f32 1.5, %v1639
        %v1641 = vmul.f32 %v1636, %v1640
        %vm1642 = vweird.f32 %v1603
        %vm1643 = vweird.f32 %v1636
        %vm1644 = vmor %vm1642, %vm1643
        %v1645 = vsel %vm1644, %v1636, %v1641
        %v1646 = vrsqrt.pop %v1604
        %v1647 = vmul.f32 %v1646, %v1604
        %v1648 = vmul.f32 %v1647, %v1646
        %v1649 = vmul.f32 0.5, %v1648
        %v1650 = vsub.f32 1.5, %v1649
        %v1651 = vmul.f32 %v1646, %v1650
        %vm1652 = vweird.f32 %v1604
        %vm1653 = vweird.f32 %v1646
        %vm1654 = vmor %vm1652, %vm1653
        %v1655 = vsel %vm1654, %v1646, %v1651
        %v1656 = vrsqrt.pop %v1605
        %v1657 = vmul.f32 %v1656, %v1605
        %v1658 = vmul.f32 %v1657, %v1656
        %v1659 = vmul.f32 0.5, %v1658
        %v1660 = vsub.f32 1.5, %v1659
        %v1661 = vmul.f32 %v1656, %v1660
        %vm1662 = vweird.f32 %v1605
        %vm1663 = vweird.f32 %v1656
        %vm1664 = vmor %vm1662, %vm1663
        %v1665 = vsel %vm1664, %v1656, %v1661
        %v1666 = vrsqrt.pop %v1606
        %v1667 = vmul.f32 %v1666, %v1606
        %v1668 = vmul.f32 %v1667, %v1666
        %v1669 = vmul.f32 0.5, %v1668
        %v1670 = vsub.f32 1.5, %v1669
        %v1671 = vmul.f32 %v1666, %v1670
        %vm1672 = vweird.f32 %v1606
        %vm1673 = vweird.f32 %v1666
        %vm1674 = vmor %vm1672, %vm1673
        %v1675 = vsel %vm1674, %v1666, %v1671
        %v1676 = vrsqrt.pop %v1607
        %v1677 = vmul.f32 %v1676, %v1607
        %v1678 = vmul.f32 %v1677, %v1676
        %v1679 = vmul.f32 0.5, %v1678
        %v1680 = vsub.f32 1.5, %v1679
        %v1681 = vmul.f32 %v1676, %v1680
        %vm1682 = vweird.f32 %v1607
        %vm1683 = vweird.f32 %v1676
        %vm1684 = vmor %vm1682, %vm1683
        %v1685 = vsel %vm1684, %v1676, %v1681
        %v1686 = vrsqrt.pop %v1608
        %v1687 = vmul.f32 %v1686, %v1608
        %v1688 = vmul.f32 %v1687, %v1686
        %v1689 = vmul.f32 0.5, %v1688
        %v1690 = vsub.f32 1.5, %v1689
        %v1691 = vmul.f32 %v1686, %v1690
        %vm1692 = vweird.f32 %v1608
        %vm1693 = vweird.f32 %v1686
        %vm1694 = vmor %vm1692, %vm1693
        %v1695 = vsel %vm1694, %v1686, %v1691
        %v1696 = vrsqrt.pop %v1609
        %v1697 = vmul.f32 %v1696, %v1609
        %v1698 = vmul.f32 %v1697, %v1696
        %v1699 = vmul.f32 0.5, %v1698
        %v1700 = vsub.f32 1.5, %v1699
        %v1701 = vmul.f32 %v1696, %v1700
        %vm1702 = vweird.f32 %v1609
        %vm1703 = vweird.f32 %v1696
        %vm1704 = vmor %vm1702, %vm1703
        %v1705 = vsel %vm1704, %v1696, %v1701
        %v1706 = vrsqrt.pop %v1610
        %v1707 = vmul.f32 %v1706, %v1610
        %v1708 = vmul.f32 %v1707, %v1706
        %v1709 = vmul.f32 0.5, %v1708
        %v1710 = vsub.f32 1.5, %v1709
        %v1711 = vmul.f32 %v1706, %v1710
        %vm1712 = vweird.f32 %v1610
        %vm1713 = vweird.f32 %v1706
        %vm1714 = vmor %vm1712, %vm1713
        %v1715 = vsel %vm1714, %v1706, %v1711
        %v1716 = vrsqrt.pop %v1611
        %v1717 = vmul.f32 %v1716, %v1611
        %v1718 = vmul.f32 %v1717, %v1716
        %v1719 = vmul.f32 0.5, %v1718
        %v1720 = vsub.f32 1.5, %v1719
        %v1721 = vmul.f32 %v1716, %v1720
        %vm1722 = vweird.f32 %v1611
        %vm1723 = vweird.f32 %v1716
        %vm1724 = vmor %vm1722, %vm1723
        %v1725 = vsel %vm1724, %v1716, %v1721
        %v1726 = vrsqrt.pop %v1612
        %v1727 = vmul.f32 %v1726, %v1612
        %v1728 = vmul.f32 %v1727, %v1726
        %v1729 = vmul.f32 0.5, %v1728
        %v1730 = vsub.f32 1.5, %v1729
        %v1731 = vmul.f32 %v1726, %v1730
        %vm1732 = vweird.f32 %v1612
        %vm1733 = vweird.f32 %v1726
        %vm1734 = vmor %vm1732, %vm1733
        %v1735 = vsel %vm1734, %v1726, %v1731
        %v1736 = vrsqrt.pop %v1613
        %v1737 = vmul.f32 %v1736, %v1613
        %v1738 = vmul.f32 %v1737, %v1736
        %v1739 = vmul.f32 0.5, %v1738
        %v1740 = vsub.f32 1.5, %v1739
        %v1741 = vmul.f32 %v1736, %v1740
        %vm1742 = vweird.f32 %v1613
        %vm1743 = vweird.f32 %v1736
        %vm1744 = vmor %vm1742, %vm1743
        %v1745 = vsel %vm1744, %v1736, %v1741
        %v1746 = vrsqrt.pop %v1614
        %v1747 = vmul.f32 %v1746, %v1614
        %v1748 = vmul.f32 %v1747, %v1746
        %v1749 = vmul.f32 0.5, %v1748
        %v1750 = vsub.f32 1.5, %v1749
        %v1751 = vmul.f32 %v1746, %v1750
        %vm1752 = vweird.f32 %v1614
        %vm1753 = vweird.f32 %v1746
        %vm1754 = vmor %vm1752, %vm1753
        %v1755 = vsel %vm1754, %v1746, %v1751
        %v1756 = vrsqrt.pop %v1615
        %v1757 = vmul.f32 %v1756, %v1615
        %v1758 = vmul.f32 %v1757, %v1756
        %v1759 = vmul.f32 0.5, %v1758
        %v1760 = vsub.f32 1.5, %v1759
        %v1761 = vmul.f32 %v1756, %v1760
        %vm1762 = vweird.f32 %v1615
        %vm1763 = vweird.f32 %v1756
        %vm1764 = vmor %vm1762, %vm1763
        %v1765 = vsel %vm1764, %v1756, %v1761
        %v1766 = vrsqrt.pop %v1616
        %v1767 = vmul.f32 %v1766, %v1616
        %v1768 = vmul.f32 %v1767, %v1766
        %v1769 = vmul.f32 0.5, %v1768
        %v1770 = vsub.f32 1.5, %v1769
        %v1771 = vmul.f32 %v1766, %v1770
        %vm1772 = vweird.f32 %v1616
        %vm1773 = vweird.f32 %v1766
        %vm1774 = vmor %vm1772, %vm1773
        %v1775 = vsel %vm1774, %v1766, %v1771
        %v1776 = vrsqrt.pop %v1617
        %v1777 = vmul.f32 %v1776, %v1617
        %v1778 = vmul.f32 %v1777, %v1776
        %v1779 = vmul.f32 0.5, %v1778
        %v1780 = vsub.f32 1.5, %v1779
        %v1781 = vmul.f32 %v1776, %v1780
        %vm1782 = vweird.f32 %v1617
        %vm1783 = vweird.f32 %v1776
        %vm1784 = vmor %vm1782, %vm1783
        %v1785 = vsel %vm1784, %v1776, %v1781
        %v1786 = vrsqrt.pop %v1618
        %v1787 = vmul.f32 %v1786, %v1618
        %v1788 = vmul.f32 %v1787, %v1786
        %v1789 = vmul.f32 0.5, %v1788
        %v1790 = vsub.f32 1.5, %v1789
        %v1791 = vmul.f32 %v1786, %v1790
        %vm1792 = vweird.f32 %v1618
        %vm1793 = vweird.f32 %v1786
        %vm1794 = vmor %vm1792, %vm1793
        %v1795 = vsel %vm1794, %v1786, %v1791
        %v1796 = vrsqrt.pop %v1619
        %v1797 = vmul.f32 %v1796, %v1619
        %v1798 = vmul.f32 %v1797, %v1796
        %v1799 = vmul.f32 0.5, %v1798
        %v1800 = vsub.f32 1.5, %v1799
        %v1801 = vmul.f32 %v1796, %v1800
        %vm1802 = vweird.f32 %v1619
        %vm1803 = vweird.f32 %v1796
        %vm1804 = vmor %vm1802, %vm1803
        %v1805 = vsel %vm1804, %v1796, %v1801
        %v1806 = vrsqrt.pop %v1620
        %v1807 = vmul.f32 %v1806, %v1620
        %v1808 = vmul.f32 %v1807, %v1806
        %v1809 = vmul.f32 0.5, %v1808
        %v1810 = vsub.f32 1.5, %v1809
        %v1811 = vmul.f32 %v1806, %v1810
        %vm1812 = vweird.f32 %v1620
        %vm1813 = vweird.f32 %v1806
        %vm1814 = vmor %vm1812, %vm1813
        %v1815 = vsel %vm1814, %v1806, %v1811
        %v1816 = vrsqrt.pop %v1621
        %v1817 = vmul.f32 %v1816, %v1621
        %v1818 = vmul.f32 %v1817, %v1816
        %v1819 = vmul.f32 0.5, %v1818
        %v1820 = vsub.f32 1.5, %v1819
        %v1821 = vmul.f32 %v1816, %v1820
        %vm1822 = vweird.f32 %v1621
        %vm1823 = vweird.f32 %v1816
        %vm1824 = vmor %vm1822, %vm1823
        %v1825 = vsel %vm1824, %v1816, %v1821
        %v1826 = vrsqrt.pop %v1622
        %v1827 = vmul.f32 %v1826, %v1622
        %v1828 = vmul.f32 %v1827, %v1826
        %v1829 = vmul.f32 0.5, %v1828
        %v1830 = vsub.f32 1.5, %v1829
        %v1831 = vmul.f32 %v1826, %v1830
        %vm1832 = vweird.f32 %v1622
        %vm1833 = vweird.f32 %v1826
        %vm1834 = vmor %vm1832, %vm1833
        %v1835 = vsel %vm1834, %v1826, %v1831
        %v1836 = vrsqrt.pop %v1623
        %v1837 = vmul.f32 %v1836, %v1623
        %v1838 = vmul.f32 %v1837, %v1836
        %v1839 = vmul.f32 0.5, %v1838
        %v1840 = vsub.f32 1.5, %v1839
        %v1841 = vmul.f32 %v1836, %v1840
        %vm1842 = vweird.f32 %v1623
        %vm1843 = vweird.f32 %v1836
        %vm1844 = vmor %vm1842, %vm1843
        %v1845 = vsel %vm1844, %v1836, %v1841
        %v1846 = vrsqrt.pop %v1624
        %v1847 = vmul.f32 %v1846, %v1624
        %v1848 = vmul.f32 %v1847, %v1846
        %v1849 = vmul.f32 0.5, %v1848
        %v1850 = vsub.f32 1.5, %v1849
        %v1851 = vmul.f32 %v1846, %v1850
        %vm1852 = vweird.f32 %v1624
        %vm1853 = vweird.f32 %v1846
        %vm1854 = vmor %vm1852, %vm1853
        %v1855 = vsel %vm1854, %v1846, %v1851
        %v1856 = vrsqrt.pop %v1625
        %v1857 = vmul.f32 %v1856, %v1625
        %v1858 = vmul.f32 %v1857, %v1856
        %v1859 = vmul.f32 0.5, %v1858
        %v1860 = vsub.f32 1.5, %v1859
        %v1861 = vmul.f32 %v1856, %v1860
        %vm1862 = vweird.f32 %v1625
        %vm1863 = vweird.f32 %v1856
        %vm1864 = vmor %vm1862, %vm1863
        %v1865 = vsel %vm1864, %v1856, %v1861
        %v1866 = vrsqrt.pop %v1626
        %v1867 = vmul.f32 %v1866, %v1626
        %v1868 = vmul.f32 %v1867, %v1866
        %v1869 = vmul.f32 0.5, %v1868
        %v1870 = vsub.f32 1.5, %v1869
        %v1871 = vmul.f32 %v1866, %v1870
        %vm1872 = vweird.f32 %v1626
        %vm1873 = vweird.f32 %v1866
        %vm1874 = vmor %vm1872, %vm1873
        %v1875 = vsel %vm1874, %v1866, %v1871
        %v1876 = vrsqrt.pop %v1627
        %v1877 = vmul.f32 %v1876, %v1627
        %v1878 = vmul.f32 %v1877, %v1876
        %v1879 = vmul.f32 0.5, %v1878
        %v1880 = vsub.f32 1.5, %v1879
        %v1881 = vmul.f32 %v1876, %v1880
        %vm1882 = vweird.f32 %v1627
        %vm1883 = vweird.f32 %v1876
        %vm1884 = vmor %vm1882, %vm1883
        %v1885 = vsel %vm1884, %v1876, %v1881
        %v1886 = vrsqrt.pop %v1628
        %v1887 = vmul.f32 %v1886, %v1628
        %v1888 = vmul.f32 %v1887, %v1886
        %v1889 = vmul.f32 0.5, %v1888
        %v1890 = vsub.f32 1.5, %v1889
        %v1891 = vmul.f32 %v1886, %v1890
        %vm1892 = vweird.f32 %v1628
        %vm1893 = vweird.f32 %v1886
        %vm1894 = vmor %vm1892, %vm1893
        %v1895 = vsel %vm1894, %v1886, %v1891
        %v1896 = vrsqrt.pop %v1629
        %v1897 = vmul.f32 %v1896, %v1629
        %v1898 = vmul.f32 %v1897, %v1896
        %v1899 = vmul.f32 0.5, %v1898
        %v1900 = vsub.f32 1.5, %v1899
        %v1901 = vmul.f32 %v1896, %v1900
        %vm1902 = vweird.f32 %v1629
        %vm1903 = vweird.f32 %v1896
        %vm1904 = vmor %vm1902, %vm1903
        %v1905 = vsel %vm1904, %v1896, %v1901
        %v1906 = vrsqrt.pop %v1630
        %v1907 = vmul.f32 %v1906, %v1630
        %v1908 = vmul.f32 %v1907, %v1906
        %v1909 = vmul.f32 0.5, %v1908
        %v1910 = vsub.f32 1.5, %v1909
        %v1911 = vmul.f32 %v1906, %v1910
        %vm1912 = vweird.f32 %v1630
        %vm1913 = vweird.f32 %v1906
        %vm1914 = vmor %vm1912, %vm1913
        %v1915 = vsel %vm1914, %v1906, %v1911
        %v1916 = vrsqrt.pop %v1631
        %v1917 = vmul.f32 %v1916, %v1631
        %v1918 = vmul.f32 %v1917, %v1916
        %v1919 = vmul.f32 0.5, %v1918
        %v1920 = vsub.f32 1.5, %v1919
        %v1921 = vmul.f32 %v1916, %v1920
        %vm1922 = vweird.f32 %v1631
        %vm1923 = vweird.f32 %v1916
        %vm1924 = vmor %vm1922, %vm1923
        %v1925 = vsel %vm1924, %v1916, %v1921
        %v1926 = vrsqrt.pop %v1632
        %v1927 = vmul.f32 %v1926, %v1632
        %v1928 = vmul.f32 %v1927, %v1926
        %v1929 = vmul.f32 0.5, %v1928
        %v1930 = vsub.f32 1.5, %v1929
        %v1931 = vmul.f32 %v1926, %v1930
        %vm1932 = vweird.f32 %v1632
        %vm1933 = vweird.f32 %v1926
        %vm1934 = vmor %vm1932, %vm1933
        %v1935 = vsel %vm1934, %v1926, %v1931
        %v1936 = vrsqrt.pop %v1633
        %v1937 = vmul.f32 %v1936, %v1633
        %v1938 = vmul.f32 %v1937, %v1936
        %v1939 = vmul.f32 0.5, %v1938
        %v1940 = vsub.f32 1.5, %v1939
        %v1941 = vmul.f32 %v1936, %v1940
        %vm1942 = vweird.f32 %v1633
        %vm1943 = vweird.f32 %v1936
        %vm1944 = vmor %vm1942, %vm1943
        %v1945 = vsel %vm1944, %v1936, %v1941
        %v1946 = vrsqrt.pop %v1634
        %v1947 = vmul.f32 %v1946, %v1634
        %v1948 = vmul.f32 %v1947, %v1946
        %v1949 = vmul.f32 0.5, %v1948
        %v1950 = vsub.f32 1.5, %v1949
        %v1951 = vmul.f32 %v1946, %v1950
        %vm1952 = vweird.f32 %v1634
        %vm1953 = vweird.f32 %v1946
        %vm1954 = vmor %vm1952, %vm1953
        %v1955 = vsel %vm1954, %v1946, %v1951
        %v1956 = vrsqrt.pop %v1635
        %v1957 = vmul.f32 %v1956, %v1635
        %v1958 = vmul.f32 %v1957, %v1956
        %v1959 = vmul.f32 0.5, %v1958
        %v1960 = vsub.f32 1.5, %v1959
        %v1961 = vmul.f32 %v1956, %v1960
        %vm1962 = vweird.f32 %v1635
        %vm1963 = vweird.f32 %v1956
        %vm1964 = vmor %vm1962, %vm1963
        %v1965 = vsel %vm1964, %v1956, %v1961
        %v1966 = vmul.f32 %v1437, %v1645
        %v1967 = vmul.f32 %v1438, %v1655
        %v1968 = vmul.f32 %v1439, %v1665
        %v1969 = vmul.f32 %v1440, %v1675
        %v1970 = vmul.f32 %v1441, %v1685
        %v1971 = vmul.f32 %v1442, %v1695
        %v1972 = vmul.f32 %v1443, %v1705
        %v1973 = vmul.f32 %v1444, %v1715
        %v1974 = vmul.f32 %v1445, %v1725
        %v1975 = vmul.f32 %v1446, %v1735
        %v1976 = vmul.f32 %v1447, %v1745
        %v1977 = vmul.f32 %v1448, %v1755
        %v1978 = vmul.f32 %v1449, %v1765
        %v1979 = vmul.f32 %v1450, %v1775
        %v1980 = vmul.f32 %v1451, %v1785
        %v1981 = vmul.f32 %v1452, %v1795
        %v1982 = vmul.f32 %v1453, %v1805
        %v1983 = vmul.f32 %v1454, %v1815
        %v1984 = vmul.f32 %v1455, %v1825
        %v1985 = vmul.f32 %v1456, %v1835
        %v1986 = vmul.f32 %v1457, %v1845
        %v1987 = vmul.f32 %v1458, %v1855
        %v1988 = vmul.f32 %v1459, %v1865
        %v1989 = vmul.f32 %v1460, %v1875
        %v1990 = vmul.f32 %v1461, %v1885
        %v1991 = vmul.f32 %v1462, %v1895
        %v1992 = vmul.f32 %v1463, %v1905
        %v1993 = vmul.f32 %v1464, %v1915
        %v1994 = vmul.f32 %v1465, %v1925
        %v1995 = vmul.f32 %v1466, %v1935
        %v1996 = vmul.f32 %v1467, %v1945
        %v1997 = vmul.f32 %v1468, %v1955
        %v1998 = vmul.f32 %v1469, %v1965
        %v1999 = vperm.slane %v266, 0
        %v2000 = vmul.f32 %v1966, %v1999
        %v2001 = vmul.f32 %v1967, %v1999
        %v2002 = vmul.f32 %v1968, %v1999
        %v2003 = vmul.f32 %v1969, %v1999
        %v2004 = vmul.f32 %v1970, %v1999
        %v2005 = vmul.f32 %v1971, %v1999
        %v2006 = vmul.f32 %v1972, %v1999
        %v2007 = vmul.f32 %v1973, %v1999
        %v2008 = vmul.f32 %v1974, %v1999
        %v2009 = vmul.f32 %v1975, %v1999
        %v2010 = vmul.f32 %v1976, %v1999
        %v2011 = vmul.f32 %v1977, %v1999
        %v2012 = vmul.f32 %v1978, %v1999
        %v2013 = vmul.f32 %v1979, %v1999
        %v2014 = vmul.f32 %v1980, %v1999
        %v2015 = vmul.f32 %v1981, %v1999
        %v2016 = vmul.f32 %v1982, %v1999
        %v2017 = vmul.f32 %v1983, %v1999
        %v2018 = vmul.f32 %v1984, %v1999
        %v2019 = vmul.f32 %v1985, %v1999
        %v2020 = vmul.f32 %v1986, %v1999
        %v2021 = vmul.f32 %v1987, %v1999
        %v2022 = vmul.f32 %v1988, %v1999
        %v2023 = vmul.f32 %v1989, %v1999
        %v2024 = vmul.f32 %v1990, %v1999
        %v2025 = vmul.f32 %v1991, %v1999
        %v2026 = vmul.f32 %v1992, %v1999
        %v2027 = vmul.f32 %v1993, %v1999
        %v2028 = vmul.f32 %v1994, %v1999
        %v2029 = vmul.f32 %v1995, %v1999
        %v2030 = vmul.f32 %v1996, %v1999
        %v2031 = vmul.f32 %v1997, %v1999
        %v2032 = vmul.f32 %v1998, %v1999
        %v2033 = vperm.slane %v267, 0
        %v2034 = vadd.f32 %v2000, %v2033
        %v2035 = vadd.f32 %v2001, %v2033
        %v2036 = vadd.f32 %v2002, %v2033
        %v2037 = vadd.f32 %v2003, %v2033
        %v2038 = vadd.f32 %v2004, %v2033
        %v2039 = vadd.f32 %v2005, %v2033
        %v2040 = vadd.f32 %v2006, %v2033
        %v2041 = vadd.f32 %v2007, %v2033
        %v2042 = vadd.f32 %v2008, %v2033
        %v2043 = vadd.f32 %v2009, %v2033
        %v2044 = vadd.f32 %v2010, %v2033
        %v2045 = vadd.f32 %v2011, %v2033
        %v2046 = vadd.f32 %v2012, %v2033
        %v2047 = vadd.f32 %v2013, %v2033
        %v2048 = vadd.f32 %v2014, %v2033
        %v2049 = vadd.f32 %v2015, %v2033
        %v2050 = vadd.f32 %v2016, %v2033
        %v2051 = vadd.f32 %v2017, %v2033
        %v2052 = vadd.f32 %v2018, %v2033
        %v2053 = vadd.f32 %v2019, %v2033
        %v2054 = vadd.f32 %v2020, %v2033
        %v2055 = vadd.f32 %v2021, %v2033
        %v2056 = vadd.f32 %v2022, %v2033
        %v2057 = vadd.f32 %v2023, %v2033
        %v2058 = vadd.f32 %v2024, %v2033
        %v2059 = vadd.f32 %v2025, %v2033
        %v2060 = vadd.f32 %v2026, %v2033
        %v2061 = vadd.f32 %v2027, %v2033
        %v2062 = vadd.f32 %v2028, %v2033
        %v2063 = vadd.f32 %v2029, %v2033
        %v2064 = vadd.f32 %v2030, %v2033
        %v2065 = vadd.f32 %v2031, %v2033
        %v2066 = vadd.f32 %v2032, %v2033
        %s2067 = ssub.s32 %s264, 1
        %v2068 = vstv %s2067
        %v2069 = vadd.s32 %v307, %v2068
        %v2070 = vadd.s32 %v308, %v2068
        %v2071 = vadd.s32 %v309, %v2068
        %v2072 = vadd.s32 %v310, %v2068
        %v2073 = vadd.s32 %v311, %v2068
        %v2074 = vadd.s32 %v312, %v2068
        %v2075 = vadd.s32 %v313, %v2068
        %v2076 = vadd.s32 %v314, %v2068
        %v2077 = vadd.s32 %v315, %v2068
        %v2078 = vadd.s32 %v316, %v2068
        %v2079 = vadd.s32 %v317, %v2068
        %v2080 = vadd.s32 %v318, %v2068
        %v2081 = vadd.s32 %v319, %v2068
        %v2082 = vadd.s32 %v320, %v2068
        %v2083 = vadd.s32 %v321, %v2068
        %v2084 = vadd.s32 %v322, %v2068
        %v2085 = vadd.s32 %v323, %v2068
        %v2086 = vadd.s32 %v324, %v2068
        %v2087 = vadd.s32 %v325, %v2068
        %v2088 = vadd.s32 %v326, %v2068
        %v2089 = vadd.s32 %v327, %v2068
        %v2090 = vadd.s32 %v328, %v2068
        %v2091 = vadd.s32 %v329, %v2068
        %v2092 = vadd.s32 %v330, %v2068
        %v2093 = vadd.s32 %v331, %v2068
        %v2094 = vadd.s32 %v332, %v2068
        %v2095 = vadd.s32 %v333, %v2068
        %v2096 = vadd.s32 %v334, %v2068
        %v2097 = vadd.s32 %v335, %v2068
        %v2098 = vadd.s32 %v336, %v2068
        %v2099 = vadd.s32 %v337, %v2068
        %v2100 = vadd.s32 %v338, %v2068
        %v2101 = vadd.s32 %v339, %v2068
        %vm2102 = vcmp.ge.s32.totalorder %v2069, 0
        %vm2103 = vcmp.ge.s32.totalorder %v2070, 0
        %vm2104 = vcmp.ge.s32.totalorder %v2071, 0
        %vm2105 = vcmp.ge.s32.totalorder %v2072, 0
        %vm2106 = vcmp.ge.s32.totalorder %v2073, 0
        %vm2107 = vcmp.ge.s32.totalorder %v2074, 0
        %vm2108 = vcmp.ge.s32.totalorder %v2075, 0
        %vm2109 = vcmp.ge.s32.totalorder %v2076, 0
        %vm2110 = vcmp.ge.s32.totalorder %v2077, 0
        %vm2111 = vcmp.ge.s32.totalorder %v2078, 0
        %vm2112 = vcmp.ge.s32.totalorder %v2079, 0
        %vm2113 = vcmp.ge.s32.totalorder %v2080, 0
        %vm2114 = vcmp.ge.s32.totalorder %v2081, 0
        %vm2115 = vcmp.ge.s32.totalorder %v2082, 0
        %vm2116 = vcmp.ge.s32.totalorder %v2083, 0
        %vm2117 = vcmp.ge.s32.totalorder %v2084, 0
        %vm2118 = vcmp.ge.s32.totalorder %v2085, 0
        %vm2119 = vcmp.ge.s32.totalorder %v2086, 0
        %vm2120 = vcmp.ge.s32.totalorder %v2087, 0
        %vm2121 = vcmp.ge.s32.totalorder %v2088, 0
        %vm2122 = vcmp.ge.s32.totalorder %v2089, 0
        %vm2123 = vcmp.ge.s32.totalorder %v2090, 0
        %vm2124 = vcmp.ge.s32.totalorder %v2091, 0
        %vm2125 = vcmp.ge.s32.totalorder %v2092, 0
        %vm2126 = vcmp.ge.s32.totalorder %v2093, 0
        %vm2127 = vcmp.ge.s32.totalorder %v2094, 0
        %vm2128 = vcmp.ge.s32.totalorder %v2095, 0
        %vm2129 = vcmp.ge.s32.totalorder %v2096, 0
        %vm2130 = vcmp.ge.s32.totalorder %v2097, 0
        %vm2131 = vcmp.ge.s32.totalorder %v2098, 0
        %vm2132 = vcmp.ge.s32.totalorder %v2099, 0
        %vm2133 = vcmp.ge.s32.totalorder %v2100, 0
        %vm2134 = vcmp.ge.s32.totalorder %v2101, 0
        %vm2135 = vcmp.lt.s32.totalorder %v2069, %v407
        %vm2136 = vcmp.lt.s32.totalorder %v2070, %v407
        %vm2137 = vcmp.lt.s32.totalorder %v2071, %v407
        %vm2138 = vcmp.lt.s32.totalorder %v2072, %v407
        %vm2139 = vcmp.lt.s32.totalorder %v2073, %v407
        %vm2140 = vcmp.lt.s32.totalorder %v2074, %v407
        %vm2141 = vcmp.lt.s32.totalorder %v2075, %v407
        %vm2142 = vcmp.lt.s32.totalorder %v2076, %v407
        %vm2143 = vcmp.lt.s32.totalorder %v2077, %v407
        %vm2144 = vcmp.lt.s32.totalorder %v2078, %v407
        %vm2145 = vcmp.lt.s32.totalorder %v2079, %v407
        %vm2146 = vcmp.lt.s32.totalorder %v2080, %v407
        %vm2147 = vcmp.lt.s32.totalorder %v2081, %v407
        %vm2148 = vcmp.lt.s32.totalorder %v2082, %v407
        %vm2149 = vcmp.lt.s32.totalorder %v2083, %v407
        %vm2150 = vcmp.lt.s32.totalorder %v2084, %v407
        %vm2151 = vcmp.lt.s32.totalorder %v2085, %v407
        %vm2152 = vcmp.lt.s32.totalorder %v2086, %v407
        %vm2153 = vcmp.lt.s32.totalorder %v2087, %v407
        %vm2154 = vcmp.lt.s32.totalorder %v2088, %v407
        %vm2155 = vcmp.lt.s32.totalorder %v2089, %v407
        %vm2156 = vcmp.lt.s32.totalorder %v2090, %v407
        %vm2157 = vcmp.lt.s32.totalorder %v2091, %v407
        %vm2158 = vcmp.lt.s32.totalorder %v2092, %v407
        %vm2159 = vcmp.lt.s32.totalorder %v2093, %v407
        %vm2160 = vcmp.lt.s32.totalorder %v2094, %v407
        %vm2161 = vcmp.lt.s32.totalorder %v2095, %v407
        %vm2162 = vcmp.lt.s32.totalorder %v2096, %v407
        %vm2163 = vcmp.lt.s32.totalorder %v2097, %v407
        %vm2164 = vcmp.lt.s32.totalorder %v2098, %v407
        %vm2165 = vcmp.lt.s32.totalorder %v2099, %v407
        %vm2166 = vcmp.lt.s32.totalorder %v2100, %v407
        %vm2167 = vcmp.lt.s32.totalorder %v2101, %v407
        %vm2168 = vmand %vm2102, %vm2135
        %vm2169 = vmand %vm2103, %vm2136
        %vm2170 = vmand %vm2104, %vm2137
        %vm2171 = vmand %vm2105, %vm2138
        %vm2172 = vmand %vm2106, %vm2139
        %vm2173 = vmand %vm2107, %vm2140
        %vm2174 = vmand %vm2108, %vm2141
        %vm2175 = vmand %vm2109, %vm2142
        %vm2176 = vmand %vm2110, %vm2143
        %vm2177 = vmand %vm2111, %vm2144
        %vm2178 = vmand %vm2112, %vm2145
        %vm2179 = vmand %vm2113, %vm2146
        %vm2180 = vmand %vm2114, %vm2147
        %vm2181 = vmand %vm2115, %vm2148
        %vm2182 = vmand %vm2116, %vm2149
        %vm2183 = vmand %vm2117, %vm2150
        %vm2184 = vmand %vm2118, %vm2151
        %vm2185 = vmand %vm2119, %vm2152
        %vm2186 = vmand %vm2120, %vm2153
        %vm2187 = vmand %vm2121, %vm2154
        %vm2188 = vmand %vm2122, %vm2155
        %vm2189 = vmand %vm2123, %vm2156
        %vm2190 = vmand %vm2124, %vm2157
        %vm2191 = vmand %vm2125, %vm2158
        %vm2192 = vmand %vm2126, %vm2159
        %vm2193 = vmand %vm2127, %vm2160
        %vm2194 = vmand %vm2128, %vm2161
        %vm2195 = vmand %vm2129, %vm2162
        %vm2196 = vmand %vm2130, %vm2163
        %vm2197 = vmand %vm2131, %vm2164
        %vm2198 = vmand %vm2132, %vm2165
        %vm2199 = vmand %vm2133, %vm2166
        %vm2200 = vmand %vm2134, %vm2167
        %v2201 = vsel %vm2168, 1, 0
        %v2202 = vsel %vm2169, 1, 0
        %v2203 = vsel %vm2170, 1, 0
        %v2204 = vsel %vm2171, 1, 0
        %v2205 = vsel %vm2172, 1, 0
        %v2206 = vsel %vm2173, 1, 0
        %v2207 = vsel %vm2174, 1, 0
        %v2208 = vsel %vm2175, 1, 0
        %v2209 = vsel %vm2176, 1, 0
        %v2210 = vsel %vm2177, 1, 0
        %v2211 = vsel %vm2178, 1, 0
        %v2212 = vsel %vm2179, 1, 0
        %v2213 = vsel %vm2180, 1, 0
        %v2214 = vsel %vm2181, 1, 0
        %v2215 = vsel %vm2182, 1, 0
        %v2216 = vsel %vm2183, 1, 0
        %v2217 = vsel %vm2184, 1, 0
        %v2218 = vsel %vm2185, 1, 0
        %v2219 = vsel %vm2186, 1, 0
        %v2220 = vsel %vm2187, 1, 0
        %v2221 = vsel %vm2188, 1, 0
        %v2222 = vsel %vm2189, 1, 0
        %v2223 = vsel %vm2190, 1, 0
        %v2224 = vsel %vm2191, 1, 0
        %v2225 = vsel %vm2192, 1, 0
        %v2226 = vsel %vm2193, 1, 0
        %v2227 = vsel %vm2194, 1, 0
        %v2228 = vsel %vm2195, 1, 0
        %v2229 = vsel %vm2196, 1, 0
        %v2230 = vsel %vm2197, 1, 0
        %v2231 = vsel %vm2198, 1, 0
        %v2232 = vsel %vm2199, 1, 0
        %v2233 = vsel %vm2200, 1, 0
        %v2234 = vcvt.s32.f32 %v2201
        %v2235 = vcvt.s32.f32 %v2202
        %v2236 = vcvt.s32.f32 %v2203
        %v2237 = vcvt.s32.f32 %v2204
        %v2238 = vcvt.s32.f32 %v2205
        %v2239 = vcvt.s32.f32 %v2206
        %v2240 = vcvt.s32.f32 %v2207
        %v2241 = vcvt.s32.f32 %v2208
        %v2242 = vcvt.s32.f32 %v2209
        %v2243 = vcvt.s32.f32 %v2210
        %v2244 = vcvt.s32.f32 %v2211
        %v2245 = vcvt.s32.f32 %v2212
        %v2246 = vcvt.s32.f32 %v2213
        %v2247 = vcvt.s32.f32 %v2214
        %v2248 = vcvt.s32.f32 %v2215
        %v2249 = vcvt.s32.f32 %v2216
        %v2250 = vcvt.s32.f32 %v2217
        %v2251 = vcvt.s32.f32 %v2218
        %v2252 = vcvt.s32.f32 %v2219
        %v2253 = vcvt.s32.f32 %v2220
        %v2254 = vcvt.s32.f32 %v2221
        %v2255 = vcvt.s32.f32 %v2222
        %v2256 = vcvt.s32.f32 %v2223
        %v2257 = vcvt.s32.f32 %v2224
        %v2258 = vcvt.s32.f32 %v2225
        %v2259 = vcvt.s32.f32 %v2226
        %v2260 = vcvt.s32.f32 %v2227
        %v2261 = vcvt.s32.f32 %v2228
        %v2262 = vcvt.s32.f32 %v2229
        %v2263 = vcvt.s32.f32 %v2230
        %v2264 = vcvt.s32.f32 %v2231
        %v2265 = vcvt.s32.f32 %v2232
        %v2266 = vcvt.s32.f32 %v2233
        %v2267 = vmul.f32 %v2034, %v2234
        %v2268 = vmul.f32 %v2035, %v2235
        %v2269 = vmul.f32 %v2036, %v2236
        %v2270 = vmul.f32 %v2037, %v2237
        %v2271 = vmul.f32 %v2038, %v2238
        %v2272 = vmul.f32 %v2039, %v2239
        %v2273 = vmul.f32 %v2040, %v2240
        %v2274 = vmul.f32 %v2041, %v2241
        %v2275 = vmul.f32 %v2042, %v2242
        %v2276 = vmul.f32 %v2043, %v2243
        %v2277 = vmul.f32 %v2044, %v2244
        %v2278 = vmul.f32 %v2045, %v2245
        %v2279 = vmul.f32 %v2046, %v2246
        %v2280 = vmul.f32 %v2047, %v2247
        %v2281 = vmul.f32 %v2048, %v2248
        %v2282 = vmul.f32 %v2049, %v2249
        %v2283 = vmul.f32 %v2050, %v2250
        %v2284 = vmul.f32 %v2051, %v2251
        %v2285 = vmul.f32 %v2052, %v2252
        %v2286 = vmul.f32 %v2053, %v2253
        %v2287 = vmul.f32 %v2054, %v2254
        %v2288 = vmul.f32 %v2055, %v2255
        %v2289 = vmul.f32 %v2056, %v2256
        %v2290 = vmul.f32 %v2057, %v2257
        %v2291 = vmul.f32 %v2058, %v2258
        %v2292 = vmul.f32 %v2059, %v2259
        %v2293 = vmul.f32 %v2060, %v2260
        %v2294 = vmul.f32 %v2061, %v2261
        %v2295 = vmul.f32 %v2062, %v2262
        %v2296 = vmul.f32 %v2063, %v2263
        %v2297 = vmul.f32 %v2064, %v2264
        %v2298 = vmul.f32 %v2065, %v2265
        %v2299 = vmul.f32 %v2066, %v2266
        %v2300 = vld [vmem:[%s4] sm:$0xff]
        %v2301 = vld [vmem:[%s4 + $0x8] sm:$0xff]
        %v2302 = vld [vmem:[%s4 + $0x10] sm:$0xff]
        %v2303 = vld [vmem:[%s4 + $0x18] sm:$0xff]
        %v2304 = vld [vmem:[%s4 + $0x20] sm:$0xff]
        %v2305 = vld [vmem:[%s4 + $0x28] sm:$0xff]
        %v2306 = vld [vmem:[%s4 + $0x30] sm:$0xff]
        %v2307 = vld [vmem:[%s4 + $0x38] sm:$0xff]
        %v2308 = vld [vmem:[%s4 + $0x40] sm:$0xff]
        %v2309 = vld [vmem:[%s4 + $0x48] sm:$0xff]
        %v2310 = vld [vmem:[%s4 + $0x50] sm:$0xff]
        %v2311 = vld [vmem:[%s4 + $0x58] sm:$0xff]
        %v2312 = vld [vmem:[%s4 + $0x60] sm:$0xff]
        %v2313 = vld [vmem:[%s4 + $0x68] sm:$0xff]
        %v2314 = vld [vmem:[%s4 + $0x70] sm:$0xff]
        %v2315 = vld [vmem:[%s4 + $0x78] sm:$0xff]
        %s2316 = scalar_lea.vmem %s4, 128
        %v2317 = vld [vmem:[%s2316] sm:$0xff]
        %v2318 = vld [vmem:[%s2316 + $0x8] sm:$0xff]
        %v2319 = vld [vmem:[%s2316 + $0x10] sm:$0xff]
        %v2320 = vld [vmem:[%s2316 + $0x18] sm:$0xff]
        %v2321 = vld [vmem:[%s2316 + $0x20] sm:$0xff]
        %v2322 = vld [vmem:[%s2316 + $0x28] sm:$0xff]
        %v2323 = vld [vmem:[%s2316 + $0x30] sm:$0xff]
        %v2324 = vld [vmem:[%s2316 + $0x38] sm:$0xff]
        %v2325 = vld [vmem:[%s2316 + $0x40] sm:$0xff]
        %v2326 = vld [vmem:[%s2316 + $0x48] sm:$0xff]
        %v2327 = vld [vmem:[%s2316 + $0x50] sm:$0xff]
        %v2328 = vld [vmem:[%s2316 + $0x58] sm:$0xff]
        %v2329 = vld [vmem:[%s2316 + $0x60] sm:$0xff]
        %v2330 = vld [vmem:[%s2316 + $0x68] sm:$0xff]
        %v2331 = vld [vmem:[%s2316 + $0x70] sm:$0xff]
        %v2332 = vld [vmem:[%s2316 + $0x78] sm:$0xff]
        %v2366 = vrot.slane %v2267, 1
        %v2367 = vrot.slane %v2268, 1
        %v2368 = vsel %vm639, %v2366, %v2367
        %v2369 = vrot.slane %v2269, 1
        %v2370 = vsel %vm639, %v2367, %v2369
        %v2371 = vrot.slane %v2270, 1
        %v2372 = vsel %vm639, %v2369, %v2371
        %v2373 = vrot.slane %v2271, 1
        %v2374 = vsel %vm639, %v2371, %v2373
        %v2375 = vrot.slane %v2272, 1
        %v2376 = vsel %vm639, %v2373, %v2375
        %v2377 = vrot.slane %v2273, 1
        %v2378 = vsel %vm639, %v2375, %v2377
        %v2379 = vrot.slane %v2274, 1
        %v2380 = vsel %vm639, %v2377, %v2379
        %v2381 = vrot.slane %v2275, 1
        %v2382 = vsel %vm639, %v2379, %v2381
        %v2383 = vrot.slane %v2276, 1
        %v2384 = vsel %vm639, %v2381, %v2383
        %v2385 = vrot.slane %v2277, 1
        %v2386 = vsel %vm639, %v2383, %v2385
        %v2387 = vrot.slane %v2278, 1
        %v2388 = vsel %vm639, %v2385, %v2387
        %v2389 = vrot.slane %v2279, 1
        %v2390 = vsel %vm639, %v2387, %v2389
        %v2391 = vrot.slane %v2280, 1
        %v2392 = vsel %vm639, %v2389, %v2391
        %v2393 = vrot.slane %v2281, 1
        %v2394 = vsel %vm639, %v2391, %v2393
        %v2395 = vrot.slane %v2282, 1
        %v2396 = vsel %vm639, %v2393, %v2395
        %v2397 = vrot.slane %v2283, 1
        %v2398 = vsel %vm639, %v2395, %v2397
        %v2399 = vrot.slane %v2284, 1
        %v2400 = vsel %vm639, %v2397, %v2399
        %v2401 = vrot.slane %v2285, 1
        %v2402 = vsel %vm639, %v2399, %v2401
        %v2403 = vrot.slane %v2286, 1
        %v2404 = vsel %vm639, %v2401, %v2403
        %v2405 = vrot.slane %v2287, 1
        %v2406 = vsel %vm639, %v2403, %v2405
        %v2407 = vrot.slane %v2288, 1
        %v2408 = vsel %vm639, %v2405, %v2407
        %v2409 = vrot.slane %v2289, 1
        %v2410 = vsel %vm639, %v2407, %v2409
        %v2411 = vrot.slane %v2290, 1
        %v2412 = vsel %vm639, %v2409, %v2411
        %v2413 = vrot.slane %v2291, 1
        %v2414 = vsel %vm639, %v2411, %v2413
        %v2415 = vrot.slane %v2292, 1
        %v2416 = vsel %vm639, %v2413, %v2415
        %v2417 = vrot.slane %v2293, 1
        %v2418 = vsel %vm639, %v2415, %v2417
        %v2419 = vrot.slane %v2294, 1
        %v2420 = vsel %vm639, %v2417, %v2419
        %v2421 = vrot.slane %v2295, 1
        %v2422 = vsel %vm639, %v2419, %v2421
        %v2423 = vrot.slane %v2296, 1
        %v2424 = vsel %vm639, %v2421, %v2423
        %v2425 = vrot.slane %v2297, 1
        %v2426 = vsel %vm639, %v2423, %v2425
        %v2427 = vrot.slane %v2298, 1
        %v2428 = vsel %vm639, %v2425, %v2427
        %v2429 = vrot.slane %v2299, 1
        %v2430 = vsel %vm639, %v2427, %v2429
        %2463 = vmatpush.msra.mxu0 %v2332
        %2464 = vmatpush.msra.mxu0 %v2331
        %2465 = vmatpush.msra.mxu0 %v2330
        %2466 = vmatpush.msra.mxu0 %v2329
        %2467 = vmatpush.msra.mxu0 %v2328
        %2468 = vmatpush.msra.mxu0 %v2327
        %2469 = vmatpush.msra.mxu0 %v2326
        %2470 = vmatpush.msra.mxu0 %v2325
        %2471 = vmatpush.msra.mxu0 %v2324
        %2472 = vmatpush.msra.mxu0 %v2323
        %2473 = vmatpush.msra.mxu0 %v2322
        %2474 = vmatpush.msra.mxu0 %v2321
        %2475 = vmatpush.msra.mxu0 %v2320
        %2476 = vmatpush.msra.mxu0 %v2319
        %2477 = vmatpush.msra.mxu0 %v2318
        %2478 = vmatpush.msra.mxu0 %v2317
        %2479 = vmatmul.f32.gmra.mxu0 %v2368
        %v2480 = vpop.f32.mrf.mxu0
        %v2481 = vadd.f32 0.0, %v2480
        %2482 = vmatmul.f32.gmra.mxu0 %v2370
        %v2483 = vpop.f32.mrf.mxu0
        %v2484 = vadd.f32 0.0, %v2483
        %2485 = vmatmul.f32.gmra.mxu0 %v2372
        %v2486 = vpop.f32.mrf.mxu0
        %v2487 = vadd.f32 0.0, %v2486
        %2488 = vmatmul.f32.gmra.mxu0 %v2374
        %v2489 = vpop.f32.mrf.mxu0
        %v2490 = vadd.f32 0.0, %v2489
        %2491 = vmatmul.f32.gmra.mxu0 %v2376
        %v2492 = vpop.f32.mrf.mxu0
        %v2493 = vadd.f32 0.0, %v2492
        %2494 = vmatmul.f32.gmra.mxu0 %v2378
        %v2495 = vpop.f32.mrf.mxu0
        %v2496 = vadd.f32 0.0, %v2495
        %2497 = vmatmul.f32.gmra.mxu0 %v2380
        %v2498 = vpop.f32.mrf.mxu0
        %v2499 = vadd.f32 0.0, %v2498
        %2500 = vmatmul.f32.gmra.mxu0 %v2382
        %v2501 = vpop.f32.mrf.mxu0
        %v2502 = vadd.f32 0.0, %v2501
        %2503 = vmatmul.f32.gmra.mxu0 %v2384
        %v2504 = vpop.f32.mrf.mxu0
        %v2505 = vadd.f32 0.0, %v2504
        %2506 = vmatmul.f32.gmra.mxu0 %v2386
        %v2507 = vpop.f32.mrf.mxu0
        %v2508 = vadd.f32 0.0, %v2507
        %2509 = vmatmul.f32.gmra.mxu0 %v2388
        %v2510 = vpop.f32.mrf.mxu0
        %v2511 = vadd.f32 0.0, %v2510
        %2512 = vmatmul.f32.gmra.mxu0 %v2390
        %v2513 = vpop.f32.mrf.mxu0
        %v2514 = vadd.f32 0.0, %v2513
        %2515 = vmatmul.f32.gmra.mxu0 %v2392
        %v2516 = vpop.f32.mrf.mxu0
        %v2517 = vadd.f32 0.0, %v2516
        %2518 = vmatmul.f32.gmra.mxu0 %v2394
        %v2519 = vpop.f32.mrf.mxu0
        %v2520 = vadd.f32 0.0, %v2519
        %2521 = vmatmul.f32.gmra.mxu0 %v2396
        %v2522 = vpop.f32.mrf.mxu0
        %v2523 = vadd.f32 0.0, %v2522
        %2524 = vmatmul.f32.gmra.mxu0 %v2398
        %v2525 = vpop.f32.mrf.mxu0
        %v2526 = vadd.f32 0.0, %v2525
        %2527 = vmatmul.f32.gmra.mxu0 %v2400
        %v2528 = vpop.f32.mrf.mxu0
        %v2529 = vadd.f32 0.0, %v2528
        %2530 = vmatmul.f32.gmra.mxu0 %v2402
        %v2531 = vpop.f32.mrf.mxu0
        %v2532 = vadd.f32 0.0, %v2531
        %2533 = vmatmul.f32.gmra.mxu0 %v2404
        %v2534 = vpop.f32.mrf.mxu0
        %v2535 = vadd.f32 0.0, %v2534
        %2536 = vmatmul.f32.gmra.mxu0 %v2406
        %v2537 = vpop.f32.mrf.mxu0
        %v2538 = vadd.f32 0.0, %v2537
        %2539 = vmatmul.f32.gmra.mxu0 %v2408
        %v2540 = vpop.f32.mrf.mxu0
        %v2541 = vadd.f32 0.0, %v2540
        %2542 = vmatmul.f32.gmra.mxu0 %v2410
        %v2543 = vpop.f32.mrf.mxu0
        %v2544 = vadd.f32 0.0, %v2543
        %2545 = vmatmul.f32.gmra.mxu0 %v2412
        %v2546 = vpop.f32.mrf.mxu0
        %v2547 = vadd.f32 0.0, %v2546
        %2548 = vmatmul.f32.gmra.mxu0 %v2414
        %v2549 = vpop.f32.mrf.mxu0
        %v2550 = vadd.f32 0.0, %v2549
        %2551 = vmatmul.f32.gmra.mxu0 %v2416
        %v2552 = vpop.f32.mrf.mxu0
        %v2553 = vadd.f32 0.0, %v2552
        %2554 = vmatmul.f32.gmra.mxu0 %v2418
        %v2555 = vpop.f32.mrf.mxu0
        %v2556 = vadd.f32 0.0, %v2555
        %2557 = vmatmul.f32.gmra.mxu0 %v2420
        %v2558 = vpop.f32.mrf.mxu0
        %v2559 = vadd.f32 0.0, %v2558
        %2560 = vmatmul.f32.gmra.mxu0 %v2422
        %v2561 = vpop.f32.mrf.mxu0
        %v2562 = vadd.f32 0.0, %v2561
        %2563 = vmatmul.f32.gmra.mxu0 %v2424
        %v2564 = vpop.f32.mrf.mxu0
        %v2565 = vadd.f32 0.0, %v2564
        %2566 = vmatmul.f32.gmra.mxu0 %v2426
        %v2567 = vpop.f32.mrf.mxu0
        %v2568 = vadd.f32 0.0, %v2567
        %2569 = vmatmul.f32.gmra.mxu0 %v2428
        %v2570 = vpop.f32.mrf.mxu0
        %v2571 = vadd.f32 0.0, %v2570
        %2572 = vmatmul.f32.gmra.mxu0 %v2430
        %v2573 = vpop.f32.mrf.mxu0
        %v2574 = vadd.f32 0.0, %v2573
        %2575 = vdwg.mxu0
        %2576 = vmatpush.msra.mxu0 %v2315
        %2577 = vmatpush.msra.mxu0 %v2314
        %2578 = vmatpush.msra.mxu0 %v2313
        %2579 = vmatpush.msra.mxu0 %v2312
        %2580 = vmatpush.msra.mxu0 %v2311
        %2581 = vmatpush.msra.mxu0 %v2310
        %2582 = vmatpush.msra.mxu0 %v2309
        %2583 = vmatpush.msra.mxu0 %v2308
        %2584 = vmatpush.msra.mxu0 %v2307
        %2585 = vmatpush.msra.mxu0 %v2306
        %2586 = vmatpush.msra.mxu0 %v2305
        %2587 = vmatpush.msra.mxu0 %v2304
        %2588 = vmatpush.msra.mxu0 %v2303
        %2589 = vmatpush.msra.mxu0 %v2302
        %2590 = vmatpush.msra.mxu0 %v2301
        %2591 = vmatpush.msra.mxu0 %v2300
        %2592 = vmatmul.f32.gmra.mxu0 %v2267
        %v2593 = vpop.f32.mrf.mxu0
        %v2594 = vadd.f32 %v2481, %v2593
        %2595 = vmatmul.f32.gmra.mxu0 %v2268
        %v2596 = vpop.f32.mrf.mxu0
        %v2597 = vadd.f32 %v2484, %v2596
        %2598 = vmatmul.f32.gmra.mxu0 %v2269
        %v2599 = vpop.f32.mrf.mxu0
        %v2600 = vadd.f32 %v2487, %v2599
        %2601 = vmatmul.f32.gmra.mxu0 %v2270
        %v2602 = vpop.f32.mrf.mxu0
        %v2603 = vadd.f32 %v2490, %v2602
        %2604 = vmatmul.f32.gmra.mxu0 %v2271
        %v2605 = vpop.f32.mrf.mxu0
        %v2606 = vadd.f32 %v2493, %v2605
        %2607 = vmatmul.f32.gmra.mxu0 %v2272
        %v2608 = vpop.f32.mrf.mxu0
        %v2609 = vadd.f32 %v2496, %v2608
        %2610 = vmatmul.f32.gmra.mxu0 %v2273
        %v2611 = vpop.f32.mrf.mxu0
        %v2612 = vadd.f32 %v2499, %v2611
        %2613 = vmatmul.f32.gmra.mxu0 %v2274
        %v2614 = vpop.f32.mrf.mxu0
        %v2615 = vadd.f32 %v2502, %v2614
        %2616 = vmatmul.f32.gmra.mxu0 %v2275
        %v2617 = vpop.f32.mrf.mxu0
        %v2618 = vadd.f32 %v2505, %v2617
        %2619 = vmatmul.f32.gmra.mxu0 %v2276
        %v2620 = vpop.f32.mrf.mxu0
        %v2621 = vadd.f32 %v2508, %v2620
        %2622 = vmatmul.f32.gmra.mxu0 %v2277
        %v2623 = vpop.f32.mrf.mxu0
        %v2624 = vadd.f32 %v2511, %v2623
        %2625 = vmatmul.f32.gmra.mxu0 %v2278
        %v2626 = vpop.f32.mrf.mxu0
        %v2627 = vadd.f32 %v2514, %v2626
        %2628 = vmatmul.f32.gmra.mxu0 %v2279
        %v2629 = vpop.f32.mrf.mxu0
        %v2630 = vadd.f32 %v2517, %v2629
        %2631 = vmatmul.f32.gmra.mxu0 %v2280
        %v2632 = vpop.f32.mrf.mxu0
        %v2633 = vadd.f32 %v2520, %v2632
        %2634 = vmatmul.f32.gmra.mxu0 %v2281
        %v2635 = vpop.f32.mrf.mxu0
        %v2636 = vadd.f32 %v2523, %v2635
        %2637 = vmatmul.f32.gmra.mxu0 %v2282
        %v2638 = vpop.f32.mrf.mxu0
        %v2639 = vadd.f32 %v2526, %v2638
        %2640 = vmatmul.f32.gmra.mxu0 %v2283
        %v2641 = vpop.f32.mrf.mxu0
        %v2642 = vadd.f32 %v2529, %v2641
        %2643 = vmatmul.f32.gmra.mxu0 %v2284
        %v2644 = vpop.f32.mrf.mxu0
        %v2645 = vadd.f32 %v2532, %v2644
        %2646 = vmatmul.f32.gmra.mxu0 %v2285
        %v2647 = vpop.f32.mrf.mxu0
        %v2648 = vadd.f32 %v2535, %v2647
        %2649 = vmatmul.f32.gmra.mxu0 %v2286
        %v2650 = vpop.f32.mrf.mxu0
        %v2651 = vadd.f32 %v2538, %v2650
        %2652 = vmatmul.f32.gmra.mxu0 %v2287
        %v2653 = vpop.f32.mrf.mxu0
        %v2654 = vadd.f32 %v2541, %v2653
        %2655 = vmatmul.f32.gmra.mxu0 %v2288
        %v2656 = vpop.f32.mrf.mxu0
        %v2657 = vadd.f32 %v2544, %v2656
        %2658 = vmatmul.f32.gmra.mxu0 %v2289
        %v2659 = vpop.f32.mrf.mxu0
        %v2660 = vadd.f32 %v2547, %v2659
        %2661 = vmatmul.f32.gmra.mxu0 %v2290
        %v2662 = vpop.f32.mrf.mxu0
        %v2663 = vadd.f32 %v2550, %v2662
        %2664 = vmatmul.f32.gmra.mxu0 %v2291
        %v2665 = vpop.f32.mrf.mxu0
        %v2666 = vadd.f32 %v2553, %v2665
        %2667 = vmatmul.f32.gmra.mxu0 %v2292
        %v2668 = vpop.f32.mrf.mxu0
        %v2669 = vadd.f32 %v2556, %v2668
        %2670 = vmatmul.f32.gmra.mxu0 %v2293
        %v2671 = vpop.f32.mrf.mxu0
        %v2672 = vadd.f32 %v2559, %v2671
        %2673 = vmatmul.f32.gmra.mxu0 %v2294
        %v2674 = vpop.f32.mrf.mxu0
        %v2675 = vadd.f32 %v2562, %v2674
        %2676 = vmatmul.f32.gmra.mxu0 %v2295
        %v2677 = vpop.f32.mrf.mxu0
        %v2678 = vadd.f32 %v2565, %v2677
        %2679 = vmatmul.f32.gmra.mxu0 %v2296
        %v2680 = vpop.f32.mrf.mxu0
        %v2681 = vadd.f32 %v2568, %v2680
        %2682 = vmatmul.f32.gmra.mxu0 %v2297
        %v2683 = vpop.f32.mrf.mxu0
        %v2684 = vadd.f32 %v2571, %v2683
        %2685 = vmatmul.f32.gmra.mxu0 %v2298
        %v2686 = vpop.f32.mrf.mxu0
        %v2687 = vadd.f32 %v2574, %v2686
        %2688 = vdwg.mxu0
        %s2689 = scalar_lea.vmem %s4, 256
        %v2690 = vld [vmem:[%s2689] sm:$0xff]
        %v2691 = vld [vmem:[%s2689 + $0x8] sm:$0xff]
        %v2692 = vld [vmem:[%s2689 + $0x10] sm:$0xff]
        %v2693 = vld [vmem:[%s2689 + $0x18] sm:$0xff]
        %v2694 = vld [vmem:[%s2689 + $0x20] sm:$0xff]
        %v2695 = vld [vmem:[%s2689 + $0x28] sm:$0xff]
        %v2696 = vld [vmem:[%s2689 + $0x30] sm:$0xff]
        %v2697 = vld [vmem:[%s2689 + $0x38] sm:$0xff]
        %v2698 = vld [vmem:[%s2689 + $0x40] sm:$0xff]
        %v2699 = vld [vmem:[%s2689 + $0x48] sm:$0xff]
        %v2700 = vld [vmem:[%s2689 + $0x50] sm:$0xff]
        %v2701 = vld [vmem:[%s2689 + $0x58] sm:$0xff]
        %v2702 = vld [vmem:[%s2689 + $0x60] sm:$0xff]
        %v2703 = vld [vmem:[%s2689 + $0x68] sm:$0xff]
        %v2704 = vld [vmem:[%s2689 + $0x70] sm:$0xff]
        %v2705 = vld [vmem:[%s2689 + $0x78] sm:$0xff]
        %v2706 = vrot.slane %v2267, 2
        %v2707 = vrot.slane %v2268, 2
        %v2708 = vsel %vm987, %v2706, %v2707
        %v2709 = vrot.slane %v2269, 2
        %v2710 = vsel %vm987, %v2707, %v2709
        %v2711 = vrot.slane %v2270, 2
        %v2712 = vsel %vm987, %v2709, %v2711
        %v2713 = vrot.slane %v2271, 2
        %v2714 = vsel %vm987, %v2711, %v2713
        %v2715 = vrot.slane %v2272, 2
        %v2716 = vsel %vm987, %v2713, %v2715
        %v2717 = vrot.slane %v2273, 2
        %v2718 = vsel %vm987, %v2715, %v2717
        %v2719 = vrot.slane %v2274, 2
        %v2720 = vsel %vm987, %v2717, %v2719
        %v2721 = vrot.slane %v2275, 2
        %v2722 = vsel %vm987, %v2719, %v2721
        %v2723 = vrot.slane %v2276, 2
        %v2724 = vsel %vm987, %v2721, %v2723
        %v2725 = vrot.slane %v2277, 2
        %v2726 = vsel %vm987, %v2723, %v2725
        %v2727 = vrot.slane %v2278, 2
        %v2728 = vsel %vm987, %v2725, %v2727
        %v2729 = vrot.slane %v2279, 2
        %v2730 = vsel %vm987, %v2727, %v2729
        %v2731 = vrot.slane %v2280, 2
        %v2732 = vsel %vm987, %v2729, %v2731
        %v2733 = vrot.slane %v2281, 2
        %v2734 = vsel %vm987, %v2731, %v2733
        %v2735 = vrot.slane %v2282, 2
        %v2736 = vsel %vm987, %v2733, %v2735
        %v2737 = vrot.slane %v2283, 2
        %v2738 = vsel %vm987, %v2735, %v2737
        %v2739 = vrot.slane %v2284, 2
        %v2740 = vsel %vm987, %v2737, %v2739
        %v2741 = vrot.slane %v2285, 2
        %v2742 = vsel %vm987, %v2739, %v2741
        %v2743 = vrot.slane %v2286, 2
        %v2744 = vsel %vm987, %v2741, %v2743
        %v2745 = vrot.slane %v2287, 2
        %v2746 = vsel %vm987, %v2743, %v2745
        %v2747 = vrot.slane %v2288, 2
        %v2748 = vsel %vm987, %v2745, %v2747
        %v2749 = vrot.slane %v2289, 2
        %v2750 = vsel %vm987, %v2747, %v2749
        %v2751 = vrot.slane %v2290, 2
        %v2752 = vsel %vm987, %v2749, %v2751
        %v2753 = vrot.slane %v2291, 2
        %v2754 = vsel %vm987, %v2751, %v2753
        %v2755 = vrot.slane %v2292, 2
        %v2756 = vsel %vm987, %v2753, %v2755
        %v2757 = vrot.slane %v2293, 2
        %v2758 = vsel %vm987, %v2755, %v2757
        %v2759 = vrot.slane %v2294, 2
        %v2760 = vsel %vm987, %v2757, %v2759
        %v2761 = vrot.slane %v2295, 2
        %v2762 = vsel %vm987, %v2759, %v2761
        %v2763 = vrot.slane %v2296, 2
        %v2764 = vsel %vm987, %v2761, %v2763
        %v2765 = vrot.slane %v2297, 2
        %v2766 = vsel %vm987, %v2763, %v2765
        %v2767 = vrot.slane %v2298, 2
        %v2768 = vsel %vm987, %v2765, %v2767
        %v2769 = vrot.slane %v2299, 2
        %v2770 = vsel %vm987, %v2767, %v2769
        %2803 = vmatpush.msra.mxu0 %v2705
        %2804 = vmatpush.msra.mxu0 %v2704
        %2805 = vmatpush.msra.mxu0 %v2703
        %2806 = vmatpush.msra.mxu0 %v2702
        %2807 = vmatpush.msra.mxu0 %v2701
        %2808 = vmatpush.msra.mxu0 %v2700
        %2809 = vmatpush.msra.mxu0 %v2699
        %2810 = vmatpush.msra.mxu0 %v2698
        %2811 = vmatpush.msra.mxu0 %v2697
        %2812 = vmatpush.msra.mxu0 %v2696
        %2813 = vmatpush.msra.mxu0 %v2695
        %2814 = vmatpush.msra.mxu0 %v2694
        %2815 = vmatpush.msra.mxu0 %v2693
        %2816 = vmatpush.msra.mxu0 %v2692
        %2817 = vmatpush.msra.mxu0 %v2691
        %2818 = vmatpush.msra.mxu0 %v2690
        %2819 = vmatmul.f32.gmra.mxu0 %v2708
        %v2820 = vpop.f32.mrf.mxu0
        %v2821 = vadd.f32 0.0, %v2820
        %2822 = vmatmul.f32.gmra.mxu0 %v2710
        %v2823 = vpop.f32.mrf.mxu0
        %v2824 = vadd.f32 0.0, %v2823
        %2825 = vmatmul.f32.gmra.mxu0 %v2712
        %v2826 = vpop.f32.mrf.mxu0
        %v2827 = vadd.f32 0.0, %v2826
        %2828 = vmatmul.f32.gmra.mxu0 %v2714
        %v2829 = vpop.f32.mrf.mxu0
        %v2830 = vadd.f32 0.0, %v2829
        %2831 = vmatmul.f32.gmra.mxu0 %v2716
        %v2832 = vpop.f32.mrf.mxu0
        %v2833 = vadd.f32 0.0, %v2832
        %2834 = vmatmul.f32.gmra.mxu0 %v2718
        %v2835 = vpop.f32.mrf.mxu0
        %v2836 = vadd.f32 0.0, %v2835
        %2837 = vmatmul.f32.gmra.mxu0 %v2720
        %v2838 = vpop.f32.mrf.mxu0
        %v2839 = vadd.f32 0.0, %v2838
        %2840 = vmatmul.f32.gmra.mxu0 %v2722
        %v2841 = vpop.f32.mrf.mxu0
        %v2842 = vadd.f32 0.0, %v2841
        %2843 = vmatmul.f32.gmra.mxu0 %v2724
        %v2844 = vpop.f32.mrf.mxu0
        %v2845 = vadd.f32 0.0, %v2844
        %2846 = vmatmul.f32.gmra.mxu0 %v2726
        %v2847 = vpop.f32.mrf.mxu0
        %v2848 = vadd.f32 0.0, %v2847
        %2849 = vmatmul.f32.gmra.mxu0 %v2728
        %v2850 = vpop.f32.mrf.mxu0
        %v2851 = vadd.f32 0.0, %v2850
        %2852 = vmatmul.f32.gmra.mxu0 %v2730
        %v2853 = vpop.f32.mrf.mxu0
        %v2854 = vadd.f32 0.0, %v2853
        %2855 = vmatmul.f32.gmra.mxu0 %v2732
        %v2856 = vpop.f32.mrf.mxu0
        %v2857 = vadd.f32 0.0, %v2856
        %2858 = vmatmul.f32.gmra.mxu0 %v2734
        %v2859 = vpop.f32.mrf.mxu0
        %v2860 = vadd.f32 0.0, %v2859
        %2861 = vmatmul.f32.gmra.mxu0 %v2736
        %v2862 = vpop.f32.mrf.mxu0
        %v2863 = vadd.f32 0.0, %v2862
        %2864 = vmatmul.f32.gmra.mxu0 %v2738
        %v2865 = vpop.f32.mrf.mxu0
        %v2866 = vadd.f32 0.0, %v2865
        %2867 = vmatmul.f32.gmra.mxu0 %v2740
        %v2868 = vpop.f32.mrf.mxu0
        %v2869 = vadd.f32 0.0, %v2868
        %2870 = vmatmul.f32.gmra.mxu0 %v2742
        %v2871 = vpop.f32.mrf.mxu0
        %v2872 = vadd.f32 0.0, %v2871
        %2873 = vmatmul.f32.gmra.mxu0 %v2744
        %v2874 = vpop.f32.mrf.mxu0
        %v2875 = vadd.f32 0.0, %v2874
        %2876 = vmatmul.f32.gmra.mxu0 %v2746
        %v2877 = vpop.f32.mrf.mxu0
        %v2878 = vadd.f32 0.0, %v2877
        %2879 = vmatmul.f32.gmra.mxu0 %v2748
        %v2880 = vpop.f32.mrf.mxu0
        %v2881 = vadd.f32 0.0, %v2880
        %2882 = vmatmul.f32.gmra.mxu0 %v2750
        %v2883 = vpop.f32.mrf.mxu0
        %v2884 = vadd.f32 0.0, %v2883
        %2885 = vmatmul.f32.gmra.mxu0 %v2752
        %v2886 = vpop.f32.mrf.mxu0
        %v2887 = vadd.f32 0.0, %v2886
        %2888 = vmatmul.f32.gmra.mxu0 %v2754
        %v2889 = vpop.f32.mrf.mxu0
        %v2890 = vadd.f32 0.0, %v2889
        %2891 = vmatmul.f32.gmra.mxu0 %v2756
        %v2892 = vpop.f32.mrf.mxu0
        %v2893 = vadd.f32 0.0, %v2892
        %2894 = vmatmul.f32.gmra.mxu0 %v2758
        %v2895 = vpop.f32.mrf.mxu0
        %v2896 = vadd.f32 0.0, %v2895
        %2897 = vmatmul.f32.gmra.mxu0 %v2760
        %v2898 = vpop.f32.mrf.mxu0
        %v2899 = vadd.f32 0.0, %v2898
        %2900 = vmatmul.f32.gmra.mxu0 %v2762
        %v2901 = vpop.f32.mrf.mxu0
        %v2902 = vadd.f32 0.0, %v2901
        %2903 = vmatmul.f32.gmra.mxu0 %v2764
        %v2904 = vpop.f32.mrf.mxu0
        %v2905 = vadd.f32 0.0, %v2904
        %2906 = vmatmul.f32.gmra.mxu0 %v2766
        %v2907 = vpop.f32.mrf.mxu0
        %v2908 = vadd.f32 0.0, %v2907
        %2909 = vmatmul.f32.gmra.mxu0 %v2768
        %v2910 = vpop.f32.mrf.mxu0
        %v2911 = vadd.f32 0.0, %v2910
        %2912 = vmatmul.f32.gmra.mxu0 %v2770
        %v2913 = vpop.f32.mrf.mxu0
        %v2914 = vadd.f32 0.0, %v2913
        %2915 = vdwg.mxu0
        %v2916 = vadd.f32 %v2594, %v2821
        %v2917 = vadd.f32 %v2597, %v2824
        %v2918 = vadd.f32 %v2600, %v2827
        %v2919 = vadd.f32 %v2603, %v2830
        %v2920 = vadd.f32 %v2606, %v2833
        %v2921 = vadd.f32 %v2609, %v2836
        %v2922 = vadd.f32 %v2612, %v2839
        %v2923 = vadd.f32 %v2615, %v2842
        %v2924 = vadd.f32 %v2618, %v2845
        %v2925 = vadd.f32 %v2621, %v2848
        %v2926 = vadd.f32 %v2624, %v2851
        %v2927 = vadd.f32 %v2627, %v2854
        %v2928 = vadd.f32 %v2630, %v2857
        %v2929 = vadd.f32 %v2633, %v2860
        %v2930 = vadd.f32 %v2636, %v2863
        %v2931 = vadd.f32 %v2639, %v2866
        %v2932 = vadd.f32 %v2642, %v2869
        %v2933 = vadd.f32 %v2645, %v2872
        %v2934 = vadd.f32 %v2648, %v2875
        %v2935 = vadd.f32 %v2651, %v2878
        %v2936 = vadd.f32 %v2654, %v2881
        %v2937 = vadd.f32 %v2657, %v2884
        %v2938 = vadd.f32 %v2660, %v2887
        %v2939 = vadd.f32 %v2663, %v2890
        %v2940 = vadd.f32 %v2666, %v2893
        %v2941 = vadd.f32 %v2669, %v2896
        %v2942 = vadd.f32 %v2672, %v2899
        %v2943 = vadd.f32 %v2675, %v2902
        %v2944 = vadd.f32 %v2678, %v2905
        %v2945 = vadd.f32 %v2681, %v2908
        %v2946 = vadd.f32 %v2684, %v2911
        %v2947 = vadd.f32 %v2687, %v2914
        %v2948 = vperm.slane %v268, 0
        %v2949 = vadd.f32 %v2916, %v2948
        %v2950 = vadd.f32 %v2917, %v2948
        %v2951 = vadd.f32 %v2918, %v2948
        %v2952 = vadd.f32 %v2919, %v2948
        %v2953 = vadd.f32 %v2920, %v2948
        %v2954 = vadd.f32 %v2921, %v2948
        %v2955 = vadd.f32 %v2922, %v2948
        %v2956 = vadd.f32 %v2923, %v2948
        %v2957 = vadd.f32 %v2924, %v2948
        %v2958 = vadd.f32 %v2925, %v2948
        %v2959 = vadd.f32 %v2926, %v2948
        %v2960 = vadd.f32 %v2927, %v2948
        %v2961 = vadd.f32 %v2928, %v2948
        %v2962 = vadd.f32 %v2929, %v2948
        %v2963 = vadd.f32 %v2930, %v2948
        %v2964 = vadd.f32 %v2931, %v2948
        %v2965 = vadd.f32 %v2932, %v2948
        %v2966 = vadd.f32 %v2933, %v2948
        %v2967 = vadd.f32 %v2934, %v2948
        %v2968 = vadd.f32 %v2935, %v2948
        %v2969 = vadd.f32 %v2936, %v2948
        %v2970 = vadd.f32 %v2937, %v2948
        %v2971 = vadd.f32 %v2938, %v2948
        %v2972 = vadd.f32 %v2939, %v2948
        %v2973 = vadd.f32 %v2940, %v2948
        %v2974 = vadd.f32 %v2941, %v2948
        %v2975 = vadd.f32 %v2942, %v2948
        %v2976 = vadd.f32 %v2943, %v2948
        %v2977 = vadd.f32 %v2944, %v2948
        %v2978 = vadd.f32 %v2945, %v2948
        %v2979 = vadd.f32 %v2946, %v2948
        %v2980 = vadd.f32 %v2947, %v2948
        %v2981 = vmax.f32 %v2949, 0.0
        %v2982 = vmax.f32 %v2950, 0.0
        %v2983 = vmax.f32 %v2951, 0.0
        %v2984 = vmax.f32 %v2952, 0.0
        %v2985 = vmax.f32 %v2953, 0.0
        %v2986 = vmax.f32 %v2954, 0.0
        %v2987 = vmax.f32 %v2955, 0.0
        %v2988 = vmax.f32 %v2956, 0.0
        %v2989 = vmax.f32 %v2957, 0.0
        %v2990 = vmax.f32 %v2958, 0.0
        %v2991 = vmax.f32 %v2959, 0.0
        %v2992 = vmax.f32 %v2960, 0.0
        %v2993 = vmax.f32 %v2961, 0.0
        %v2994 = vmax.f32 %v2962, 0.0
        %v2995 = vmax.f32 %v2963, 0.0
        %v2996 = vmax.f32 %v2964, 0.0
        %v2997 = vmax.f32 %v2965, 0.0
        %v2998 = vmax.f32 %v2966, 0.0
        %v2999 = vmax.f32 %v2967, 0.0
        %v3000 = vmax.f32 %v2968, 0.0
        %v3001 = vmax.f32 %v2969, 0.0
        %v3002 = vmax.f32 %v2970, 0.0
        %v3003 = vmax.f32 %v2971, 0.0
        %v3004 = vmax.f32 %v2972, 0.0
        %v3005 = vmax.f32 %v2973, 0.0
        %v3006 = vmax.f32 %v2974, 0.0
        %v3007 = vmax.f32 %v2975, 0.0
        %v3008 = vmax.f32 %v2976, 0.0
        %v3009 = vmax.f32 %v2977, 0.0
        %v3010 = vmax.f32 %v2978, 0.0
        %v3011 = vmax.f32 %v2979, 0.0
        %v3012 = vmax.f32 %v2980, 0.0
        %3013 = vadd.xlane.f32.xlu0 %v2981
        %v3014 = vpop.xlane.xlu0 %3013
        %3015 = vadd.xlane.f32.xlu0 %v2982
        %v3016 = vpop.xlane.xlu0 %3015
        %3017 = vadd.xlane.f32.xlu0 %v2983
        %v3018 = vpop.xlane.xlu0 %3017
        %3019 = vadd.xlane.f32.xlu0 %v2984
        %v3020 = vpop.xlane.xlu0 %3019
        %3021 = vadd.xlane.f32.xlu0 %v2985
        %v3022 = vpop.xlane.xlu0 %3021
        %3023 = vadd.xlane.f32.xlu0 %v2986
        %v3024 = vpop.xlane.xlu0 %3023
        %3025 = vadd.xlane.f32.xlu0 %v2987
        %v3026 = vpop.xlane.xlu0 %3025
        %3027 = vadd.xlane.f32.xlu0 %v2988
        %v3028 = vpop.xlane.xlu0 %3027
        %3029 = vadd.xlane.f32.xlu0 %v2989
        %v3030 = vpop.xlane.xlu0 %3029
        %3031 = vadd.xlane.f32.xlu0 %v2990
        %v3032 = vpop.xlane.xlu0 %3031
        %3033 = vadd.xlane.f32.xlu0 %v2991
        %v3034 = vpop.xlane.xlu0 %3033
        %3035 = vadd.xlane.f32.xlu0 %v2992
        %v3036 = vpop.xlane.xlu0 %3035
        %3037 = vadd.xlane.f32.xlu0 %v2993
        %v3038 = vpop.xlane.xlu0 %3037
        %3039 = vadd.xlane.f32.xlu0 %v2994
        %v3040 = vpop.xlane.xlu0 %3039
        %3041 = vadd.xlane.f32.xlu0 %v2995
        %v3042 = vpop.xlane.xlu0 %3041
        %3043 = vadd.xlane.f32.xlu0 %v2996
        %v3044 = vpop.xlane.xlu0 %3043
        %3045 = vadd.xlane.f32.xlu0 %v2997
        %v3046 = vpop.xlane.xlu0 %3045
        %3047 = vadd.xlane.f32.xlu0 %v2998
        %v3048 = vpop.xlane.xlu0 %3047
        %3049 = vadd.xlane.f32.xlu0 %v2999
        %v3050 = vpop.xlane.xlu0 %3049
        %3051 = vadd.xlane.f32.xlu0 %v3000
        %v3052 = vpop.xlane.xlu0 %3051
        %3053 = vadd.xlane.f32.xlu0 %v3001
        %v3054 = vpop.xlane.xlu0 %3053
        %3055 = vadd.xlane.f32.xlu0 %v3002
        %v3056 = vpop.xlane.xlu0 %3055
        %3057 = vadd.xlane.f32.xlu0 %v3003
        %v3058 = vpop.xlane.xlu0 %3057
        %3059 = vadd.xlane.f32.xlu0 %v3004
        %v3060 = vpop.xlane.xlu0 %3059
        %3061 = vadd.xlane.f32.xlu0 %v3005
        %v3062 = vpop.xlane.xlu0 %3061
        %3063 = vadd.xlane.f32.xlu0 %v3006
        %v3064 = vpop.xlane.xlu0 %3063
        %3065 = vadd.xlane.f32.xlu0 %v3007
        %v3066 = vpop.xlane.xlu0 %3065
        %3067 = vadd.xlane.f32.xlu0 %v3008
        %v3068 = vpop.xlane.xlu0 %3067
        %3069 = vadd.xlane.f32.xlu0 %v3009
        %v3070 = vpop.xlane.xlu0 %3069
        %3071 = vadd.xlane.f32.xlu0 %v3010
        %v3072 = vpop.xlane.xlu0 %3071
        %3073 = vadd.xlane.f32.xlu0 %v3011
        %v3074 = vpop.xlane.xlu0 %3073
        %3075 = vadd.xlane.f32.xlu0 %v3012
        %v3076 = vpop.xlane.xlu0 %3075
        %v3077 = vmul.f32 %v3014, 0.03125
        %v3078 = vmul.f32 %v3016, 0.03125
        %v3079 = vmul.f32 %v3018, 0.03125
        %v3080 = vmul.f32 %v3020, 0.03125
        %v3081 = vmul.f32 %v3022, 0.03125
        %v3082 = vmul.f32 %v3024, 0.03125
        %v3083 = vmul.f32 %v3026, 0.03125
        %v3084 = vmul.f32 %v3028, 0.03125
        %v3085 = vmul.f32 %v3030, 0.03125
        %v3086 = vmul.f32 %v3032, 0.03125
        %v3087 = vmul.f32 %v3034, 0.03125
        %v3088 = vmul.f32 %v3036, 0.03125
        %v3089 = vmul.f32 %v3038, 0.03125
        %v3090 = vmul.f32 %v3040, 0.03125
        %v3091 = vmul.f32 %v3042, 0.03125
        %v3092 = vmul.f32 %v3044, 0.03125
        %v3093 = vmul.f32 %v3046, 0.03125
        %v3094 = vmul.f32 %v3048, 0.03125
        %v3095 = vmul.f32 %v3050, 0.03125
        %v3096 = vmul.f32 %v3052, 0.03125
        %v3097 = vmul.f32 %v3054, 0.03125
        %v3098 = vmul.f32 %v3056, 0.03125
        %v3099 = vmul.f32 %v3058, 0.03125
        %v3100 = vmul.f32 %v3060, 0.03125
        %v3101 = vmul.f32 %v3062, 0.03125
        %v3102 = vmul.f32 %v3064, 0.03125
        %v3103 = vmul.f32 %v3066, 0.03125
        %v3104 = vmul.f32 %v3068, 0.03125
        %v3105 = vmul.f32 %v3070, 0.03125
        %v3106 = vmul.f32 %v3072, 0.03125
        %v3107 = vmul.f32 %v3074, 0.03125
        %v3108 = vmul.f32 %v3076, 0.03125
        %v3109 = vsub.f32 %v2981, %v3077
        %v3110 = vsub.f32 %v2982, %v3078
        %v3111 = vsub.f32 %v2983, %v3079
        %v3112 = vsub.f32 %v2984, %v3080
        %v3113 = vsub.f32 %v2985, %v3081
        %v3114 = vsub.f32 %v2986, %v3082
        %v3115 = vsub.f32 %v2987, %v3083
        %v3116 = vsub.f32 %v2988, %v3084
        %v3117 = vsub.f32 %v2989, %v3085
        %v3118 = vsub.f32 %v2990, %v3086
        %v3119 = vsub.f32 %v2991, %v3087
        %v3120 = vsub.f32 %v2992, %v3088
        %v3121 = vsub.f32 %v2993, %v3089
        %v3122 = vsub.f32 %v2994, %v3090
        %v3123 = vsub.f32 %v2995, %v3091
        %v3124 = vsub.f32 %v2996, %v3092
        %v3125 = vsub.f32 %v2997, %v3093
        %v3126 = vsub.f32 %v2998, %v3094
        %v3127 = vsub.f32 %v2999, %v3095
        %v3128 = vsub.f32 %v3000, %v3096
        %v3129 = vsub.f32 %v3001, %v3097
        %v3130 = vsub.f32 %v3002, %v3098
        %v3131 = vsub.f32 %v3003, %v3099
        %v3132 = vsub.f32 %v3004, %v3100
        %v3133 = vsub.f32 %v3005, %v3101
        %v3134 = vsub.f32 %v3006, %v3102
        %v3135 = vsub.f32 %v3007, %v3103
        %v3136 = vsub.f32 %v3008, %v3104
        %v3137 = vsub.f32 %v3009, %v3105
        %v3138 = vsub.f32 %v3010, %v3106
        %v3139 = vsub.f32 %v3011, %v3107
        %v3140 = vsub.f32 %v3012, %v3108
        %v3141 = vmul.f32 %v3109, %v1436
        %v3142 = vmul.f32 %v3110, %v1436
        %v3143 = vmul.f32 %v3111, %v1436
        %v3144 = vmul.f32 %v3112, %v1436
        %v3145 = vmul.f32 %v3113, %v1436
        %v3146 = vmul.f32 %v3114, %v1436
        %v3147 = vmul.f32 %v3115, %v1436
        %v3148 = vmul.f32 %v3116, %v1436
        %v3149 = vmul.f32 %v3117, %v1436
        %v3150 = vmul.f32 %v3118, %v1436
        %v3151 = vmul.f32 %v3119, %v1436
        %v3152 = vmul.f32 %v3120, %v1436
        %v3153 = vmul.f32 %v3121, %v1436
        %v3154 = vmul.f32 %v3122, %v1436
        %v3155 = vmul.f32 %v3123, %v1436
        %v3156 = vmul.f32 %v3124, %v1436
        %v3157 = vmul.f32 %v3125, %v1436
        %v3158 = vmul.f32 %v3126, %v1436
        %v3159 = vmul.f32 %v3127, %v1436
        %v3160 = vmul.f32 %v3128, %v1436
        %v3161 = vmul.f32 %v3129, %v1436
        %v3162 = vmul.f32 %v3130, %v1436
        %v3163 = vmul.f32 %v3131, %v1436
        %v3164 = vmul.f32 %v3132, %v1436
        %v3165 = vmul.f32 %v3133, %v1436
        %v3166 = vmul.f32 %v3134, %v1436
        %v3167 = vmul.f32 %v3135, %v1436
        %v3168 = vmul.f32 %v3136, %v1436
        %v3169 = vmul.f32 %v3137, %v1436
        %v3170 = vmul.f32 %v3138, %v1436
        %v3171 = vmul.f32 %v3139, %v1436
        %v3172 = vmul.f32 %v3140, %v1436
        %v3173 = vmul.f32 %v3141, %v3141
        %v3174 = vmul.f32 %v3142, %v3142
        %v3175 = vmul.f32 %v3143, %v3143
        %v3176 = vmul.f32 %v3144, %v3144
        %v3177 = vmul.f32 %v3145, %v3145
        %v3178 = vmul.f32 %v3146, %v3146
        %v3179 = vmul.f32 %v3147, %v3147
        %v3180 = vmul.f32 %v3148, %v3148
        %v3181 = vmul.f32 %v3149, %v3149
        %v3182 = vmul.f32 %v3150, %v3150
        %v3183 = vmul.f32 %v3151, %v3151
        %v3184 = vmul.f32 %v3152, %v3152
        %v3185 = vmul.f32 %v3153, %v3153
        %v3186 = vmul.f32 %v3154, %v3154
        %v3187 = vmul.f32 %v3155, %v3155
        %v3188 = vmul.f32 %v3156, %v3156
        %v3189 = vmul.f32 %v3157, %v3157
        %v3190 = vmul.f32 %v3158, %v3158
        %v3191 = vmul.f32 %v3159, %v3159
        %v3192 = vmul.f32 %v3160, %v3160
        %v3193 = vmul.f32 %v3161, %v3161
        %v3194 = vmul.f32 %v3162, %v3162
        %v3195 = vmul.f32 %v3163, %v3163
        %v3196 = vmul.f32 %v3164, %v3164
        %v3197 = vmul.f32 %v3165, %v3165
        %v3198 = vmul.f32 %v3166, %v3166
        %v3199 = vmul.f32 %v3167, %v3167
        %v3200 = vmul.f32 %v3168, %v3168
        %v3201 = vmul.f32 %v3169, %v3169
        %v3202 = vmul.f32 %v3170, %v3170
        %v3203 = vmul.f32 %v3171, %v3171
        %v3204 = vmul.f32 %v3172, %v3172
        %3205 = vadd.xlane.f32.xlu0 %v3173
        %v3206 = vpop.xlane.xlu0 %3205
        %3207 = vadd.xlane.f32.xlu0 %v3174
        %v3208 = vpop.xlane.xlu0 %3207
        %3209 = vadd.xlane.f32.xlu0 %v3175
        %v3210 = vpop.xlane.xlu0 %3209
        %3211 = vadd.xlane.f32.xlu0 %v3176
        %v3212 = vpop.xlane.xlu0 %3211
        %3213 = vadd.xlane.f32.xlu0 %v3177
        %v3214 = vpop.xlane.xlu0 %3213
        %3215 = vadd.xlane.f32.xlu0 %v3178
        %v3216 = vpop.xlane.xlu0 %3215
        %3217 = vadd.xlane.f32.xlu0 %v3179
        %v3218 = vpop.xlane.xlu0 %3217
        %3219 = vadd.xlane.f32.xlu0 %v3180
        %v3220 = vpop.xlane.xlu0 %3219
        %3221 = vadd.xlane.f32.xlu0 %v3181
        %v3222 = vpop.xlane.xlu0 %3221
        %3223 = vadd.xlane.f32.xlu0 %v3182
        %v3224 = vpop.xlane.xlu0 %3223
        %3225 = vadd.xlane.f32.xlu0 %v3183
        %v3226 = vpop.xlane.xlu0 %3225
        %3227 = vadd.xlane.f32.xlu0 %v3184
        %v3228 = vpop.xlane.xlu0 %3227
        %3229 = vadd.xlane.f32.xlu0 %v3185
        %v3230 = vpop.xlane.xlu0 %3229
        %3231 = vadd.xlane.f32.xlu0 %v3186
        %v3232 = vpop.xlane.xlu0 %3231
        %3233 = vadd.xlane.f32.xlu0 %v3187
        %v3234 = vpop.xlane.xlu0 %3233
        %3235 = vadd.xlane.f32.xlu0 %v3188
        %v3236 = vpop.xlane.xlu0 %3235
        %3237 = vadd.xlane.f32.xlu0 %v3189
        %v3238 = vpop.xlane.xlu0 %3237
        %3239 = vadd.xlane.f32.xlu0 %v3190
        %v3240 = vpop.xlane.xlu0 %3239
        %3241 = vadd.xlane.f32.xlu0 %v3191
        %v3242 = vpop.xlane.xlu0 %3241
        %3243 = vadd.xlane.f32.xlu0 %v3192
        %v3244 = vpop.xlane.xlu0 %3243
        %3245 = vadd.xlane.f32.xlu0 %v3193
        %v3246 = vpop.xlane.xlu0 %3245
        %3247 = vadd.xlane.f32.xlu0 %v3194
        %v3248 = vpop.xlane.xlu0 %3247
        %3249 = vadd.xlane.f32.xlu0 %v3195
        %v3250 = vpop.xlane.xlu0 %3249
        %3251 = vadd.xlane.f32.xlu0 %v3196
        %v3252 = vpop.xlane.xlu0 %3251
        %3253 = vadd.xlane.f32.xlu0 %v3197
        %v3254 = vpop.xlane.xlu0 %3253
        %3255 = vadd.xlane.f32.xlu0 %v3198
        %v3256 = vpop.xlane.xlu0 %3255
        %3257 = vadd.xlane.f32.xlu0 %v3199
        %v3258 = vpop.xlane.xlu0 %3257
        %3259 = vadd.xlane.f32.xlu0 %v3200
        %v3260 = vpop.xlane.xlu0 %3259
        %3261 = vadd.xlane.f32.xlu0 %v3201
        %v3262 = vpop.xlane.xlu0 %3261
        %3263 = vadd.xlane.f32.xlu0 %v3202
        %v3264 = vpop.xlane.xlu0 %3263
        %3265 = vadd.xlane.f32.xlu0 %v3203
        %v3266 = vpop.xlane.xlu0 %3265
        %3267 = vadd.xlane.f32.xlu0 %v3204
        %v3268 = vpop.xlane.xlu0 %3267
        %v3269 = vmul.f32 %v3206, 0.03125
        %v3270 = vmul.f32 %v3208, 0.03125
        %v3271 = vmul.f32 %v3210, 0.03125
        %v3272 = vmul.f32 %v3212, 0.03125
        %v3273 = vmul.f32 %v3214, 0.03125
        %v3274 = vmul.f32 %v3216, 0.03125
        %v3275 = vmul.f32 %v3218, 0.03125
        %v3276 = vmul.f32 %v3220, 0.03125
        %v3277 = vmul.f32 %v3222, 0.03125
        %v3278 = vmul.f32 %v3224, 0.03125
        %v3279 = vmul.f32 %v3226, 0.03125
        %v3280 = vmul.f32 %v3228, 0.03125
        %v3281 = vmul.f32 %v3230, 0.03125
        %v3282 = vmul.f32 %v3232, 0.03125
        %v3283 = vmul.f32 %v3234, 0.03125
        %v3284 = vmul.f32 %v3236, 0.03125
        %v3285 = vmul.f32 %v3238, 0.03125
        %v3286 = vmul.f32 %v3240, 0.03125
        %v3287 = vmul.f32 %v3242, 0.03125
        %v3288 = vmul.f32 %v3244, 0.03125
        %v3289 = vmul.f32 %v3246, 0.03125
        %v3290 = vmul.f32 %v3248, 0.03125
        %v3291 = vmul.f32 %v3250, 0.03125
        %v3292 = vmul.f32 %v3252, 0.03125
        %v3293 = vmul.f32 %v3254, 0.03125
        %v3294 = vmul.f32 %v3256, 0.03125
        %v3295 = vmul.f32 %v3258, 0.03125
        %v3296 = vmul.f32 %v3260, 0.03125
        %v3297 = vmul.f32 %v3262, 0.03125
        %v3298 = vmul.f32 %v3264, 0.03125
        %v3299 = vmul.f32 %v3266, 0.03125
        %v3300 = vmul.f32 %v3268, 0.03125
        %v3301 = vadd.f32 %v3269, 1e-05
        %v3302 = vadd.f32 %v3270, 1e-05
        %v3303 = vadd.f32 %v3271, 1e-05
        %v3304 = vadd.f32 %v3272, 1e-05
        %v3305 = vadd.f32 %v3273, 1e-05
        %v3306 = vadd.f32 %v3274, 1e-05
        %v3307 = vadd.f32 %v3275, 1e-05
        %v3308 = vadd.f32 %v3276, 1e-05
        %v3309 = vadd.f32 %v3277, 1e-05
        %v3310 = vadd.f32 %v3278, 1e-05
        %v3311 = vadd.f32 %v3279, 1e-05
        %v3312 = vadd.f32 %v3280, 1e-05
        %v3313 = vadd.f32 %v3281, 1e-05
        %v3314 = vadd.f32 %v3282, 1e-05
        %v3315 = vadd.f32 %v3283, 1e-05
        %v3316 = vadd.f32 %v3284, 1e-05
        %v3317 = vadd.f32 %v3285, 1e-05
        %v3318 = vadd.f32 %v3286, 1e-05
        %v3319 = vadd.f32 %v3287, 1e-05
        %v3320 = vadd.f32 %v3288, 1e-05
        %v3321 = vadd.f32 %v3289, 1e-05
        %v3322 = vadd.f32 %v3290, 1e-05
        %v3323 = vadd.f32 %v3291, 1e-05
        %v3324 = vadd.f32 %v3292, 1e-05
        %v3325 = vadd.f32 %v3293, 1e-05
        %v3326 = vadd.f32 %v3294, 1e-05
        %v3327 = vadd.f32 %v3295, 1e-05
        %v3328 = vadd.f32 %v3296, 1e-05
        %v3329 = vadd.f32 %v3297, 1e-05
        %v3330 = vadd.f32 %v3298, 1e-05
        %v3331 = vadd.f32 %v3299, 1e-05
        %v3332 = vadd.f32 %v3300, 1e-05
        %v3333 = vrsqrt.pop %v3301
        %v3334 = vmul.f32 %v3333, %v3301
        %v3335 = vmul.f32 %v3334, %v3333
        %v3336 = vmul.f32 0.5, %v3335
        %v3337 = vsub.f32 1.5, %v3336
        %v3338 = vmul.f32 %v3333, %v3337
        %vm3339 = vweird.f32 %v3301
        %vm3340 = vweird.f32 %v3333
        %vm3341 = vmor %vm3339, %vm3340
        %v3342 = vsel %vm3341, %v3333, %v3338
        %v3343 = vrsqrt.pop %v3302
        %v3344 = vmul.f32 %v3343, %v3302
        %v3345 = vmul.f32 %v3344, %v3343
        %v3346 = vmul.f32 0.5, %v3345
        %v3347 = vsub.f32 1.5, %v3346
        %v3348 = vmul.f32 %v3343, %v3347
        %vm3349 = vweird.f32 %v3302
        %vm3350 = vweird.f32 %v3343
        %vm3351 = vmor %vm3349, %vm3350
        %v3352 = vsel %vm3351, %v3343, %v3348
        %v3353 = vrsqrt.pop %v3303
        %v3354 = vmul.f32 %v3353, %v3303
        %v3355 = vmul.f32 %v3354, %v3353
        %v3356 = vmul.f32 0.5, %v3355
        %v3357 = vsub.f32 1.5, %v3356
        %v3358 = vmul.f32 %v3353, %v3357
        %vm3359 = vweird.f32 %v3303
        %vm3360 = vweird.f32 %v3353
        %vm3361 = vmor %vm3359, %vm3360
        %v3362 = vsel %vm3361, %v3353, %v3358
        %v3363 = vrsqrt.pop %v3304
        %v3364 = vmul.f32 %v3363, %v3304
        %v3365 = vmul.f32 %v3364, %v3363
        %v3366 = vmul.f32 0.5, %v3365
        %v3367 = vsub.f32 1.5, %v3366
        %v3368 = vmul.f32 %v3363, %v3367
        %vm3369 = vweird.f32 %v3304
        %vm3370 = vweird.f32 %v3363
        %vm3371 = vmor %vm3369, %vm3370
        %v3372 = vsel %vm3371, %v3363, %v3368
        %v3373 = vrsqrt.pop %v3305
        %v3374 = vmul.f32 %v3373, %v3305
        %v3375 = vmul.f32 %v3374, %v3373
        %v3376 = vmul.f32 0.5, %v3375
        %v3377 = vsub.f32 1.5, %v3376
        %v3378 = vmul.f32 %v3373, %v3377
        %vm3379 = vweird.f32 %v3305
        %vm3380 = vweird.f32 %v3373
        %vm3381 = vmor %vm3379, %vm3380
        %v3382 = vsel %vm3381, %v3373, %v3378
        %v3383 = vrsqrt.pop %v3306
        %v3384 = vmul.f32 %v3383, %v3306
        %v3385 = vmul.f32 %v3384, %v3383
        %v3386 = vmul.f32 0.5, %v3385
        %v3387 = vsub.f32 1.5, %v3386
        %v3388 = vmul.f32 %v3383, %v3387
        %vm3389 = vweird.f32 %v3306
        %vm3390 = vweird.f32 %v3383
        %vm3391 = vmor %vm3389, %vm3390
        %v3392 = vsel %vm3391, %v3383, %v3388
        %v3393 = vrsqrt.pop %v3307
        %v3394 = vmul.f32 %v3393, %v3307
        %v3395 = vmul.f32 %v3394, %v3393
        %v3396 = vmul.f32 0.5, %v3395
        %v3397 = vsub.f32 1.5, %v3396
        %v3398 = vmul.f32 %v3393, %v3397
        %vm3399 = vweird.f32 %v3307
        %vm3400 = vweird.f32 %v3393
        %vm3401 = vmor %vm3399, %vm3400
        %v3402 = vsel %vm3401, %v3393, %v3398
        %v3403 = vrsqrt.pop %v3308
        %v3404 = vmul.f32 %v3403, %v3308
        %v3405 = vmul.f32 %v3404, %v3403
        %v3406 = vmul.f32 0.5, %v3405
        %v3407 = vsub.f32 1.5, %v3406
        %v3408 = vmul.f32 %v3403, %v3407
        %vm3409 = vweird.f32 %v3308
        %vm3410 = vweird.f32 %v3403
        %vm3411 = vmor %vm3409, %vm3410
        %v3412 = vsel %vm3411, %v3403, %v3408
        %v3413 = vrsqrt.pop %v3309
        %v3414 = vmul.f32 %v3413, %v3309
        %v3415 = vmul.f32 %v3414, %v3413
        %v3416 = vmul.f32 0.5, %v3415
        %v3417 = vsub.f32 1.5, %v3416
        %v3418 = vmul.f32 %v3413, %v3417
        %vm3419 = vweird.f32 %v3309
        %vm3420 = vweird.f32 %v3413
        %vm3421 = vmor %vm3419, %vm3420
        %v3422 = vsel %vm3421, %v3413, %v3418
        %v3423 = vrsqrt.pop %v3310
        %v3424 = vmul.f32 %v3423, %v3310
        %v3425 = vmul.f32 %v3424, %v3423
        %v3426 = vmul.f32 0.5, %v3425
        %v3427 = vsub.f32 1.5, %v3426
        %v3428 = vmul.f32 %v3423, %v3427
        %vm3429 = vweird.f32 %v3310
        %vm3430 = vweird.f32 %v3423
        %vm3431 = vmor %vm3429, %vm3430
        %v3432 = vsel %vm3431, %v3423, %v3428
        %v3433 = vrsqrt.pop %v3311
        %v3434 = vmul.f32 %v3433, %v3311
        %v3435 = vmul.f32 %v3434, %v3433
        %v3436 = vmul.f32 0.5, %v3435
        %v3437 = vsub.f32 1.5, %v3436
        %v3438 = vmul.f32 %v3433, %v3437
        %vm3439 = vweird.f32 %v3311
        %vm3440 = vweird.f32 %v3433
        %vm3441 = vmor %vm3439, %vm3440
        %v3442 = vsel %vm3441, %v3433, %v3438
        %v3443 = vrsqrt.pop %v3312
        %v3444 = vmul.f32 %v3443, %v3312
        %v3445 = vmul.f32 %v3444, %v3443
        %v3446 = vmul.f32 0.5, %v3445
        %v3447 = vsub.f32 1.5, %v3446
        %v3448 = vmul.f32 %v3443, %v3447
        %vm3449 = vweird.f32 %v3312
        %vm3450 = vweird.f32 %v3443
        %vm3451 = vmor %vm3449, %vm3450
        %v3452 = vsel %vm3451, %v3443, %v3448
        %v3453 = vrsqrt.pop %v3313
        %v3454 = vmul.f32 %v3453, %v3313
        %v3455 = vmul.f32 %v3454, %v3453
        %v3456 = vmul.f32 0.5, %v3455
        %v3457 = vsub.f32 1.5, %v3456
        %v3458 = vmul.f32 %v3453, %v3457
        %vm3459 = vweird.f32 %v3313
        %vm3460 = vweird.f32 %v3453
        %vm3461 = vmor %vm3459, %vm3460
        %v3462 = vsel %vm3461, %v3453, %v3458
        %v3463 = vrsqrt.pop %v3314
        %v3464 = vmul.f32 %v3463, %v3314
        %v3465 = vmul.f32 %v3464, %v3463
        %v3466 = vmul.f32 0.5, %v3465
        %v3467 = vsub.f32 1.5, %v3466
        %v3468 = vmul.f32 %v3463, %v3467
        %vm3469 = vweird.f32 %v3314
        %vm3470 = vweird.f32 %v3463
        %vm3471 = vmor %vm3469, %vm3470
        %v3472 = vsel %vm3471, %v3463, %v3468
        %v3473 = vrsqrt.pop %v3315
        %v3474 = vmul.f32 %v3473, %v3315
        %v3475 = vmul.f32 %v3474, %v3473
        %v3476 = vmul.f32 0.5, %v3475
        %v3477 = vsub.f32 1.5, %v3476
        %v3478 = vmul.f32 %v3473, %v3477
        %vm3479 = vweird.f32 %v3315
        %vm3480 = vweird.f32 %v3473
        %vm3481 = vmor %vm3479, %vm3480
        %v3482 = vsel %vm3481, %v3473, %v3478
        %v3483 = vrsqrt.pop %v3316
        %v3484 = vmul.f32 %v3483, %v3316
        %v3485 = vmul.f32 %v3484, %v3483
        %v3486 = vmul.f32 0.5, %v3485
        %v3487 = vsub.f32 1.5, %v3486
        %v3488 = vmul.f32 %v3483, %v3487
        %vm3489 = vweird.f32 %v3316
        %vm3490 = vweird.f32 %v3483
        %vm3491 = vmor %vm3489, %vm3490
        %v3492 = vsel %vm3491, %v3483, %v3488
        %v3493 = vrsqrt.pop %v3317
        %v3494 = vmul.f32 %v3493, %v3317
        %v3495 = vmul.f32 %v3494, %v3493
        %v3496 = vmul.f32 0.5, %v3495
        %v3497 = vsub.f32 1.5, %v3496
        %v3498 = vmul.f32 %v3493, %v3497
        %vm3499 = vweird.f32 %v3317
        %vm3500 = vweird.f32 %v3493
        %vm3501 = vmor %vm3499, %vm3500
        %v3502 = vsel %vm3501, %v3493, %v3498
        %v3503 = vrsqrt.pop %v3318
        %v3504 = vmul.f32 %v3503, %v3318
        %v3505 = vmul.f32 %v3504, %v3503
        %v3506 = vmul.f32 0.5, %v3505
        %v3507 = vsub.f32 1.5, %v3506
        %v3508 = vmul.f32 %v3503, %v3507
        %vm3509 = vweird.f32 %v3318
        %vm3510 = vweird.f32 %v3503
        %vm3511 = vmor %vm3509, %vm3510
        %v3512 = vsel %vm3511, %v3503, %v3508
        %v3513 = vrsqrt.pop %v3319
        %v3514 = vmul.f32 %v3513, %v3319
        %v3515 = vmul.f32 %v3514, %v3513
        %v3516 = vmul.f32 0.5, %v3515
        %v3517 = vsub.f32 1.5, %v3516
        %v3518 = vmul.f32 %v3513, %v3517
        %vm3519 = vweird.f32 %v3319
        %vm3520 = vweird.f32 %v3513
        %vm3521 = vmor %vm3519, %vm3520
        %v3522 = vsel %vm3521, %v3513, %v3518
        %v3523 = vrsqrt.pop %v3320
        %v3524 = vmul.f32 %v3523, %v3320
        %v3525 = vmul.f32 %v3524, %v3523
        %v3526 = vmul.f32 0.5, %v3525
        %v3527 = vsub.f32 1.5, %v3526
        %v3528 = vmul.f32 %v3523, %v3527
        %vm3529 = vweird.f32 %v3320
        %vm3530 = vweird.f32 %v3523
        %vm3531 = vmor %vm3529, %vm3530
        %v3532 = vsel %vm3531, %v3523, %v3528
        %v3533 = vrsqrt.pop %v3321
        %v3534 = vmul.f32 %v3533, %v3321
        %v3535 = vmul.f32 %v3534, %v3533
        %v3536 = vmul.f32 0.5, %v3535
        %v3537 = vsub.f32 1.5, %v3536
        %v3538 = vmul.f32 %v3533, %v3537
        %vm3539 = vweird.f32 %v3321
        %vm3540 = vweird.f32 %v3533
        %vm3541 = vmor %vm3539, %vm3540
        %v3542 = vsel %vm3541, %v3533, %v3538
        %v3543 = vrsqrt.pop %v3322
        %v3544 = vmul.f32 %v3543, %v3322
        %v3545 = vmul.f32 %v3544, %v3543
        %v3546 = vmul.f32 0.5, %v3545
        %v3547 = vsub.f32 1.5, %v3546
        %v3548 = vmul.f32 %v3543, %v3547
        %vm3549 = vweird.f32 %v3322
        %vm3550 = vweird.f32 %v3543
        %vm3551 = vmor %vm3549, %vm3550
        %v3552 = vsel %vm3551, %v3543, %v3548
        %v3553 = vrsqrt.pop %v3323
        %v3554 = vmul.f32 %v3553, %v3323
        %v3555 = vmul.f32 %v3554, %v3553
        %v3556 = vmul.f32 0.5, %v3555
        %v3557 = vsub.f32 1.5, %v3556
        %v3558 = vmul.f32 %v3553, %v3557
        %vm3559 = vweird.f32 %v3323
        %vm3560 = vweird.f32 %v3553
        %vm3561 = vmor %vm3559, %vm3560
        %v3562 = vsel %vm3561, %v3553, %v3558
        %v3563 = vrsqrt.pop %v3324
        %v3564 = vmul.f32 %v3563, %v3324
        %v3565 = vmul.f32 %v3564, %v3563
        %v3566 = vmul.f32 0.5, %v3565
        %v3567 = vsub.f32 1.5, %v3566
        %v3568 = vmul.f32 %v3563, %v3567
        %vm3569 = vweird.f32 %v3324
        %vm3570 = vweird.f32 %v3563
        %vm3571 = vmor %vm3569, %vm3570
        %v3572 = vsel %vm3571, %v3563, %v3568
        %v3573 = vrsqrt.pop %v3325
        %v3574 = vmul.f32 %v3573, %v3325
        %v3575 = vmul.f32 %v3574, %v3573
        %v3576 = vmul.f32 0.5, %v3575
        %v3577 = vsub.f32 1.5, %v3576
        %v3578 = vmul.f32 %v3573, %v3577
        %vm3579 = vweird.f32 %v3325
        %vm3580 = vweird.f32 %v3573
        %vm3581 = vmor %vm3579, %vm3580
        %v3582 = vsel %vm3581, %v3573, %v3578
        %v3583 = vrsqrt.pop %v3326
        %v3584 = vmul.f32 %v3583, %v3326
        %v3585 = vmul.f32 %v3584, %v3583
        %v3586 = vmul.f32 0.5, %v3585
        %v3587 = vsub.f32 1.5, %v3586
        %v3588 = vmul.f32 %v3583, %v3587
        %vm3589 = vweird.f32 %v3326
        %vm3590 = vweird.f32 %v3583
        %vm3591 = vmor %vm3589, %vm3590
        %v3592 = vsel %vm3591, %v3583, %v3588
        %v3593 = vrsqrt.pop %v3327
        %v3594 = vmul.f32 %v3593, %v3327
        %v3595 = vmul.f32 %v3594, %v3593
        %v3596 = vmul.f32 0.5, %v3595
        %v3597 = vsub.f32 1.5, %v3596
        %v3598 = vmul.f32 %v3593, %v3597
        %vm3599 = vweird.f32 %v3327
        %vm3600 = vweird.f32 %v3593
        %vm3601 = vmor %vm3599, %vm3600
        %v3602 = vsel %vm3601, %v3593, %v3598
        %v3603 = vrsqrt.pop %v3328
        %v3604 = vmul.f32 %v3603, %v3328
        %v3605 = vmul.f32 %v3604, %v3603
        %v3606 = vmul.f32 0.5, %v3605
        %v3607 = vsub.f32 1.5, %v3606
        %v3608 = vmul.f32 %v3603, %v3607
        %vm3609 = vweird.f32 %v3328
        %vm3610 = vweird.f32 %v3603
        %vm3611 = vmor %vm3609, %vm3610
        %v3612 = vsel %vm3611, %v3603, %v3608
        %v3613 = vrsqrt.pop %v3329
        %v3614 = vmul.f32 %v3613, %v3329
        %v3615 = vmul.f32 %v3614, %v3613
        %v3616 = vmul.f32 0.5, %v3615
        %v3617 = vsub.f32 1.5, %v3616
        %v3618 = vmul.f32 %v3613, %v3617
        %vm3619 = vweird.f32 %v3329
        %vm3620 = vweird.f32 %v3613
        %vm3621 = vmor %vm3619, %vm3620
        %v3622 = vsel %vm3621, %v3613, %v3618
        %v3623 = vrsqrt.pop %v3330
        %v3624 = vmul.f32 %v3623, %v3330
        %v3625 = vmul.f32 %v3624, %v3623
        %v3626 = vmul.f32 0.5, %v3625
        %v3627 = vsub.f32 1.5, %v3626
        %v3628 = vmul.f32 %v3623, %v3627
        %vm3629 = vweird.f32 %v3330
        %vm3630 = vweird.f32 %v3623
        %vm3631 = vmor %vm3629, %vm3630
        %v3632 = vsel %vm3631, %v3623, %v3628
        %v3633 = vrsqrt.pop %v3331
        %v3634 = vmul.f32 %v3633, %v3331
        %v3635 = vmul.f32 %v3634, %v3633
        %v3636 = vmul.f32 0.5, %v3635
        %v3637 = vsub.f32 1.5, %v3636
        %v3638 = vmul.f32 %v3633, %v3637
        %vm3639 = vweird.f32 %v3331
        %vm3640 = vweird.f32 %v3633
        %vm3641 = vmor %vm3639, %vm3640
        %v3642 = vsel %vm3641, %v3633, %v3638
        %v3643 = vrsqrt.pop %v3332
        %v3644 = vmul.f32 %v3643, %v3332
        %v3645 = vmul.f32 %v3644, %v3643
        %v3646 = vmul.f32 0.5, %v3645
        %v3647 = vsub.f32 1.5, %v3646
        %v3648 = vmul.f32 %v3643, %v3647
        %vm3649 = vweird.f32 %v3332
        %vm3650 = vweird.f32 %v3643
        %vm3651 = vmor %vm3649, %vm3650
        %v3652 = vsel %vm3651, %v3643, %v3648
        %v3653 = vmul.f32 %v3141, %v3342
        %v3654 = vmul.f32 %v3142, %v3352
        %v3655 = vmul.f32 %v3143, %v3362
        %v3656 = vmul.f32 %v3144, %v3372
        %v3657 = vmul.f32 %v3145, %v3382
        %v3658 = vmul.f32 %v3146, %v3392
        %v3659 = vmul.f32 %v3147, %v3402
        %v3660 = vmul.f32 %v3148, %v3412
        %v3661 = vmul.f32 %v3149, %v3422
        %v3662 = vmul.f32 %v3150, %v3432
        %v3663 = vmul.f32 %v3151, %v3442
        %v3664 = vmul.f32 %v3152, %v3452
        %v3665 = vmul.f32 %v3153, %v3462
        %v3666 = vmul.f32 %v3154, %v3472
        %v3667 = vmul.f32 %v3155, %v3482
        %v3668 = vmul.f32 %v3156, %v3492
        %v3669 = vmul.f32 %v3157, %v3502
        %v3670 = vmul.f32 %v3158, %v3512
        %v3671 = vmul.f32 %v3159, %v3522
        %v3672 = vmul.f32 %v3160, %v3532
        %v3673 = vmul.f32 %v3161, %v3542
        %v3674 = vmul.f32 %v3162, %v3552
        %v3675 = vmul.f32 %v3163, %v3562
        %v3676 = vmul.f32 %v3164, %v3572
        %v3677 = vmul.f32 %v3165, %v3582
        %v3678 = vmul.f32 %v3166, %v3592
        %v3679 = vmul.f32 %v3167, %v3602
        %v3680 = vmul.f32 %v3168, %v3612
        %v3681 = vmul.f32 %v3169, %v3622
        %v3682 = vmul.f32 %v3170, %v3632
        %v3683 = vmul.f32 %v3171, %v3642
        %v3684 = vmul.f32 %v3172, %v3652
        %v3685 = vperm.slane %v269, 0
        %v3686 = vmul.f32 %v3653, %v3685
        %v3687 = vmul.f32 %v3654, %v3685
        %v3688 = vmul.f32 %v3655, %v3685
        %v3689 = vmul.f32 %v3656, %v3685
        %v3690 = vmul.f32 %v3657, %v3685
        %v3691 = vmul.f32 %v3658, %v3685
        %v3692 = vmul.f32 %v3659, %v3685
        %v3693 = vmul.f32 %v3660, %v3685
        %v3694 = vmul.f32 %v3661, %v3685
        %v3695 = vmul.f32 %v3662, %v3685
        %v3696 = vmul.f32 %v3663, %v3685
        %v3697 = vmul.f32 %v3664, %v3685
        %v3698 = vmul.f32 %v3665, %v3685
        %v3699 = vmul.f32 %v3666, %v3685
        %v3700 = vmul.f32 %v3667, %v3685
        %v3701 = vmul.f32 %v3668, %v3685
        %v3702 = vmul.f32 %v3669, %v3685
        %v3703 = vmul.f32 %v3670, %v3685
        %v3704 = vmul.f32 %v3671, %v3685
        %v3705 = vmul.f32 %v3672, %v3685
        %v3706 = vmul.f32 %v3673, %v3685
        %v3707 = vmul.f32 %v3674, %v3685
        %v3708 = vmul.f32 %v3675, %v3685
        %v3709 = vmul.f32 %v3676, %v3685
        %v3710 = vmul.f32 %v3677, %v3685
        %v3711 = vmul.f32 %v3678, %v3685
        %v3712 = vmul.f32 %v3679, %v3685
        %v3713 = vmul.f32 %v3680, %v3685
        %v3714 = vmul.f32 %v3681, %v3685
        %v3715 = vmul.f32 %v3682, %v3685
        %v3716 = vmul.f32 %v3683, %v3685
        %v3717 = vmul.f32 %v3684, %v3685
        %v3718 = vperm.slane %v270, 0
        %v3719 = vadd.f32 %v3686, %v3718
        %v3720 = vadd.f32 %v3687, %v3718
        %v3721 = vadd.f32 %v3688, %v3718
        %v3722 = vadd.f32 %v3689, %v3718
        %v3723 = vadd.f32 %v3690, %v3718
        %v3724 = vadd.f32 %v3691, %v3718
        %v3725 = vadd.f32 %v3692, %v3718
        %v3726 = vadd.f32 %v3693, %v3718
        %v3727 = vadd.f32 %v3694, %v3718
        %v3728 = vadd.f32 %v3695, %v3718
        %v3729 = vadd.f32 %v3696, %v3718
        %v3730 = vadd.f32 %v3697, %v3718
        %v3731 = vadd.f32 %v3698, %v3718
        %v3732 = vadd.f32 %v3699, %v3718
        %v3733 = vadd.f32 %v3700, %v3718
        %v3734 = vadd.f32 %v3701, %v3718
        %v3735 = vadd.f32 %v3702, %v3718
        %v3736 = vadd.f32 %v3703, %v3718
        %v3737 = vadd.f32 %v3704, %v3718
        %v3738 = vadd.f32 %v3705, %v3718
        %v3739 = vadd.f32 %v3706, %v3718
        %v3740 = vadd.f32 %v3707, %v3718
        %v3741 = vadd.f32 %v3708, %v3718
        %v3742 = vadd.f32 %v3709, %v3718
        %v3743 = vadd.f32 %v3710, %v3718
        %v3744 = vadd.f32 %v3711, %v3718
        %v3745 = vadd.f32 %v3712, %v3718
        %v3746 = vadd.f32 %v3713, %v3718
        %v3747 = vadd.f32 %v3714, %v3718
        %v3748 = vadd.f32 %v3715, %v3718
        %v3749 = vadd.f32 %v3716, %v3718
        %v3750 = vadd.f32 %v3717, %v3718
        %v3751 = vld [vmem:[%s5] sm:$0x1]
        %s3752 = sld [smem:[#allocation4]]
        %v3753 = vstv %s3752
        %3754 = vmatpush.xpose.msra.mxu0 %v3734
        %3755 = vmatpush.xpose.msra.mxu0 %v3733
        %3756 = vmatpush.xpose.msra.mxu0 %v3732
        %3757 = vmatpush.xpose.msra.mxu0 %v3731
        %3758 = vmatpush.xpose.msra.mxu0 %v3730
        %3759 = vmatpush.xpose.msra.mxu0 %v3729
        %3760 = vmatpush.xpose.msra.mxu0 %v3728
        %3761 = vmatpush.xpose.msra.mxu0 %v3727
        %3762 = vmatpush.xpose.msra.mxu0 %v3726
        %3763 = vmatpush.xpose.msra.mxu0 %v3725
        %3764 = vmatpush.xpose.msra.mxu0 %v3724
        %3765 = vmatpush.xpose.msra.mxu0 %v3723
        %3766 = vmatpush.xpose.msra.mxu0 %v3722
        %3767 = vmatpush.xpose.msra.mxu0 %v3721
        %3768 = vmatpush.xpose.msra.mxu0 %v3720
        %3769 = vmatpush.xpose.msra.mxu0 %v3719
        %3770 = vmatmul.f32.gmra.mxu0 %v3751
        %v3771 = vpop.f32.mrf.mxu0
        %v3772 = vadd.f32 %v3753, %v3771
        %3773 = vdwg.mxu0
        %3774 = vmatpush.xpose.msra.mxu0 %v3750
        %3775 = vmatpush.xpose.msra.mxu0 %v3749
        %3776 = vmatpush.xpose.msra.mxu0 %v3748
        %3777 = vmatpush.xpose.msra.mxu0 %v3747
        %3778 = vmatpush.xpose.msra.mxu0 %v3746
        %3779 = vmatpush.xpose.msra.mxu0 %v3745
        %3780 = vmatpush.xpose.msra.mxu0 %v3744
        %3781 = vmatpush.xpose.msra.mxu0 %v3743
        %3782 = vmatpush.xpose.msra.mxu0 %v3742
        %3783 = vmatpush.xpose.msra.mxu0 %v3741
        %3784 = vmatpush.xpose.msra.mxu0 %v3740
        %3785 = vmatpush.xpose.msra.mxu0 %v3739
        %3786 = vmatpush.xpose.msra.mxu0 %v3738
        %3787 = vmatpush.xpose.msra.mxu0 %v3737
        %3788 = vmatpush.xpose.msra.mxu0 %v3736
        %3789 = vmatpush.xpose.msra.mxu0 %v3735
        %3790 = vmatmul.f32.gmra.mxu0 %v3751
        %v3791 = vpop.f32.mrf.mxu0
        %v3792 = vadd.f32 %v3753, %v3791
        %3793 = vdwg.mxu0
        %v3794 = vlaneseq
        %v3795 = vand.u32 %v3794, 127
        %v3796 = vadd.s32 %v3795, 128
        %v3797 = vstv %s264
        %v3798 = vadd.s32 %v3795, %v3797
        %v3799 = vadd.s32 %v3796, %v3797
        %vm3800 = vcmp.lt.s32.totalorder %v3798, %v407
        %vm3801 = vcmp.lt.s32.totalorder %v3799, %v407
        %v3802 = vsel %vm3800, 1, 0
        %v3803 = vsel %vm3801, 1, 0
        %v3804 = vcvt.s32.f32 %v3802
        %v3805 = vcvt.s32.f32 %v3803
        %v3806 = vmul.f32 %v3772, %v3804
        %v3807 = vmul.f32 %v3792, %v3805
        %v3810 = vrot.slane %v3807, 7
        %vm3811 = vcmask 1040384
        %v3812 = vsel %vm3811, %v3806, %v3810
        %v3814 = vlaneseq
        %vm3815 = vcmp.ge.s32.totalorder %v3814, 0
        %vm3816 = vcmp.lt.s32.totalorder %v3814, 256
        %vm3817 = vmand %vm3815, %vm3816
        %3818 = vst.msk [vmem:[%s252] sm:$0x3] %vm3817, %v3812
        %s3819 = sand.u32 %s164, 1
        %s3820 = scalar_lea.sflag [#allocation6], %s3819
        %s3821 = sand.u32 %s164, 1
        %s3822 = smul.addr %s3821, 2
        %s3823 = scalar_lea.vmem [#allocation5], %s3822
        // Predicated region
        $region41: #{dimension_predictor_vits.1} parent=39 // pred_check
          %p3824 = pneg %p174
        $region42: #{dimension_predictor_vits.1} parent=39 // pred_check_branch
          %3826 = sbr.rel (%p3824) target = $region44
        $region43: #{dimension_predictor_vits.1} parent=39 // pred_region
          %s3827 = smul.u32 2, %s35
          %3829 = vsyncadd %s3820, 0
          %s3830 = smul.addr %s34, 2
          %s3831 = sadd.s32 %s3827, %s3830
          %s3832 = scalar_lea.hbm %s7, %s3831
          %s3834 = sshll.u32 %s3823, 4
          %s3835 = int_to_ptr.vmem [resolvable:$true] %s3834
          %s3836 = sshll.u32 %s3832, 4
          %s3837 = int_to_ptr.hbm [resolvable:$true] %s3836
          %3839 = dma.vmem_to_hbm [thread:$0]  %s3835, 32, %s3837, %s3820
        $region44: #{dimension_predictor_vits.1} parent=39 // pred_fallthru
          _
      $region40: #{dimension_predictor_vits.1} parent=5 // pred_fallthru
        _
      %p3840 = scmp.le.s32.totalorder 2, %s25
      // Predicated region
      $region45: #{dimension_predictor_vits.1} parent=5 // pred_check
        %p3841 = pneg %p3840
      $region46: #{dimension_predictor_vits.1} parent=5 // pred_check_branch
        %3843 = sbr.rel (%p3841) target = $region48
      $region47: #{dimension_predictor_vits.1} parent=5 // pred_region
        %s3844 = ssub.s32 %s25, 2
        // Predicated region
        $region49: #{dimension_predictor_vits.1} parent=47 // pred_check
          %p3845 = pneg %p180
        $region50: #{dimension_predictor_vits.1} parent=47 // pred_check_branch
          %3847 = sbr.rel (%p3845) target = $region52
        $region51: #{dimension_predictor_vits.1} parent=47 // pred_region
          %s3848 = sand.u32 %s165, 1
          %s3849 = scalar_lea.sflag [#allocation6], %s3848
          %s3850 = sand.u32 %s165, 1
          %s3851 = smul.addr %s3850, 2
          %s3852 = scalar_lea.vmem [#allocation5], %s3851
          %3854 = dma.done %s3849, 32
        $region52: #{dimension_predictor_vits.1} parent=47 // pred_fallthru
          _
      $region48: #{dimension_predictor_vits.1} parent=5 // pred_fallthru
        _
    $region6: #{dimension_predictor_vits.1} parent=1 // loop_footer
      %s29 = sadd.s32 1, %s25
    $region7: #{dimension_predictor_vits.1} parent=1 // loop_footer_branch
      %24 = sbr.rel target = $region3
    $region8: #{dimension_predictor_vits.1} parent=1 // loop_exit
      _
    %3855 = vsyncpa [#allocation6], 1
    %s3856 = scalar_lea.sflag [#allocation6], 1
    %3857 = vsyncpa %s3856, 1

</llo_original>
